<compile_context>
chip_gen: v7x
topology: tpu7x:2x2x1
jax: 0.10.0
libtpu: 0.0.40
codegen_flags: <defaults>
</compile_context>

<pallas_src>
import functools

import jax
import jax.numpy as jnp
from jax import lax
from jax.experimental import pallas as pl
from jax.experimental.pallas import tpu as pltpu


# ----------------------------------------------------------------------------
# Kernel: one batch block, lane-flat layout.
#   col_ref, row_ref: (1, L) int32  per-pixel column / row index inside its image
#   x_ref : (Cin, L)                channel-major input, L = NB*H*W on lanes
#   w1_ref: (9, Cmid, Cin)          3x3 conv taps, first index = kh*3 + kw
#   b1_ref: (Cmid, 1)
#   w2_ref: (9, Cout, Cmid)         convT taps (transposed to (co, cm)), kh*3 + kw
#   b2_ref: (Cout, 1)
#   out_ref: (4, Cout, L)           stride-2 output parity planes, p = rh*2 + rw
# ----------------------------------------------------------------------------
def _decoder_block_kernel(col_ref, row_ref, x_ref, w1_ref, b1_ref, w2_ref,
                          b2_ref, out_ref, *, H, W):
    _, L = x_ref.shape
    Cmid = w1_ref.shape[1]

    x = x_ref[...]                      # (Cin, L)
    col = col_ref[...]                  # (1, L) int32
    row = row_ref[...]                  # (1, L) int32

    left_ok = col >= 1                  # may read b-1
    right_ok = col < (W - 1)            # may read b+1
    up_ok = row >= 1                    # may read a-1
    down_ok = row < (H - 1)             # may read a+1
    row_mask = {-1: up_ok, 0: None, 1: down_ok}
    col_mask = {-1: left_ok, 0: None, 1: right_ok}

    def shifted(v, d):
        # result[:, i] = v[:, (i + d) mod L]; wrapped positions are masked off
        # by the caller, so the modular wrap (incl. across images) is harmless.
        if d == 0:
            return v
        return pltpu.roll(v, (-d) % L, axis=1)

    # ---- stage 1: 3x3 conv (pad=1) + bias + ReLU, per-tap MXU accumulation ----
    acc = jnp.zeros((Cmid, L), jnp.float32)
    for kh in range(3):
        for kw in range(3):
            dh, dw = kh - 1, kw - 1
            tap = shifted(x, dh * W + dw)
            rm, cmk = row_mask[dh], col_mask[dw]
            mask = rm if cmk is None else (cmk if rm is None else rm & cmk)
            if mask is not None:
                tap = jnp.where(mask, tap, 0.0)
            acc = acc + jnp.dot(w1_ref[kh * 3 + kw], tap,
                                preferred_element_type=jnp.float32)
    h = jnp.maximum(acc + b1_ref[...], 0.0)                 # (Cmid, L), stays on-chip

    # ---- stage 2: ConvTranspose2d(3, s=2, p=1, op=1) via output-parity planes ----
    #   y[2a  ,2b  ] = h(a,b)   W[1,1]
    #   y[2a  ,2b+1] = h(a,b)   W[1,2] + h(a,b+1) W[1,0]
    #   y[2a+1,2b  ] = h(a,b)   W[2,1] + h(a+1,b) W[0,1]
    #   y[2a+1,2b+1] = h(a,b)   W[2,2] + h(a,b+1) W[2,0]
    #                + h(a+1,b) W[0,2] + h(a+1,b+1) W[0,0]
    h01 = jnp.where(right_ok, shifted(h, 1), 0.0)                 # h(a, b+1)
    h10 = jnp.where(down_ok, shifted(h, W), 0.0)                  # h(a+1, b)
    h11 = jnp.where(right_ok & down_ok, shifted(h, W + 1), 0.0)   # h(a+1, b+1)

    def mm(kh, kw, t):
        return jnp.dot(w2_ref[kh * 3 + kw], t, preferred_element_type=jnp.float32)

    p00 = mm(1, 1, h)
    p01 = mm(1, 2, h) + mm(1, 0, h01)
    p10 = mm(2, 1, h) + mm(0, 1, h10)
    p11 = mm(2, 2, h) + mm(2, 0, h01) + mm(0, 2, h10) + mm(0, 0, h11)

    b2 = b2_ref[...]
    out_ref[0] = jnp.maximum(p00 + b2, 0.0)    # rows 2a,   cols 2b
    out_ref[1] = jnp.maximum(p01 + b2, 0.0)    # rows 2a,   cols 2b+1
    out_ref[2] = jnp.maximum(p10 + b2, 0.0)    # rows 2a+1, cols 2b
    out_ref[3] = jnp.maximum(p11 + b2, 0.0)    # rows 2a+1, cols 2b+1


# ----------------------------------------------------------------------------
# Wrapper
# ----------------------------------------------------------------------------
def decoder_block(x_nchw, w1, b1, w2, b2, *, batch_block=None):
    """x_nchw: (N, Cin, H, W). Returns (N, Cout, 2H, 2W), matching PyTorch."""
    N, Cin, H, W = x_nchw.shape
    Cmid = w1.shape[0]          # Conv2d weight: (Cmid, Cin, 3, 3)
    Cout = w2.shape[1]          # ConvTranspose2d weight: (Cmid, Cout, 3, 3)
    HW = H * W

    NB = N if batch_block is None else batch_block      # batch fully folded on lanes
    assert N % NB == 0, (N, NB)
    LB = NB * HW

    # Channel-major, lane-flat input: x_cf[ci, n*HW + a*W + b] = x[n, ci, a, b].
    x_cf = jnp.transpose(x_nchw.astype(jnp.float32), (1, 0, 2, 3)).reshape(Cin, N * HW)

    # Per-pixel row/col ids (identical for every image) -> border masks in-kernel;
    # avoids any in-kernel integer div/mod.
    ab = jnp.arange(HW, dtype=jnp.int32)
    col_ids = jnp.tile(ab % W, NB).reshape(1, LB)
    row_ids = jnp.tile(ab // W, NB).reshape(1, LB)

    # Conv weight as 9 taps of (Cmid, Cin); convT weight as 9 taps of (Cout, Cmid).
    w1_t = jnp.transpose(w1.astype(jnp.float32), (2, 3, 0, 1)).reshape(9, Cmid, Cin)
    w2_t = jnp.transpose(w2.astype(jnp.float32), (2, 3, 1, 0)).reshape(9, Cout, Cmid)
    b1_c = b1.astype(jnp.float32).reshape(Cmid, 1)
    b2_c = b2.astype(jnp.float32).reshape(Cout, 1)

    flops = 2 * N * HW * (9 * Cin * Cmid + 9 * Cmid * Cout)
    bytes_accessed = 4 * (x_cf.size + w1_t.size + w2_t.size + b1_c.size + b2_c.size
                          + 2 * LB + 4 * Cout * N * HW)

    kernel = functools.partial(_decoder_block_kernel, H=H, W=W)

    planes = pl.pallas_call(
        kernel,
        out_shape=jax.ShapeDtypeStruct((4, Cout, N * HW), jnp.float32),
        grid=(N // NB,),
        in_specs=[
            pl.BlockSpec((1, LB), lambda i: (0, 0)),            # col ids
            pl.BlockSpec((1, LB), lambda i: (0, 0)),            # row ids
            pl.BlockSpec((Cin, LB), lambda i: (0, i)),          # x (channel-major flat)
            pl.BlockSpec((9, Cmid, Cin), lambda i: (0, 0, 0)),  # conv taps
            pl.BlockSpec((Cmid, 1), lambda i: (0, 0)),          # conv bias
            pl.BlockSpec((9, Cout, Cmid), lambda i: (0, 0, 0)), # convT taps
            pl.BlockSpec((Cout, 1), lambda i: (0, 0)),          # convT bias
        ],
        out_specs=pl.BlockSpec((4, Cout, LB), lambda i: (0, 0, i)),
        compiler_params=pltpu.CompilerParams(
            dimension_semantics=("parallel",)),
        cost_estimate=pl.CostEstimate(flops=flops, transcendentals=0,
                                      bytes_accessed=bytes_accessed),
    )(col_ids, row_ids, x_cf, w1_t, b1_c, w2_t, b2_c)

    # Parity interleave: tiny XLA transpose on the lane-dense slab (~4*Cout*N*HW f32).
    y = planes.reshape(2, 2, Cout, N, H, W)        # (rh, rw, co, n, a, b)
    y = jnp.transpose(y, (3, 2, 4, 0, 5, 1))       # (n, co, a, rh, b, rw)
    return y.reshape(N, Cout, 2 * H, 2 * W)


# ----------------------------------------------------------------------------
# Pure-JAX reference (XLA convs) for correctness checking
# ----------------------------------------------------------------------------
def decoder_block_ref(x_nchw, w1, b1, w2, b2):
    h = lax.conv_general_dilated(
        x_nchw, w1, window_strides=(1, 1), padding=((1, 1), (1, 1)),
        dimension_numbers=('NCHW', 'OIHW', 'NCHW'))
    h = jax.nn.relu(h + b1[None, :, None, None])
    # ConvTranspose2d(k=3,s=2,p=1,op=1) == lhs-dilated conv with flipped kernel
    w2c = jnp.transpose(w2, (1, 0, 2, 3))[:, :, ::-1, ::-1]
    y = lax.conv_general_dilated(
        h, w2c, window_strides=(1, 1), padding=((1, 2), (1, 2)),
        lhs_dilation=(2, 2), dimension_numbers=('NCHW', 'OIHW', 'NCHW'))
    return jax.nn.relu(y + b2[None, :, None, None])


if __name__ == "__main__":
    N, Cin, Cmid, Cout, H, W = 2, 4, 8, 6, 16, 16

    key = jax.random.PRNGKey(0)
    kx, k1, k2, k3, k4 = jax.random.split(key, 5)
    x = jax.random.normal(kx, (N, Cin, H, W), jnp.float32)
    w1 = jax.random.normal(k1, (Cmid, Cin, 3, 3), jnp.float32) / (Cin * 9) ** 0.5
    b1 = jax.random.normal(k2, (Cmid,), jnp.float32) * 0.1
    w2 = jax.random.normal(k3, (Cmid, Cout, 3, 3), jnp.float32) / (Cmid * 9) ** 0.5
    b2 = jax.random.normal(k4, (Cout,), jnp.float32) * 0.1

    y = jax.jit(decoder_block)(x, w1, b1, w2, b2)
    y = jax.block_until_ready(y)

    y_ref = decoder_block_ref(x, w1, b1, w2, b2)
    assert y.shape == (N, Cout, 2 * H, 2 * W), y.shape
    err = float(jnp.max(jnp.abs(y - y_ref)))
    # Tolerance chosen deliberately: TPU MXU default precision uses reduced-precision
    # multiply passes with f32 accumulation for f32 operands.
    assert err < 5e-3, f"max abs error {err}"

    print("KERNEL_OK")
</pallas_src>

<mosaic_0001>
module attributes {stable_mosaic.version = 11 : i64} {
  func.func @_decoder_block_kernel(%arg0: i32, %arg1: memref<1x512xi32, #tpu.memory_space<vmem>>, %arg2: memref<1x512xi32, #tpu.memory_space<vmem>>, %arg3: memref<4x512xf32, #tpu.memory_space<vmem>>, %arg4: memref<9x8x4xf32, #tpu.memory_space<vmem>>, %arg5: memref<8x1xf32, #tpu.memory_space<vmem>>, %arg6: memref<9x6x8xf32, #tpu.memory_space<vmem>>, %arg7: memref<6x1xf32, #tpu.memory_space<vmem>>, %arg8: memref<4x6x512xf32, #tpu.memory_space<vmem>>) attributes {dimension_semantics = [#tpu.dimension_semantics<parallel>], iteration_bounds = array<i64: 1>, scalar_prefetch = 0 : i64, scratch_operands = 0 : i64, tpu.core_type = #tpu.core_type<tc>, window_params = [{pipeline_mode = #tpu.pipeline_mode<synchronous>, transform_indices = @transform_0, window_bounds = array<i64: 1, 512>}, {pipeline_mode = #tpu.pipeline_mode<synchronous>, transform_indices = @transform_1, window_bounds = array<i64: 1, 512>}, {transform_indices = @transform_2, window_bounds = array<i64: 4, 512>}, {pipeline_mode = #tpu.pipeline_mode<synchronous>, transform_indices = @transform_3, window_bounds = array<i64: 9, 8, 4>}, {pipeline_mode = #tpu.pipeline_mode<synchronous>, transform_indices = @transform_4, window_bounds = array<i64: 8, 1>}, {pipeline_mode = #tpu.pipeline_mode<synchronous>, transform_indices = @transform_5, window_bounds = array<i64: 9, 6, 8>}, {pipeline_mode = #tpu.pipeline_mode<synchronous>, transform_indices = @transform_6, window_bounds = array<i64: 6, 1>}, {transform_indices = @transform_7, window_bounds = array<i64: 4, 6, 512>}]} {
    %c0 = arith.constant 0 : index
    %c0_0 = arith.constant 0 : index
    %0 = vector.load %arg3[%c0, %c0_0] : memref<4x512xf32, #tpu.memory_space<vmem>>, vector<4x512xf32>
    %c0_1 = arith.constant 0 : index
    %c0_2 = arith.constant 0 : index
    %1 = vector.load %arg1[%c0_1, %c0_2] : memref<1x512xi32, #tpu.memory_space<vmem>>, vector<1x512xi32>
    %c0_3 = arith.constant 0 : index
    %c0_4 = arith.constant 0 : index
    %2 = vector.load %arg2[%c0_3, %c0_4] : memref<1x512xi32, #tpu.memory_space<vmem>>, vector<1x512xi32>
    %c1_i32 = arith.constant 1 : i32
    %3 = vector.broadcast %c1_i32 : i32 to vector<1x512xi32>
    %4 = arith.cmpi sge, %1, %3 : vector<1x512xi32>
    %c15_i32 = arith.constant 15 : i32
    %5 = vector.broadcast %c15_i32 : i32 to vector<1x512xi32>
    %6 = arith.cmpi slt, %1, %5 : vector<1x512xi32>
    %c1_i32_5 = arith.constant 1 : i32
    %7 = vector.broadcast %c1_i32_5 : i32 to vector<1x512xi32>
    %8 = arith.cmpi sge, %2, %7 : vector<1x512xi32>
    %c15_i32_6 = arith.constant 15 : i32
    %9 = vector.broadcast %c15_i32_6 : i32 to vector<1x512xi32>
    %10 = arith.cmpi slt, %2, %9 : vector<1x512xi32>
    %cst = arith.constant 0.000000e+00 : f32
    %11 = vector.broadcast %cst : f32 to vector<8x512xf32>
    %c17_i32 = arith.constant 17 : i32
    %12 = tpu.dynamic_rotate %0 by %c17_i32 dim 1 : vector<4x512xf32>, i32 -> vector<4x512xf32>
    %13 = arith.andi %8, %4 : vector<1x512xi1>
    %cst_7 = arith.constant 0.000000e+00 : f32
    %14 = vector.shape_cast %13 : vector<1x512xi1> to vector<1x512xi1>
    %15 = vector.broadcast %14 : vector<1x512xi1> to vector<4x512xi1>
    %16 = vector.broadcast %cst_7 : f32 to vector<4x512xf32>
    %17 = arith.select %15, %12, %16 : vector<4x512xi1>, vector<4x512xf32>
    %c0_8 = arith.constant 0 : index
    %c0_9 = arith.constant 0 : index
    %c0_10 = arith.constant 0 : index
    %18 = vector.load %arg4[%c0_8, %c0_9, %c0_10] : memref<9x8x4xf32, #tpu.memory_space<vmem>>, vector<1x8x4xf32>
    %19 = vector.shape_cast %18 : vector<1x8x4xf32> to vector<8x4xf32>
    %cst_11 = arith.constant dense<0.000000e+00> : vector<8x512xf32>
    %20 = tpu.matmul %19, %17, %cst_11 {dimension_numbers = #tpu.dot_dimension_numbers<[1], [0], [0], [1], [0, 0, 1, 1], [], []>} : vector<8x4xf32>, vector<4x512xf32>, vector<8x512xf32> -> vector<8x512xf32>
    %21 = arith.addf %11, %20 : vector<8x512xf32>
    %c16_i32 = arith.constant 16 : i32
    %22 = tpu.dynamic_rotate %0 by %c16_i32 dim 1 : vector<4x512xf32>, i32 -> vector<4x512xf32>
    %cst_12 = arith.constant 0.000000e+00 : f32
    %23 = vector.shape_cast %8 : vector<1x512xi1> to vector<1x512xi1>
    %24 = vector.broadcast %23 : vector<1x512xi1> to vector<4x512xi1>
    %25 = vector.broadcast %cst_12 : f32 to vector<4x512xf32>
    %26 = arith.select %24, %22, %25 : vector<4x512xi1>, vector<4x512xf32>
    %c1 = arith.constant 1 : index
    %c0_13 = arith.constant 0 : index
    %c0_14 = arith.constant 0 : index
    %27 = vector.load %arg4[%c1, %c0_13, %c0_14] : memref<9x8x4xf32, #tpu.memory_space<vmem>>, vector<1x8x4xf32>
    %28 = vector.shape_cast %27 : vector<1x8x4xf32> to vector<8x4xf32>
    %cst_15 = arith.constant dense<0.000000e+00> : vector<8x512xf32>
    %29 = tpu.matmul %28, %26, %cst_15 {dimension_numbers = #tpu.dot_dimension_numbers<[1], [0], [0], [1], [0, 0, 1, 1], [], []>} : vector<8x4xf32>, vector<4x512xf32>, vector<8x512xf32> -> vector<8x512xf32>
    %30 = arith.addf %21, %29 : vector<8x512xf32>
    %c15_i32_16 = arith.constant 15 : i32
    %31 = tpu.dynamic_rotate %0 by %c15_i32_16 dim 1 : vector<4x512xf32>, i32 -> vector<4x512xf32>
    %32 = arith.andi %8, %6 : vector<1x512xi1>
    %cst_17 = arith.constant 0.000000e+00 : f32
    %33 = vector.shape_cast %32 : vector<1x512xi1> to vector<1x512xi1>
    %34 = vector.broadcast %33 : vector<1x512xi1> to vector<4x512xi1>
    %35 = vector.broadcast %cst_17 : f32 to vector<4x512xf32>
    %36 = arith.select %34, %31, %35 : vector<4x512xi1>, vector<4x512xf32>
    %c2 = arith.constant 2 : index
    %c0_18 = arith.constant 0 : index
    %c0_19 = arith.constant 0 : index
    %37 = vector.load %arg4[%c2, %c0_18, %c0_19] : memref<9x8x4xf32, #tpu.memory_space<vmem>>, vector<1x8x4xf32>
    %38 = vector.shape_cast %37 : vector<1x8x4xf32> to vector<8x4xf32>
    %cst_20 = arith.constant dense<0.000000e+00> : vector<8x512xf32>
    %39 = tpu.matmul %38, %36, %cst_20 {dimension_numbers = #tpu.dot_dimension_numbers<[1], [0], [0], [1], [0, 0, 1, 1], [], []>} : vector<8x4xf32>, vector<4x512xf32>, vector<8x512xf32> -> vector<8x512xf32>
    %40 = arith.addf %30, %39 : vector<8x512xf32>
    %c1_i32_21 = arith.constant 1 : i32
    %41 = tpu.dynamic_rotate %0 by %c1_i32_21 dim 1 : vector<4x512xf32>, i32 -> vector<4x512xf32>
    %cst_22 = arith.constant 0.000000e+00 : f32
    %42 = vector.shape_cast %4 : vector<1x512xi1> to vector<1x512xi1>
    %43 = vector.broadcast %42 : vector<1x512xi1> to vector<4x512xi1>
    %44 = vector.broadcast %cst_22 : f32 to vector<4x512xf32>
    %45 = arith.select %43, %41, %44 : vector<4x512xi1>, vector<4x512xf32>
    %c3 = arith.constant 3 : index
    %c0_23 = arith.constant 0 : index
    %c0_24 = arith.constant 0 : index
    %46 = vector.load %arg4[%c3, %c0_23, %c0_24] : memref<9x8x4xf32, #tpu.memory_space<vmem>>, vector<1x8x4xf32>
    %47 = vector.shape_cast %46 : vector<1x8x4xf32> to vector<8x4xf32>
    %cst_25 = arith.constant dense<0.000000e+00> : vector<8x512xf32>
    %48 = tpu.matmul %47, %45, %cst_25 {dimension_numbers = #tpu.dot_dimension_numbers<[1], [0], [0], [1], [0, 0, 1, 1], [], []>} : vector<8x4xf32>, vector<4x512xf32>, vector<8x512xf32> -> vector<8x512xf32>
    %49 = arith.addf %40, %48 : vector<8x512xf32>
    %c4 = arith.constant 4 : index
    %c0_26 = arith.constant 0 : index
    %c0_27 = arith.constant 0 : index
    %50 = vector.load %arg4[%c4, %c0_26, %c0_27] : memref<9x8x4xf32, #tpu.memory_space<vmem>>, vector<1x8x4xf32>
    %51 = vector.shape_cast %50 : vector<1x8x4xf32> to vector<8x4xf32>
    %cst_28 = arith.constant dense<0.000000e+00> : vector<8x512xf32>
    %52 = tpu.matmul %51, %0, %cst_28 {dimension_numbers = #tpu.dot_dimension_numbers<[1], [0], [0], [1], [0, 0, 1, 1], [], []>} : vector<8x4xf32>, vector<4x512xf32>, vector<8x512xf32> -> vector<8x512xf32>
    %53 = arith.addf %49, %52 : vector<8x512xf32>
    %c511_i32 = arith.constant 511 : i32
    %54 = tpu.dynamic_rotate %0 by %c511_i32 dim 1 : vector<4x512xf32>, i32 -> vector<4x512xf32>
    %cst_29 = arith.constant 0.000000e+00 : f32
    %55 = vector.shape_cast %6 : vector<1x512xi1> to vector<1x512xi1>
    %56 = vector.broadcast %55 : vector<1x512xi1> to vector<4x512xi1>
    %57 = vector.broadcast %cst_29 : f32 to vector<4x512xf32>
    %58 = arith.select %56, %54, %57 : vector<4x512xi1>, vector<4x512xf32>
    %c5 = arith.constant 5 : index
    %c0_30 = arith.constant 0 : index
    %c0_31 = arith.constant 0 : index
    %59 = vector.load %arg4[%c5, %c0_30, %c0_31] : memref<9x8x4xf32, #tpu.memory_space<vmem>>, vector<1x8x4xf32>
    %60 = vector.shape_cast %59 : vector<1x8x4xf32> to vector<8x4xf32>
    %cst_32 = arith.constant dense<0.000000e+00> : vector<8x512xf32>
    %61 = tpu.matmul %60, %58, %cst_32 {dimension_numbers = #tpu.dot_dimension_numbers<[1], [0], [0], [1], [0, 0, 1, 1], [], []>} : vector<8x4xf32>, vector<4x512xf32>, vector<8x512xf32> -> vector<8x512xf32>
    %62 = arith.addf %53, %61 : vector<8x512xf32>
    %c497_i32 = arith.constant 497 : i32
    %63 = tpu.dynamic_rotate %0 by %c497_i32 dim 1 : vector<4x512xf32>, i32 -> vector<4x512xf32>
    %64 = arith.andi %10, %4 : vector<1x512xi1>
    %cst_33 = arith.constant 0.000000e+00 : f32
    %65 = vector.shape_cast %64 : vector<1x512xi1> to vector<1x512xi1>
    %66 = vector.broadcast %65 : vector<1x512xi1> to vector<4x512xi1>
    %67 = vector.broadcast %cst_33 : f32 to vector<4x512xf32>
    %68 = arith.select %66, %63, %67 : vector<4x512xi1>, vector<4x512xf32>
    %c6 = arith.constant 6 : index
    %c0_34 = arith.constant 0 : index
    %c0_35 = arith.constant 0 : index
    %69 = vector.load %arg4[%c6, %c0_34, %c0_35] : memref<9x8x4xf32, #tpu.memory_space<vmem>>, vector<1x8x4xf32>
    %70 = vector.shape_cast %69 : vector<1x8x4xf32> to vector<8x4xf32>
    %cst_36 = arith.constant dense<0.000000e+00> : vector<8x512xf32>
    %71 = tpu.matmul %70, %68, %cst_36 {dimension_numbers = #tpu.dot_dimension_numbers<[1], [0], [0], [1], [0, 0, 1, 1], [], []>} : vector<8x4xf32>, vector<4x512xf32>, vector<8x512xf32> -> vector<8x512xf32>
    %72 = arith.addf %62, %71 : vector<8x512xf32>
    %c496_i32 = arith.constant 496 : i32
    %73 = tpu.dynamic_rotate %0 by %c496_i32 dim 1 : vector<4x512xf32>, i32 -> vector<4x512xf32>
    %cst_37 = arith.constant 0.000000e+00 : f32
    %74 = vector.shape_cast %10 : vector<1x512xi1> to vector<1x512xi1>
    %75 = vector.broadcast %74 : vector<1x512xi1> to vector<4x512xi1>
    %76 = vector.broadcast %cst_37 : f32 to vector<4x512xf32>
    %77 = arith.select %75, %73, %76 : vector<4x512xi1>, vector<4x512xf32>
    %c7 = arith.constant 7 : index
    %c0_38 = arith.constant 0 : index
    %c0_39 = arith.constant 0 : index
    %78 = vector.load %arg4[%c7, %c0_38, %c0_39] : memref<9x8x4xf32, #tpu.memory_space<vmem>>, vector<1x8x4xf32>
    %79 = vector.shape_cast %78 : vector<1x8x4xf32> to vector<8x4xf32>
    %cst_40 = arith.constant dense<0.000000e+00> : vector<8x512xf32>
    %80 = tpu.matmul %79, %77, %cst_40 {dimension_numbers = #tpu.dot_dimension_numbers<[1], [0], [0], [1], [0, 0, 1, 1], [], []>} : vector<8x4xf32>, vector<4x512xf32>, vector<8x512xf32> -> vector<8x512xf32>
    %81 = arith.addf %72, %80 : vector<8x512xf32>
    %c495_i32 = arith.constant 495 : i32
    %82 = tpu.dynamic_rotate %0 by %c495_i32 dim 1 : vector<4x512xf32>, i32 -> vector<4x512xf32>
    %83 = arith.andi %10, %6 : vector<1x512xi1>
    %cst_41 = arith.constant 0.000000e+00 : f32
    %84 = vector.shape_cast %83 : vector<1x512xi1> to vector<1x512xi1>
    %85 = vector.broadcast %84 : vector<1x512xi1> to vector<4x512xi1>
    %86 = vector.broadcast %cst_41 : f32 to vector<4x512xf32>
    %87 = arith.select %85, %82, %86 : vector<4x512xi1>, vector<4x512xf32>
    %c8 = arith.constant 8 : index
    %c0_42 = arith.constant 0 : index
    %c0_43 = arith.constant 0 : index
    %88 = vector.load %arg4[%c8, %c0_42, %c0_43] : memref<9x8x4xf32, #tpu.memory_space<vmem>>, vector<1x8x4xf32>
    %89 = vector.shape_cast %88 : vector<1x8x4xf32> to vector<8x4xf32>
    %cst_44 = arith.constant dense<0.000000e+00> : vector<8x512xf32>
    %90 = tpu.matmul %89, %87, %cst_44 {dimension_numbers = #tpu.dot_dimension_numbers<[1], [0], [0], [1], [0, 0, 1, 1], [], []>} : vector<8x4xf32>, vector<4x512xf32>, vector<8x512xf32> -> vector<8x512xf32>
    %91 = arith.addf %81, %90 : vector<8x512xf32>
    %c0_45 = arith.constant 0 : index
    %c0_46 = arith.constant 0 : index
    %92 = vector.load %arg5[%c0_45, %c0_46] : memref<8x1xf32, #tpu.memory_space<vmem>>, vector<8x1xf32>
    %93 = vector.broadcast %92 : vector<8x1xf32> to vector<8x512xf32>
    %94 = arith.addf %91, %93 : vector<8x512xf32>
    %cst_47 = arith.constant 0.000000e+00 : f32
    %95 = vector.broadcast %cst_47 : f32 to vector<8x512xf32>
    %96 = arith.maximumf %94, %95 : vector<8x512xf32>
    %c511_i32_48 = arith.constant 511 : i32
    %97 = tpu.dynamic_rotate %96 by %c511_i32_48 dim 1 : vector<8x512xf32>, i32 -> vector<8x512xf32>
    %cst_49 = arith.constant 0.000000e+00 : f32
    %98 = vector.shape_cast %6 : vector<1x512xi1> to vector<1x512xi1>
    %99 = vector.broadcast %98 : vector<1x512xi1> to vector<8x512xi1>
    %100 = vector.broadcast %cst_49 : f32 to vector<8x512xf32>
    %101 = arith.select %99, %97, %100 : vector<8x512xi1>, vector<8x512xf32>
    %c496_i32_50 = arith.constant 496 : i32
    %102 = tpu.dynamic_rotate %96 by %c496_i32_50 dim 1 : vector<8x512xf32>, i32 -> vector<8x512xf32>
    %cst_51 = arith.constant 0.000000e+00 : f32
    %103 = vector.shape_cast %10 : vector<1x512xi1> to vector<1x512xi1>
    %104 = vector.broadcast %103 : vector<1x512xi1> to vector<8x512xi1>
    %105 = vector.broadcast %cst_51 : f32 to vector<8x512xf32>
    %106 = arith.select %104, %102, %105 : vector<8x512xi1>, vector<8x512xf32>
    %107 = arith.andi %6, %10 : vector<1x512xi1>
    %c495_i32_52 = arith.constant 495 : i32
    %108 = tpu.dynamic_rotate %96 by %c495_i32_52 dim 1 : vector<8x512xf32>, i32 -> vector<8x512xf32>
    %cst_53 = arith.constant 0.000000e+00 : f32
    %109 = vector.shape_cast %107 : vector<1x512xi1> to vector<1x512xi1>
    %110 = vector.broadcast %109 : vector<1x512xi1> to vector<8x512xi1>
    %111 = vector.broadcast %cst_53 : f32 to vector<8x512xf32>
    %112 = arith.select %110, %108, %111 : vector<8x512xi1>, vector<8x512xf32>
    %c4_54 = arith.constant 4 : index
    %c0_55 = arith.constant 0 : index
    %c0_56 = arith.constant 0 : index
    %113 = vector.load %arg6[%c4_54, %c0_55, %c0_56] : memref<9x6x8xf32, #tpu.memory_space<vmem>>, vector<1x6x8xf32>
    %114 = vector.shape_cast %113 : vector<1x6x8xf32> to vector<6x8xf32>
    %cst_57 = arith.constant dense<0.000000e+00> : vector<6x512xf32>
    %115 = tpu.matmul %114, %96, %cst_57 {dimension_numbers = #tpu.dot_dimension_numbers<[1], [0], [0], [1], [0, 0, 1, 1], [], []>} : vector<6x8xf32>, vector<8x512xf32>, vector<6x512xf32> -> vector<6x512xf32>
    %c5_58 = arith.constant 5 : index
    %c0_59 = arith.constant 0 : index
    %c0_60 = arith.constant 0 : index
    %116 = vector.load %arg6[%c5_58, %c0_59, %c0_60] : memref<9x6x8xf32, #tpu.memory_space<vmem>>, vector<1x6x8xf32>
    %117 = vector.shape_cast %116 : vector<1x6x8xf32> to vector<6x8xf32>
    %cst_61 = arith.constant dense<0.000000e+00> : vector<6x512xf32>
    %118 = tpu.matmul %117, %96, %cst_61 {dimension_numbers = #tpu.dot_dimension_numbers<[1], [0], [0], [1], [0, 0, 1, 1], [], []>} : vector<6x8xf32>, vector<8x512xf32>, vector<6x512xf32> -> vector<6x512xf32>
    %c3_62 = arith.constant 3 : index
    %c0_63 = arith.constant 0 : index
    %c0_64 = arith.constant 0 : index
    %119 = vector.load %arg6[%c3_62, %c0_63, %c0_64] : memref<9x6x8xf32, #tpu.memory_space<vmem>>, vector<1x6x8xf32>
    %120 = vector.shape_cast %119 : vector<1x6x8xf32> to vector<6x8xf32>
    %cst_65 = arith.constant dense<0.000000e+00> : vector<6x512xf32>
    %121 = tpu.matmul %120, %101, %cst_65 {dimension_numbers = #tpu.dot_dimension_numbers<[1], [0], [0], [1], [0, 0, 1, 1], [], []>} : vector<6x8xf32>, vector<8x512xf32>, vector<6x512xf32> -> vector<6x512xf32>
    %122 = arith.addf %118, %121 : vector<6x512xf32>
    %c7_66 = arith.constant 7 : index
    %c0_67 = arith.constant 0 : index
    %c0_68 = arith.constant 0 : index
    %123 = vector.load %arg6[%c7_66, %c0_67, %c0_68] : memref<9x6x8xf32, #tpu.memory_space<vmem>>, vector<1x6x8xf32>
    %124 = vector.shape_cast %123 : vector<1x6x8xf32> to vector<6x8xf32>
    %cst_69 = arith.constant dense<0.000000e+00> : vector<6x512xf32>
    %125 = tpu.matmul %124, %96, %cst_69 {dimension_numbers = #tpu.dot_dimension_numbers<[1], [0], [0], [1], [0, 0, 1, 1], [], []>} : vector<6x8xf32>, vector<8x512xf32>, vector<6x512xf32> -> vector<6x512xf32>
    %c1_70 = arith.constant 1 : index
    %c0_71 = arith.constant 0 : index
    %c0_72 = arith.constant 0 : index
    %126 = vector.load %arg6[%c1_70, %c0_71, %c0_72] : memref<9x6x8xf32, #tpu.memory_space<vmem>>, vector<1x6x8xf32>
    %127 = vector.shape_cast %126 : vector<1x6x8xf32> to vector<6x8xf32>
    %cst_73 = arith.constant dense<0.000000e+00> : vector<6x512xf32>
    %128 = tpu.matmul %127, %106, %cst_73 {dimension_numbers = #tpu.dot_dimension_numbers<[1], [0], [0], [1], [0, 0, 1, 1], [], []>} : vector<6x8xf32>, vector<8x512xf32>, vector<6x512xf32> -> vector<6x512xf32>
    %129 = arith.addf %125, %128 : vector<6x512xf32>
    %c8_74 = arith.constant 8 : index
    %c0_75 = arith.constant 0 : index
    %c0_76 = arith.constant 0 : index
    %130 = vector.load %arg6[%c8_74, %c0_75, %c0_76] : memref<9x6x8xf32, #tpu.memory_space<vmem>>, vector<1x6x8xf32>
    %131 = vector.shape_cast %130 : vector<1x6x8xf32> to vector<6x8xf32>
    %cst_77 = arith.constant dense<0.000000e+00> : vector<6x512xf32>
    %132 = tpu.matmul %131, %96, %cst_77 {dimension_numbers = #tpu.dot_dimension_numbers<[1], [0], [0], [1], [0, 0, 1, 1], [], []>} : vector<6x8xf32>, vector<8x512xf32>, vector<6x512xf32> -> vector<6x512xf32>
    %c6_78 = arith.constant 6 : index
    %c0_79 = arith.constant 0 : index
    %c0_80 = arith.constant 0 : index
    %133 = vector.load %arg6[%c6_78, %c0_79, %c0_80] : memref<9x6x8xf32, #tpu.memory_space<vmem>>, vector<1x6x8xf32>
    %134 = vector.shape_cast %133 : vector<1x6x8xf32> to vector<6x8xf32>
    %cst_81 = arith.constant dense<0.000000e+00> : vector<6x512xf32>
    %135 = tpu.matmul %134, %101, %cst_81 {dimension_numbers = #tpu.dot_dimension_numbers<[1], [0], [0], [1], [0, 0, 1, 1], [], []>} : vector<6x8xf32>, vector<8x512xf32>, vector<6x512xf32> -> vector<6x512xf32>
    %136 = arith.addf %132, %135 : vector<6x512xf32>
    %c2_82 = arith.constant 2 : index
    %c0_83 = arith.constant 0 : index
    %c0_84 = arith.constant 0 : index
    %137 = vector.load %arg6[%c2_82, %c0_83, %c0_84] : memref<9x6x8xf32, #tpu.memory_space<vmem>>, vector<1x6x8xf32>
    %138 = vector.shape_cast %137 : vector<1x6x8xf32> to vector<6x8xf32>
    %cst_85 = arith.constant dense<0.000000e+00> : vector<6x512xf32>
    %139 = tpu.matmul %138, %106, %cst_85 {dimension_numbers = #tpu.dot_dimension_numbers<[1], [0], [0], [1], [0, 0, 1, 1], [], []>} : vector<6x8xf32>, vector<8x512xf32>, vector<6x512xf32> -> vector<6x512xf32>
    %140 = arith.addf %136, %139 : vector<6x512xf32>
    %c0_86 = arith.constant 0 : index
    %c0_87 = arith.constant 0 : index
    %c0_88 = arith.constant 0 : index
    %141 = vector.load %arg6[%c0_86, %c0_87, %c0_88] : memref<9x6x8xf32, #tpu.memory_space<vmem>>, vector<1x6x8xf32>
    %142 = vector.shape_cast %141 : vector<1x6x8xf32> to vector<6x8xf32>
    %cst_89 = arith.constant dense<0.000000e+00> : vector<6x512xf32>
    %143 = tpu.matmul %142, %112, %cst_89 {dimension_numbers = #tpu.dot_dimension_numbers<[1], [0], [0], [1], [0, 0, 1, 1], [], []>} : vector<6x8xf32>, vector<8x512xf32>, vector<6x512xf32> -> vector<6x512xf32>
    %144 = arith.addf %140, %143 : vector<6x512xf32>
    %c0_90 = arith.constant 0 : index
    %c0_91 = arith.constant 0 : index
    %145 = vector.load %arg7[%c0_90, %c0_91] : memref<6x1xf32, #tpu.memory_space<vmem>>, vector<6x1xf32>
    %146 = vector.broadcast %145 : vector<6x1xf32> to vector<6x512xf32>
    %147 = arith.addf %115, %146 : vector<6x512xf32>
    %cst_92 = arith.constant 0.000000e+00 : f32
    %148 = vector.broadcast %cst_92 : f32 to vector<6x512xf32>
    %149 = arith.maximumf %147, %148 : vector<6x512xf32>
    %c0_93 = arith.constant 0 : index
    %c0_94 = arith.constant 0 : index
    %c0_95 = arith.constant 0 : index
    %150 = vector.load %arg8[%c0_93, %c0_94, %c0_95] : memref<4x6x512xf32, #tpu.memory_space<vmem>>, vector<1x6x512xf32>
    %151 = vector.shape_cast %150 : vector<1x6x512xf32> to vector<6x512xf32>
    %152 = vector.shape_cast %149 : vector<6x512xf32> to vector<1x6x512xf32>
    tpu.vector_store %arg8[%c0_93, %c0_94, %c0_95], %152 {strides = array<i32>} : memref<4x6x512xf32, #tpu.memory_space<vmem>>, vector<1x6x512xf32>,
    %153 = vector.broadcast %145 : vector<6x1xf32> to vector<6x512xf32>
    %154 = arith.addf %122, %153 : vector<6x512xf32>
    %cst_96 = arith.constant 0.000000e+00 : f32
    %155 = vector.broadcast %cst_96 : f32 to vector<6x512xf32>
    %156 = arith.maximumf %154, %155 : vector<6x512xf32>
    %c1_97 = arith.constant 1 : index
    %c0_98 = arith.constant 0 : index
    %c0_99 = arith.constant 0 : index
    %157 = vector.load %arg8[%c1_97, %c0_98, %c0_99] : memref<4x6x512xf32, #tpu.memory_space<vmem>>, vector<1x6x512xf32>
    %158 = vector.shape_cast %157 : vector<1x6x512xf32> to vector<6x512xf32>
    %159 = vector.shape_cast %156 : vector<6x512xf32> to vector<1x6x512xf32>
    tpu.vector_store %arg8[%c1_97, %c0_98, %c0_99], %159 {strides = array<i32>} : memref<4x6x512xf32, #tpu.memory_space<vmem>>, vector<1x6x512xf32>,
    %160 = vector.broadcast %145 : vector<6x1xf32> to vector<6x512xf32>
    %161 = arith.addf %129, %160 : vector<6x512xf32>
    %cst_100 = arith.constant 0.000000e+00 : f32
    %162 = vector.broadcast %cst_100 : f32 to vector<6x512xf32>
    %163 = arith.maximumf %161, %162 : vector<6x512xf32>
    %c2_101 = arith.constant 2 : index
    %c0_102 = arith.constant 0 : index
    %c0_103 = arith.constant 0 : index
    %164 = vector.load %arg8[%c2_101, %c0_102, %c0_103] : memref<4x6x512xf32, #tpu.memory_space<vmem>>, vector<1x6x512xf32>
    %165 = vector.shape_cast %164 : vector<1x6x512xf32> to vector<6x512xf32>
    %166 = vector.shape_cast %163 : vector<6x512xf32> to vector<1x6x512xf32>
    tpu.vector_store %arg8[%c2_101, %c0_102, %c0_103], %166 {strides = array<i32>} : memref<4x6x512xf32, #tpu.memory_space<vmem>>, vector<1x6x512xf32>,
    %167 = vector.broadcast %145 : vector<6x1xf32> to vector<6x512xf32>
    %168 = arith.addf %144, %167 : vector<6x512xf32>
    %cst_104 = arith.constant 0.000000e+00 : f32
    %169 = vector.broadcast %cst_104 : f32 to vector<6x512xf32>
    %170 = arith.maximumf %168, %169 : vector<6x512xf32>
    %c3_105 = arith.constant 3 : index
    %c0_106 = arith.constant 0 : index
    %c0_107 = arith.constant 0 : index
    %171 = vector.load %arg8[%c3_105, %c0_106, %c0_107] : memref<4x6x512xf32, #tpu.memory_space<vmem>>, vector<1x6x512xf32>
    %172 = vector.shape_cast %171 : vector<1x6x512xf32> to vector<6x512xf32>
    %173 = vector.shape_cast %170 : vector<6x512xf32> to vector<1x6x512xf32>
    tpu.vector_store %arg8[%c3_105, %c0_106, %c0_107], %173 {strides = array<i32>} : memref<4x6x512xf32, #tpu.memory_space<vmem>>, vector<1x6x512xf32>,
    return
  }
  func.func @transform_0(%arg0: i32) -> (i32, i32) {
    %c0_i32 = arith.constant 0 : i32
    %c0_i32_0 = arith.constant 0 : i32
    %c0_i32_1 = arith.constant 0 : i32
    return %c0_i32, %c0_i32_0 : i32, i32
  }
  func.func @transform_1(%arg0: i32) -> (i32, i32) {
    %c0_i32 = arith.constant 0 : i32
    %c0_i32_0 = arith.constant 0 : i32
    %c0_i32_1 = arith.constant 0 : i32
    return %c0_i32, %c0_i32_0 : i32, i32
  }
  func.func @transform_2(%arg0: i32) -> (i32, i32) {
    %c0_i32 = arith.constant 0 : i32
    %c0_i32_0 = arith.constant 0 : i32
    return %c0_i32, %arg0 : i32, i32
  }
  func.func @transform_3(%arg0: i32) -> (i32, i32, i32) {
    %c0_i32 = arith.constant 0 : i32
    %c0_i32_0 = arith.constant 0 : i32
    %c0_i32_1 = arith.constant 0 : i32
    %c0_i32_2 = arith.constant 0 : i32
    return %c0_i32, %c0_i32_0, %c0_i32_1 : i32, i32, i32
  }
  func.func @transform_4(%arg0: i32) -> (i32, i32) {
    %c0_i32 = arith.constant 0 : i32
    %c0_i32_0 = arith.constant 0 : i32
    %c0_i32_1 = arith.constant 0 : i32
    return %c0_i32, %c0_i32_0 : i32, i32
  }
  func.func @transform_5(%arg0: i32) -> (i32, i32, i32) {
    %c0_i32 = arith.constant 0 : i32
    %c0_i32_0 = arith.constant 0 : i32
    %c0_i32_1 = arith.constant 0 : i32
    %c0_i32_2 = arith.constant 0 : i32
    return %c0_i32, %c0_i32_0, %c0_i32_1 : i32, i32, i32
  }
  func.func @transform_6(%arg0: i32) -> (i32, i32) {
    %c0_i32 = arith.constant 0 : i32
    %c0_i32_0 = arith.constant 0 : i32
    %c0_i32_1 = arith.constant 0 : i32
    return %c0_i32, %c0_i32_0 : i32, i32
  }
  func.func @transform_7(%arg0: i32) -> (i32, i32, i32) {
    %c0_i32 = arith.constant 0 : i32
    %c0_i32_0 = arith.constant 0 : i32
    %c0_i32_1 = arith.constant 0 : i32
    return %c0_i32, %c0_i32_0, %arg0 : i32, i32, i32
  }
}

</mosaic_0001>

<llo_original>
// kernel: decoder_block.1
$region0: #{decoder_block.1}
  #allocation0 [shape = 'u32[]', space=smem, size = 0x4, offset = 0x4, fixed_abs, tag = 'smem constant byte address 0x4 - core index']
  #allocation1 [shape = 'u32[144,128]{1,0:T(1,128)}', space=vmem, size = 0x12000, scoped, tag = 'internal scratch']
  %s0 = inlined_call_operand.vmem [shape: s32[1,512], index: 0, kind: input, shape index: {}]
  %s1 = inlined_call_operand.vmem [shape: s32[1,512], index: 1, kind: input, shape index: {}]
  %s2 = inlined_call_operand.vmem [shape: f32[4,512], index: 2, kind: input, shape index: {}]
  %s3 = inlined_call_operand.vmem [shape: f32[9,8,4], index: 3, kind: input, shape index: {}]
  %s4 = inlined_call_operand.vmem [shape: f32[8,1], index: 4, kind: input, shape index: {}]
  %s5 = inlined_call_operand.vmem [shape: f32[9,6,8], index: 5, kind: input, shape index: {}]
  %s6 = inlined_call_operand.vmem [shape: f32[6,1], index: 6, kind: input, shape index: {}]
  %s7 = inlined_call_operand.vmem [shape: f32[4,6,512], index: 7, kind: output, shape index: {}]
  %s8 = sld [smem:[#allocation0]]
  $region38: #{decoder_block.1} parent=0
    _
  %s10 = ssub.s32 1, %s8
  %s11 = scalar_select 0, %s10, %s8
  // Predicated region
  $region2: #{decoder_block.1} parent=0 // pred_check
    _
  $region3: #{decoder_block.1} parent=0 // pred_check_branch
    %13 = sbr.rel (0) target = $region5
  $region4: #{decoder_block.1} parent=0 // pred_region
    _
  $region5: #{decoder_block.1} parent=0 // pred_fallthru
    _
  // Predicated region
  $region6: #{decoder_block.1} parent=0 // pred_check
    _
  $region7: #{decoder_block.1} parent=0 // pred_check_branch
    %15 = sbr.rel (0) target = $region9
  $region8: #{decoder_block.1} parent=0 // pred_region
    _
  $region9: #{decoder_block.1} parent=0 // pred_fallthru
    _
  // Predicated region
  $region10: #{decoder_block.1} parent=0 // pred_check
    _
  $region11: #{decoder_block.1} parent=0 // pred_check_branch
    %17 = sbr.rel (0) target = $region13
  $region12: #{decoder_block.1} parent=0 // pred_region
    _
  $region13: #{decoder_block.1} parent=0 // pred_fallthru
    _
  // Predicated region
  $region14: #{decoder_block.1} parent=0 // pred_check
    _
  $region15: #{decoder_block.1} parent=0 // pred_check_branch
    %19 = sbr.rel (0) target = $region17
  $region16: #{decoder_block.1} parent=0 // pred_region
    _
  $region17: #{decoder_block.1} parent=0 // pred_fallthru
    _
  // Predicated region
  $region18: #{decoder_block.1} parent=0 // pred_check
    _
  $region19: #{decoder_block.1} parent=0 // pred_check_branch
    %21 = sbr.rel (0) target = $region21
  $region20: #{decoder_block.1} parent=0 // pred_region
    _
  $region21: #{decoder_block.1} parent=0 // pred_fallthru
    _
  // Predicated region
  $region22: #{decoder_block.1} parent=0 // pred_check
    _
  $region23: #{decoder_block.1} parent=0 // pred_check_branch
    %23 = sbr.rel (0) target = $region25
  $region24: #{decoder_block.1} parent=0 // pred_region
    _
  $region25: #{decoder_block.1} parent=0 // pred_fallthru
    _
  // Predicated region
  $region26: #{decoder_block.1} parent=0 // pred_check
    _
  $region27: #{decoder_block.1} parent=0 // pred_check_branch
    %25 = sbr.rel (0) target = $region29
  $region28: #{decoder_block.1} parent=0 // pred_region
    _
  $region29: #{decoder_block.1} parent=0 // pred_fallthru
    _
  %v26 = vld [vmem:[%s2] sm:$0xff]
  %v27 = vld [vmem:[%s2 + $0x8] sm:$0xff]
  %v28 = vld [vmem:[%s0] sm:$0xf]
  %v29 = vld [vmem:[%s1] sm:$0xf]
  %vm30 = vcmp.ge.s32.totalorder %v28, 1
  %vm31 = vcmp.lt.s32.totalorder %v28, 15
  %vm32 = vcmp.ge.s32.totalorder %v29, 1
  %vm33 = vcmp.lt.s32.totalorder %v29, 15
  %v36 = vcombine.high %v26, %v26
  %v37 = vcombine.high %v27, %v27
  %40 = vrot.lane.b32.xlu0 %v26, 17
  %v41 = vpop.permute.xlu0 %40
  %42 = vrot.lane.b32.xlu0 %v36, 17
  %v43 = vpop.permute.xlu0 %42
  %44 = vrot.lane.b32.xlu0 %v27, 17
  %v45 = vpop.permute.xlu0 %44
  %46 = vrot.lane.b32.xlu0 %v37, 17
  %v47 = vpop.permute.xlu0 %46
  %v48 = vlaneseq
  %v49 = vand.u32 %v48, 127
  %vm50 = vcmp.lt.s32.totalorder %v49, 17
  %v51 = vsel %vm50, %v45, %v47
  %v52 = vsel %vm50, %v43, %v45
  %v53 = vsel %vm50, %v41, %v43
  %v54 = vsel %vm50, %v47, %v41
  %vm55 = vmand %vm32, %vm30
  %v56 = vsel %vm55, 1, 0
  %v57 = vlaneseq
  %v58 = vshrl.u32 %v57, 7
  %v59 = vsub.s32 0, %v58
  %v60 = vrot.slane %v56, %v59
  %v61 = vlaneseq
  %v62 = vshrl.u32 %v61, 7
  %v63 = vsub.s32 1, %v62
  %v64 = vrot.slane %v56, %v63
  %v65 = vlaneseq
  %v66 = vshrl.u32 %v65, 7
  %v67 = vsub.s32 2, %v66
  %v68 = vrot.slane %v56, %v67
  %v69 = vlaneseq
  %v70 = vshrl.u32 %v69, 7
  %v71 = vsub.s32 3, %v70
  %v72 = vrot.slane %v56, %v71
  %vm73 = vcmp.eq.s32.totalorder %v60, 1
  %vm74 = vcmp.eq.s32.totalorder %v64, 1
  %vm75 = vcmp.eq.s32.totalorder %v68, 1
  %vm76 = vcmp.eq.s32.totalorder %v72, 1
  %v77 = vsel %vm73, %v54, 0.0
  %v78 = vsel %vm74, %v53, 0.0
  %v79 = vsel %vm75, %v52, 0.0
  %v80 = vsel %vm76, %v51, 0.0
  %v81 = vld [vmem:[%s3] sm:$0xff]
  %82 = vrot.lane.b32.xlu0 %v26, 16
  %v83 = vpop.permute.xlu0 %82
  %84 = vrot.lane.b32.xlu0 %v36, 16
  %v85 = vpop.permute.xlu0 %84
  %86 = vrot.lane.b32.xlu0 %v27, 16
  %v87 = vpop.permute.xlu0 %86
  %88 = vrot.lane.b32.xlu0 %v37, 16
  %v89 = vpop.permute.xlu0 %88
  %vm90 = vcmp.lt.s32.totalorder %v49, 16
  %v91 = vsel %vm90, %v87, %v89
  %v92 = vsel %vm90, %v85, %v87
  %v93 = vsel %vm90, %v83, %v85
  %v94 = vsel %vm90, %v89, %v83
  %v95 = vsel %vm32, 1, 0
  %v96 = vlaneseq
  %v97 = vshrl.u32 %v96, 7
  %v98 = vsub.s32 0, %v97
  %v99 = vrot.slane %v95, %v98
  %v100 = vlaneseq
  %v101 = vshrl.u32 %v100, 7
  %v102 = vsub.s32 1, %v101
  %v103 = vrot.slane %v95, %v102
  %v104 = vlaneseq
  %v105 = vshrl.u32 %v104, 7
  %v106 = vsub.s32 2, %v105
  %v107 = vrot.slane %v95, %v106
  %v108 = vlaneseq
  %v109 = vshrl.u32 %v108, 7
  %v110 = vsub.s32 3, %v109
  %v111 = vrot.slane %v95, %v110
  %vm112 = vcmp.eq.s32.totalorder %v99, 1
  %vm113 = vcmp.eq.s32.totalorder %v103, 1
  %vm114 = vcmp.eq.s32.totalorder %v107, 1
  %vm115 = vcmp.eq.s32.totalorder %v111, 1
  %v116 = vsel %vm112, %v94, 0.0
  %v117 = vsel %vm113, %v93, 0.0
  %v118 = vsel %vm114, %v92, 0.0
  %v119 = vsel %vm115, %v91, 0.0
  %s120 = scalar_lea.vmem %s3, 8
  %v121 = vld [vmem:[%s120] sm:$0xff]
  %vm122 = vcmask 31744
  %v124 = vsel %vm122, %v121, 0
  %vm126 = vcmask 1043456
  %v128 = vsel %vm126, %v116, 0
  %v131 = vsel %vm126, %v117, 0
  %v134 = vsel %vm126, %v118, 0
  %v137 = vsel %vm126, %v119, 0
  %139 = vmatprep.subr.mxu0 %v131
  %140 = vmatpush1.msra.mxu0 %v128
  %141 = vmatprep.subr.mxu0 0.0
  %142 = vmatpush1.msra.mxu0 0.0
  %143 = vmatprep.subr.mxu0 0.0
  %144 = vmatpush1.msra.mxu0 0.0
  %145 = vmatprep.subr.mxu0 0.0
  %146 = vmatpush1.msra.mxu0 0.0
  %147 = vmatprep.subr.mxu0 0.0
  %148 = vmatpush1.msra.mxu0 0.0
  %149 = vmatprep.subr.mxu0 0.0
  %150 = vmatpush1.msra.mxu0 0.0
  %151 = vmatprep.subr.mxu0 0.0
  %152 = vmatpush1.msra.mxu0 0.0
  %153 = vmatprep.subr.mxu0 0.0
  %154 = vmatpush1.msra.mxu0 0.0
  %155 = vmatprep.subr.mxu0 0.0
  %156 = vmatpush1.msra.mxu0 0.0
  %157 = vmatprep.subr.mxu0 0.0
  %158 = vmatpush1.msra.mxu0 0.0
  %159 = vmatprep.subr.mxu0 0.0
  %160 = vmatpush1.msra.mxu0 0.0
  %161 = vmatprep.subr.mxu0 0.0
  %162 = vmatpush1.msra.mxu0 0.0
  %163 = vmatprep.subr.mxu0 0.0
  %164 = vmatpush1.msra.mxu0 0.0
  %165 = vmatprep.subr.mxu0 0.0
  %166 = vmatpush1.msra.mxu0 0.0
  %167 = vmatprep.subr.mxu0 0.0
  %168 = vmatpush1.msra.mxu0 0.0
  %169 = vmatprep.subr.mxu0 0.0
  %170 = vmatpush1.msra.mxu0 0.0
  %171 = vmatprep.subr.mxu0 0.0
  %172 = vmatpush1.msra.mxu0 0.0
  %173 = vmatprep.subr.mxu0 0.0
  %174 = vmatpush1.msra.mxu0 0.0
  %175 = vmatprep.subr.mxu0 0.0
  %176 = vmatpush1.msra.mxu0 0.0
  %177 = vmatprep.subr.mxu0 0.0
  %178 = vmatpush1.msra.mxu0 0.0
  %179 = vmatprep.subr.mxu0 0.0
  %180 = vmatpush1.msra.mxu0 0.0
  %181 = vmatprep.subr.mxu0 0.0
  %182 = vmatpush1.msra.mxu0 0.0
  %183 = vmatprep.subr.mxu0 0.0
  %184 = vmatpush1.msra.mxu0 0.0
  %185 = vmatprep.subr.mxu0 0.0
  %186 = vmatpush1.msra.mxu0 0.0
  %187 = vmatprep.subr.mxu0 0.0
  %188 = vmatpush1.msra.mxu0 0.0
  %189 = vmatprep.subr.mxu0 0.0
  %190 = vmatpush1.msra.mxu0 0.0
  %191 = vmatprep.subr.mxu0 0.0
  %192 = vmatpush1.msra.mxu0 0.0
  %193 = vmatprep.subr.mxu0 0.0
  %194 = vmatpush1.msra.mxu0 0.0
  %195 = vmatprep.subr.mxu0 0.0
  %196 = vmatpush1.msra.mxu0 0.0
  %197 = vmatprep.subr.mxu0 0.0
  %198 = vmatpush1.msra.mxu0 0.0
  %199 = vmatprep.subr.mxu0 0.0
  %200 = vmatpush1.msra.mxu0 0.0
  %201 = vmatprep.subr.mxu0 0.0
  %202 = vmatpush1.msra.mxu0 0.0
  %203 = vmatprep.mubr.f32.mxu0 0.0
  %204 = vmatmul.mubr.f32.gmra.mrb[0].mxu0 %v124
  %v205 = vpop.f32.mrb[0].mxu0
  %v206 = vadd.f32 0.0, %v205
  %v207 = vpop.f32.mrb[0].mxu0
  %v208 = vadd.f32 0.0, %v207
  %209 = vdwg.mxu0
  %210 = vmatprep.subr.mxu0 %v137
  %211 = vmatpush1.msra.mxu0 %v134
  %212 = vmatprep.subr.mxu0 0.0
  %213 = vmatpush1.msra.mxu0 0.0
  %214 = vmatprep.subr.mxu0 0.0
  %215 = vmatpush1.msra.mxu0 0.0
  %216 = vmatprep.subr.mxu0 0.0
  %217 = vmatpush1.msra.mxu0 0.0
  %218 = vmatprep.subr.mxu0 0.0
  %219 = vmatpush1.msra.mxu0 0.0
  %220 = vmatprep.subr.mxu0 0.0
  %221 = vmatpush1.msra.mxu0 0.0
  %222 = vmatprep.subr.mxu0 0.0
  %223 = vmatpush1.msra.mxu0 0.0
  %224 = vmatprep.subr.mxu0 0.0
  %225 = vmatpush1.msra.mxu0 0.0
  %226 = vmatprep.subr.mxu0 0.0
  %227 = vmatpush1.msra.mxu0 0.0
  %228 = vmatprep.subr.mxu0 0.0
  %229 = vmatpush1.msra.mxu0 0.0
  %230 = vmatprep.subr.mxu0 0.0
  %231 = vmatpush1.msra.mxu0 0.0
  %232 = vmatprep.subr.mxu0 0.0
  %233 = vmatpush1.msra.mxu0 0.0
  %234 = vmatprep.subr.mxu0 0.0
  %235 = vmatpush1.msra.mxu0 0.0
  %236 = vmatprep.subr.mxu0 0.0
  %237 = vmatpush1.msra.mxu0 0.0
  %238 = vmatprep.subr.mxu0 0.0
  %239 = vmatpush1.msra.mxu0 0.0
  %240 = vmatprep.subr.mxu0 0.0
  %241 = vmatpush1.msra.mxu0 0.0
  %242 = vmatprep.subr.mxu0 0.0
  %243 = vmatpush1.msra.mxu0 0.0
  %244 = vmatprep.subr.mxu0 0.0
  %245 = vmatpush1.msra.mxu0 0.0
  %246 = vmatprep.subr.mxu0 0.0
  %247 = vmatpush1.msra.mxu0 0.0
  %248 = vmatprep.subr.mxu0 0.0
  %249 = vmatpush1.msra.mxu0 0.0
  %250 = vmatprep.subr.mxu0 0.0
  %251 = vmatpush1.msra.mxu0 0.0
  %252 = vmatprep.subr.mxu0 0.0
  %253 = vmatpush1.msra.mxu0 0.0
  %254 = vmatprep.subr.mxu0 0.0
  %255 = vmatpush1.msra.mxu0 0.0
  %256 = vmatprep.subr.mxu0 0.0
  %257 = vmatpush1.msra.mxu0 0.0
  %258 = vmatprep.subr.mxu0 0.0
  %259 = vmatpush1.msra.mxu0 0.0
  %260 = vmatprep.subr.mxu0 0.0
  %261 = vmatpush1.msra.mxu0 0.0
  %262 = vmatprep.subr.mxu0 0.0
  %263 = vmatpush1.msra.mxu0 0.0
  %264 = vmatprep.subr.mxu0 0.0
  %265 = vmatpush1.msra.mxu0 0.0
  %266 = vmatprep.subr.mxu0 0.0
  %267 = vmatpush1.msra.mxu0 0.0
  %268 = vmatprep.subr.mxu0 0.0
  %269 = vmatpush1.msra.mxu0 0.0
  %270 = vmatprep.subr.mxu0 0.0
  %271 = vmatpush1.msra.mxu0 0.0
  %272 = vmatprep.subr.mxu0 0.0
  %273 = vmatpush1.msra.mxu0 0.0
  %274 = vmatprep.mubr.f32.mxu0 0.0
  %275 = vmatmul.mubr.f32.gmra.mrb[0].mxu0 %v124
  %v276 = vpop.f32.mrb[0].mxu0
  %v277 = vadd.f32 0.0, %v276
  %v278 = vpop.f32.mrb[0].mxu0
  %v279 = vadd.f32 0.0, %v278
  %280 = vdwg.mxu0
  %v282 = vsel %vm122, %v81, 0
  %v285 = vsel %vm126, %v77, 0
  %v288 = vsel %vm126, %v78, 0
  %v291 = vsel %vm126, %v79, 0
  %v294 = vsel %vm126, %v80, 0
  %296 = vmatprep.subr.mxu0 %v288
  %297 = vmatpush1.msra.mxu0 %v285
  %298 = vmatprep.subr.mxu0 0.0
  %299 = vmatpush1.msra.mxu0 0.0
  %300 = vmatprep.subr.mxu0 0.0
  %301 = vmatpush1.msra.mxu0 0.0
  %302 = vmatprep.subr.mxu0 0.0
  %303 = vmatpush1.msra.mxu0 0.0
  %304 = vmatprep.subr.mxu0 0.0
  %305 = vmatpush1.msra.mxu0 0.0
  %306 = vmatprep.subr.mxu0 0.0
  %307 = vmatpush1.msra.mxu0 0.0
  %308 = vmatprep.subr.mxu0 0.0
  %309 = vmatpush1.msra.mxu0 0.0
  %310 = vmatprep.subr.mxu0 0.0
  %311 = vmatpush1.msra.mxu0 0.0
  %312 = vmatprep.subr.mxu0 0.0
  %313 = vmatpush1.msra.mxu0 0.0
  %314 = vmatprep.subr.mxu0 0.0
  %315 = vmatpush1.msra.mxu0 0.0
  %316 = vmatprep.subr.mxu0 0.0
  %317 = vmatpush1.msra.mxu0 0.0
  %318 = vmatprep.subr.mxu0 0.0
  %319 = vmatpush1.msra.mxu0 0.0
  %320 = vmatprep.subr.mxu0 0.0
  %321 = vmatpush1.msra.mxu0 0.0
  %322 = vmatprep.subr.mxu0 0.0
  %323 = vmatpush1.msra.mxu0 0.0
  %324 = vmatprep.subr.mxu0 0.0
  %325 = vmatpush1.msra.mxu0 0.0
  %326 = vmatprep.subr.mxu0 0.0
  %327 = vmatpush1.msra.mxu0 0.0
  %328 = vmatprep.subr.mxu0 0.0
  %329 = vmatpush1.msra.mxu0 0.0
  %330 = vmatprep.subr.mxu0 0.0
  %331 = vmatpush1.msra.mxu0 0.0
  %332 = vmatprep.subr.mxu0 0.0
  %333 = vmatpush1.msra.mxu0 0.0
  %334 = vmatprep.subr.mxu0 0.0
  %335 = vmatpush1.msra.mxu0 0.0
  %336 = vmatprep.subr.mxu0 0.0
  %337 = vmatpush1.msra.mxu0 0.0
  %338 = vmatprep.subr.mxu0 0.0
  %339 = vmatpush1.msra.mxu0 0.0
  %340 = vmatprep.subr.mxu0 0.0
  %341 = vmatpush1.msra.mxu0 0.0
  %342 = vmatprep.subr.mxu0 0.0
  %343 = vmatpush1.msra.mxu0 0.0
  %344 = vmatprep.subr.mxu0 0.0
  %345 = vmatpush1.msra.mxu0 0.0
  %346 = vmatprep.subr.mxu0 0.0
  %347 = vmatpush1.msra.mxu0 0.0
  %348 = vmatprep.subr.mxu0 0.0
  %349 = vmatpush1.msra.mxu0 0.0
  %350 = vmatprep.subr.mxu0 0.0
  %351 = vmatpush1.msra.mxu0 0.0
  %352 = vmatprep.subr.mxu0 0.0
  %353 = vmatpush1.msra.mxu0 0.0
  %354 = vmatprep.subr.mxu0 0.0
  %355 = vmatpush1.msra.mxu0 0.0
  %356 = vmatprep.subr.mxu0 0.0
  %357 = vmatpush1.msra.mxu0 0.0
  %358 = vmatprep.subr.mxu0 0.0
  %359 = vmatpush1.msra.mxu0 0.0
  %360 = vmatprep.mubr.f32.mxu0 0.0
  %361 = vmatmul.mubr.f32.gmra.mrb[0].mxu0 %v282
  %v362 = vpop.f32.mrb[0].mxu0
  %v363 = vadd.f32 %v206, %v362
  %v364 = vpop.f32.mrb[0].mxu0
  %v365 = vadd.f32 %v208, %v364
  %366 = vdwg.mxu0
  %367 = vmatprep.subr.mxu0 %v294
  %368 = vmatpush1.msra.mxu0 %v291
  %369 = vmatprep.subr.mxu0 0.0
  %370 = vmatpush1.msra.mxu0 0.0
  %371 = vmatprep.subr.mxu0 0.0
  %372 = vmatpush1.msra.mxu0 0.0
  %373 = vmatprep.subr.mxu0 0.0
  %374 = vmatpush1.msra.mxu0 0.0
  %375 = vmatprep.subr.mxu0 0.0
  %376 = vmatpush1.msra.mxu0 0.0
  %377 = vmatprep.subr.mxu0 0.0
  %378 = vmatpush1.msra.mxu0 0.0
  %379 = vmatprep.subr.mxu0 0.0
  %380 = vmatpush1.msra.mxu0 0.0
  %381 = vmatprep.subr.mxu0 0.0
  %382 = vmatpush1.msra.mxu0 0.0
  %383 = vmatprep.subr.mxu0 0.0
  %384 = vmatpush1.msra.mxu0 0.0
  %385 = vmatprep.subr.mxu0 0.0
  %386 = vmatpush1.msra.mxu0 0.0
  %387 = vmatprep.subr.mxu0 0.0
  %388 = vmatpush1.msra.mxu0 0.0
  %389 = vmatprep.subr.mxu0 0.0
  %390 = vmatpush1.msra.mxu0 0.0
  %391 = vmatprep.subr.mxu0 0.0
  %392 = vmatpush1.msra.mxu0 0.0
  %393 = vmatprep.subr.mxu0 0.0
  %394 = vmatpush1.msra.mxu0 0.0
  %395 = vmatprep.subr.mxu0 0.0
  %396 = vmatpush1.msra.mxu0 0.0
  %397 = vmatprep.subr.mxu0 0.0
  %398 = vmatpush1.msra.mxu0 0.0
  %399 = vmatprep.subr.mxu0 0.0
  %400 = vmatpush1.msra.mxu0 0.0
  %401 = vmatprep.subr.mxu0 0.0
  %402 = vmatpush1.msra.mxu0 0.0
  %403 = vmatprep.subr.mxu0 0.0
  %404 = vmatpush1.msra.mxu0 0.0
  %405 = vmatprep.subr.mxu0 0.0
  %406 = vmatpush1.msra.mxu0 0.0
  %407 = vmatprep.subr.mxu0 0.0
  %408 = vmatpush1.msra.mxu0 0.0
  %409 = vmatprep.subr.mxu0 0.0
  %410 = vmatpush1.msra.mxu0 0.0
  %411 = vmatprep.subr.mxu0 0.0
  %412 = vmatpush1.msra.mxu0 0.0
  %413 = vmatprep.subr.mxu0 0.0
  %414 = vmatpush1.msra.mxu0 0.0
  %415 = vmatprep.subr.mxu0 0.0
  %416 = vmatpush1.msra.mxu0 0.0
  %417 = vmatprep.subr.mxu0 0.0
  %418 = vmatpush1.msra.mxu0 0.0
  %419 = vmatprep.subr.mxu0 0.0
  %420 = vmatpush1.msra.mxu0 0.0
  %421 = vmatprep.subr.mxu0 0.0
  %422 = vmatpush1.msra.mxu0 0.0
  %423 = vmatprep.subr.mxu0 0.0
  %424 = vmatpush1.msra.mxu0 0.0
  %425 = vmatprep.subr.mxu0 0.0
  %426 = vmatpush1.msra.mxu0 0.0
  %427 = vmatprep.subr.mxu0 0.0
  %428 = vmatpush1.msra.mxu0 0.0
  %429 = vmatprep.subr.mxu0 0.0
  %430 = vmatpush1.msra.mxu0 0.0
  %431 = vmatprep.mubr.f32.mxu0 0.0
  %432 = vmatmul.mubr.f32.gmra.mrb[0].mxu0 %v282
  %v433 = vpop.f32.mrb[0].mxu0
  %v434 = vadd.f32 %v277, %v433
  %v435 = vpop.f32.mrb[0].mxu0
  %v436 = vadd.f32 %v279, %v435
  %437 = vdwg.mxu0
  %438 = vrot.lane.b32.xlu0 %v26, 15
  %v439 = vpop.permute.xlu0 %438
  %440 = vrot.lane.b32.xlu0 %v36, 15
  %v441 = vpop.permute.xlu0 %440
  %442 = vrot.lane.b32.xlu0 %v27, 15
  %v443 = vpop.permute.xlu0 %442
  %444 = vrot.lane.b32.xlu0 %v37, 15
  %v445 = vpop.permute.xlu0 %444
  %vm446 = vcmp.lt.s32.totalorder %v49, 15
  %v447 = vsel %vm446, %v443, %v445
  %v448 = vsel %vm446, %v441, %v443
  %v449 = vsel %vm446, %v439, %v441
  %v450 = vsel %vm446, %v445, %v439
  %vm451 = vmand %vm32, %vm31
  %v452 = vsel %vm451, 1, 0
  %v453 = vlaneseq
  %v454 = vshrl.u32 %v453, 7
  %v455 = vsub.s32 0, %v454
  %v456 = vrot.slane %v452, %v455
  %v457 = vlaneseq
  %v458 = vshrl.u32 %v457, 7
  %v459 = vsub.s32 1, %v458
  %v460 = vrot.slane %v452, %v459
  %v461 = vlaneseq
  %v462 = vshrl.u32 %v461, 7
  %v463 = vsub.s32 2, %v462
  %v464 = vrot.slane %v452, %v463
  %v465 = vlaneseq
  %v466 = vshrl.u32 %v465, 7
  %v467 = vsub.s32 3, %v466
  %v468 = vrot.slane %v452, %v467
  %vm469 = vcmp.eq.s32.totalorder %v456, 1
  %vm470 = vcmp.eq.s32.totalorder %v460, 1
  %vm471 = vcmp.eq.s32.totalorder %v464, 1
  %vm472 = vcmp.eq.s32.totalorder %v468, 1
  %v473 = vsel %vm469, %v450, 0.0
  %v474 = vsel %vm470, %v449, 0.0
  %v475 = vsel %vm471, %v448, 0.0
  %v476 = vsel %vm472, %v447, 0.0
  %s477 = scalar_lea.vmem %s3, 16
  %v478 = vld [vmem:[%s477] sm:$0xff]
  %v480 = vsel %vm122, %v478, 0
  %v483 = vsel %vm126, %v473, 0
  %v486 = vsel %vm126, %v474, 0
  %v489 = vsel %vm126, %v475, 0
  %v492 = vsel %vm126, %v476, 0
  %494 = vmatprep.subr.mxu0 %v486
  %495 = vmatpush1.msra.mxu0 %v483
  %496 = vmatprep.subr.mxu0 0.0
  %497 = vmatpush1.msra.mxu0 0.0
  %498 = vmatprep.subr.mxu0 0.0
  %499 = vmatpush1.msra.mxu0 0.0
  %500 = vmatprep.subr.mxu0 0.0
  %501 = vmatpush1.msra.mxu0 0.0
  %502 = vmatprep.subr.mxu0 0.0
  %503 = vmatpush1.msra.mxu0 0.0
  %504 = vmatprep.subr.mxu0 0.0
  %505 = vmatpush1.msra.mxu0 0.0
  %506 = vmatprep.subr.mxu0 0.0
  %507 = vmatpush1.msra.mxu0 0.0
  %508 = vmatprep.subr.mxu0 0.0
  %509 = vmatpush1.msra.mxu0 0.0
  %510 = vmatprep.subr.mxu0 0.0
  %511 = vmatpush1.msra.mxu0 0.0
  %512 = vmatprep.subr.mxu0 0.0
  %513 = vmatpush1.msra.mxu0 0.0
  %514 = vmatprep.subr.mxu0 0.0
  %515 = vmatpush1.msra.mxu0 0.0
  %516 = vmatprep.subr.mxu0 0.0
  %517 = vmatpush1.msra.mxu0 0.0
  %518 = vmatprep.subr.mxu0 0.0
  %519 = vmatpush1.msra.mxu0 0.0
  %520 = vmatprep.subr.mxu0 0.0
  %521 = vmatpush1.msra.mxu0 0.0
  %522 = vmatprep.subr.mxu0 0.0
  %523 = vmatpush1.msra.mxu0 0.0
  %524 = vmatprep.subr.mxu0 0.0
  %525 = vmatpush1.msra.mxu0 0.0
  %526 = vmatprep.subr.mxu0 0.0
  %527 = vmatpush1.msra.mxu0 0.0
  %528 = vmatprep.subr.mxu0 0.0
  %529 = vmatpush1.msra.mxu0 0.0
  %530 = vmatprep.subr.mxu0 0.0
  %531 = vmatpush1.msra.mxu0 0.0
  %532 = vmatprep.subr.mxu0 0.0
  %533 = vmatpush1.msra.mxu0 0.0
  %534 = vmatprep.subr.mxu0 0.0
  %535 = vmatpush1.msra.mxu0 0.0
  %536 = vmatprep.subr.mxu0 0.0
  %537 = vmatpush1.msra.mxu0 0.0
  %538 = vmatprep.subr.mxu0 0.0
  %539 = vmatpush1.msra.mxu0 0.0
  %540 = vmatprep.subr.mxu0 0.0
  %541 = vmatpush1.msra.mxu0 0.0
  %542 = vmatprep.subr.mxu0 0.0
  %543 = vmatpush1.msra.mxu0 0.0
  %544 = vmatprep.subr.mxu0 0.0
  %545 = vmatpush1.msra.mxu0 0.0
  %546 = vmatprep.subr.mxu0 0.0
  %547 = vmatpush1.msra.mxu0 0.0
  %548 = vmatprep.subr.mxu0 0.0
  %549 = vmatpush1.msra.mxu0 0.0
  %550 = vmatprep.subr.mxu0 0.0
  %551 = vmatpush1.msra.mxu0 0.0
  %552 = vmatprep.subr.mxu0 0.0
  %553 = vmatpush1.msra.mxu0 0.0
  %554 = vmatprep.subr.mxu0 0.0
  %555 = vmatpush1.msra.mxu0 0.0
  %556 = vmatprep.subr.mxu0 0.0
  %557 = vmatpush1.msra.mxu0 0.0
  %558 = vmatprep.mubr.f32.mxu0 0.0
  %559 = vmatmul.mubr.f32.gmra.mrb[0].mxu0 %v480
  %v560 = vpop.f32.mrb[0].mxu0
  %v561 = vadd.f32 0.0, %v560
  %v562 = vpop.f32.mrb[0].mxu0
  %v563 = vadd.f32 0.0, %v562
  %564 = vdwg.mxu0
  %565 = vmatprep.subr.mxu0 %v492
  %566 = vmatpush1.msra.mxu0 %v489
  %567 = vmatprep.subr.mxu0 0.0
  %568 = vmatpush1.msra.mxu0 0.0
  %569 = vmatprep.subr.mxu0 0.0
  %570 = vmatpush1.msra.mxu0 0.0
  %571 = vmatprep.subr.mxu0 0.0
  %572 = vmatpush1.msra.mxu0 0.0
  %573 = vmatprep.subr.mxu0 0.0
  %574 = vmatpush1.msra.mxu0 0.0
  %575 = vmatprep.subr.mxu0 0.0
  %576 = vmatpush1.msra.mxu0 0.0
  %577 = vmatprep.subr.mxu0 0.0
  %578 = vmatpush1.msra.mxu0 0.0
  %579 = vmatprep.subr.mxu0 0.0
  %580 = vmatpush1.msra.mxu0 0.0
  %581 = vmatprep.subr.mxu0 0.0
  %582 = vmatpush1.msra.mxu0 0.0
  %583 = vmatprep.subr.mxu0 0.0
  %584 = vmatpush1.msra.mxu0 0.0
  %585 = vmatprep.subr.mxu0 0.0
  %586 = vmatpush1.msra.mxu0 0.0
  %587 = vmatprep.subr.mxu0 0.0
  %588 = vmatpush1.msra.mxu0 0.0
  %589 = vmatprep.subr.mxu0 0.0
  %590 = vmatpush1.msra.mxu0 0.0
  %591 = vmatprep.subr.mxu0 0.0
  %592 = vmatpush1.msra.mxu0 0.0
  %593 = vmatprep.subr.mxu0 0.0
  %594 = vmatpush1.msra.mxu0 0.0
  %595 = vmatprep.subr.mxu0 0.0
  %596 = vmatpush1.msra.mxu0 0.0
  %597 = vmatprep.subr.mxu0 0.0
  %598 = vmatpush1.msra.mxu0 0.0
  %599 = vmatprep.subr.mxu0 0.0
  %600 = vmatpush1.msra.mxu0 0.0
  %601 = vmatprep.subr.mxu0 0.0
  %602 = vmatpush1.msra.mxu0 0.0
  %603 = vmatprep.subr.mxu0 0.0
  %604 = vmatpush1.msra.mxu0 0.0
  %605 = vmatprep.subr.mxu0 0.0
  %606 = vmatpush1.msra.mxu0 0.0
  %607 = vmatprep.subr.mxu0 0.0
  %608 = vmatpush1.msra.mxu0 0.0
  %609 = vmatprep.subr.mxu0 0.0
  %610 = vmatpush1.msra.mxu0 0.0
  %611 = vmatprep.subr.mxu0 0.0
  %612 = vmatpush1.msra.mxu0 0.0
  %613 = vmatprep.subr.mxu0 0.0
  %614 = vmatpush1.msra.mxu0 0.0
  %615 = vmatprep.subr.mxu0 0.0
  %616 = vmatpush1.msra.mxu0 0.0
  %617 = vmatprep.subr.mxu0 0.0
  %618 = vmatpush1.msra.mxu0 0.0
  %619 = vmatprep.subr.mxu0 0.0
  %620 = vmatpush1.msra.mxu0 0.0
  %621 = vmatprep.subr.mxu0 0.0
  %622 = vmatpush1.msra.mxu0 0.0
  %623 = vmatprep.subr.mxu0 0.0
  %624 = vmatpush1.msra.mxu0 0.0
  %625 = vmatprep.subr.mxu0 0.0
  %626 = vmatpush1.msra.mxu0 0.0
  %627 = vmatprep.subr.mxu0 0.0
  %628 = vmatpush1.msra.mxu0 0.0
  %629 = vmatprep.mubr.f32.mxu0 0.0
  %630 = vmatmul.mubr.f32.gmra.mrb[0].mxu0 %v480
  %v631 = vpop.f32.mrb[0].mxu0
  %v632 = vadd.f32 0.0, %v631
  %v633 = vpop.f32.mrb[0].mxu0
  %v634 = vadd.f32 0.0, %v633
  %635 = vdwg.mxu0
  %v636 = vadd.f32 %v363, %v561
  %v637 = vadd.f32 %v365, %v563
  %v638 = vadd.f32 %v434, %v632
  %v639 = vadd.f32 %v436, %v634
  %640 = vrot.lane.b32.xlu0 %v26, 1
  %v641 = vpop.permute.xlu0 %640
  %642 = vrot.lane.b32.xlu0 %v36, 1
  %v643 = vpop.permute.xlu0 %642
  %644 = vrot.lane.b32.xlu0 %v27, 1
  %v645 = vpop.permute.xlu0 %644
  %646 = vrot.lane.b32.xlu0 %v37, 1
  %v647 = vpop.permute.xlu0 %646
  %vm648 = vcmp.lt.s32.totalorder %v49, 1
  %v649 = vsel %vm648, %v645, %v647
  %v650 = vsel %vm648, %v643, %v645
  %v651 = vsel %vm648, %v641, %v643
  %v652 = vsel %vm648, %v647, %v641
  %v653 = vsel %vm30, 1, 0
  %v654 = vlaneseq
  %v655 = vshrl.u32 %v654, 7
  %v656 = vsub.s32 0, %v655
  %v657 = vrot.slane %v653, %v656
  %v658 = vlaneseq
  %v659 = vshrl.u32 %v658, 7
  %v660 = vsub.s32 1, %v659
  %v661 = vrot.slane %v653, %v660
  %v662 = vlaneseq
  %v663 = vshrl.u32 %v662, 7
  %v664 = vsub.s32 2, %v663
  %v665 = vrot.slane %v653, %v664
  %v666 = vlaneseq
  %v667 = vshrl.u32 %v666, 7
  %v668 = vsub.s32 3, %v667
  %v669 = vrot.slane %v653, %v668
  %vm670 = vcmp.eq.s32.totalorder %v657, 1
  %vm671 = vcmp.eq.s32.totalorder %v661, 1
  %vm672 = vcmp.eq.s32.totalorder %v665, 1
  %vm673 = vcmp.eq.s32.totalorder %v669, 1
  %v674 = vsel %vm670, %v652, 0.0
  %v675 = vsel %vm671, %v651, 0.0
  %v676 = vsel %vm672, %v650, 0.0
  %v677 = vsel %vm673, %v649, 0.0
  %s678 = scalar_lea.vmem %s3, 24
  %v679 = vld [vmem:[%s678] sm:$0xff]
  %v681 = vsel %vm122, %v679, 0
  %v684 = vsel %vm126, %v674, 0
  %v687 = vsel %vm126, %v675, 0
  %v690 = vsel %vm126, %v676, 0
  %v693 = vsel %vm126, %v677, 0
  %695 = vmatprep.subr.mxu0 %v687
  %696 = vmatpush1.msra.mxu0 %v684
  %697 = vmatprep.subr.mxu0 0.0
  %698 = vmatpush1.msra.mxu0 0.0
  %699 = vmatprep.subr.mxu0 0.0
  %700 = vmatpush1.msra.mxu0 0.0
  %701 = vmatprep.subr.mxu0 0.0
  %702 = vmatpush1.msra.mxu0 0.0
  %703 = vmatprep.subr.mxu0 0.0
  %704 = vmatpush1.msra.mxu0 0.0
  %705 = vmatprep.subr.mxu0 0.0
  %706 = vmatpush1.msra.mxu0 0.0
  %707 = vmatprep.subr.mxu0 0.0
  %708 = vmatpush1.msra.mxu0 0.0
  %709 = vmatprep.subr.mxu0 0.0
  %710 = vmatpush1.msra.mxu0 0.0
  %711 = vmatprep.subr.mxu0 0.0
  %712 = vmatpush1.msra.mxu0 0.0
  %713 = vmatprep.subr.mxu0 0.0
  %714 = vmatpush1.msra.mxu0 0.0
  %715 = vmatprep.subr.mxu0 0.0
  %716 = vmatpush1.msra.mxu0 0.0
  %717 = vmatprep.subr.mxu0 0.0
  %718 = vmatpush1.msra.mxu0 0.0
  %719 = vmatprep.subr.mxu0 0.0
  %720 = vmatpush1.msra.mxu0 0.0
  %721 = vmatprep.subr.mxu0 0.0
  %722 = vmatpush1.msra.mxu0 0.0
  %723 = vmatprep.subr.mxu0 0.0
  %724 = vmatpush1.msra.mxu0 0.0
  %725 = vmatprep.subr.mxu0 0.0
  %726 = vmatpush1.msra.mxu0 0.0
  %727 = vmatprep.subr.mxu0 0.0
  %728 = vmatpush1.msra.mxu0 0.0
  %729 = vmatprep.subr.mxu0 0.0
  %730 = vmatpush1.msra.mxu0 0.0
  %731 = vmatprep.subr.mxu0 0.0
  %732 = vmatpush1.msra.mxu0 0.0
  %733 = vmatprep.subr.mxu0 0.0
  %734 = vmatpush1.msra.mxu0 0.0
  %735 = vmatprep.subr.mxu0 0.0
  %736 = vmatpush1.msra.mxu0 0.0
  %737 = vmatprep.subr.mxu0 0.0
  %738 = vmatpush1.msra.mxu0 0.0
  %739 = vmatprep.subr.mxu0 0.0
  %740 = vmatpush1.msra.mxu0 0.0
  %741 = vmatprep.subr.mxu0 0.0
  %742 = vmatpush1.msra.mxu0 0.0
  %743 = vmatprep.subr.mxu0 0.0
  %744 = vmatpush1.msra.mxu0 0.0
  %745 = vmatprep.subr.mxu0 0.0
  %746 = vmatpush1.msra.mxu0 0.0
  %747 = vmatprep.subr.mxu0 0.0
  %748 = vmatpush1.msra.mxu0 0.0
  %749 = vmatprep.subr.mxu0 0.0
  %750 = vmatpush1.msra.mxu0 0.0
  %751 = vmatprep.subr.mxu0 0.0
  %752 = vmatpush1.msra.mxu0 0.0
  %753 = vmatprep.subr.mxu0 0.0
  %754 = vmatpush1.msra.mxu0 0.0
  %755 = vmatprep.subr.mxu0 0.0
  %756 = vmatpush1.msra.mxu0 0.0
  %757 = vmatprep.subr.mxu0 0.0
  %758 = vmatpush1.msra.mxu0 0.0
  %759 = vmatprep.mubr.f32.mxu0 0.0
  %760 = vmatmul.mubr.f32.gmra.mrb[0].mxu0 %v681
  %v761 = vpop.f32.mrb[0].mxu0
  %v762 = vadd.f32 0.0, %v761
  %v763 = vpop.f32.mrb[0].mxu0
  %v764 = vadd.f32 0.0, %v763
  %765 = vdwg.mxu0
  %766 = vmatprep.subr.mxu0 %v693
  %767 = vmatpush1.msra.mxu0 %v690
  %768 = vmatprep.subr.mxu0 0.0
  %769 = vmatpush1.msra.mxu0 0.0
  %770 = vmatprep.subr.mxu0 0.0
  %771 = vmatpush1.msra.mxu0 0.0
  %772 = vmatprep.subr.mxu0 0.0
  %773 = vmatpush1.msra.mxu0 0.0
  %774 = vmatprep.subr.mxu0 0.0
  %775 = vmatpush1.msra.mxu0 0.0
  %776 = vmatprep.subr.mxu0 0.0
  %777 = vmatpush1.msra.mxu0 0.0
  %778 = vmatprep.subr.mxu0 0.0
  %779 = vmatpush1.msra.mxu0 0.0
  %780 = vmatprep.subr.mxu0 0.0
  %781 = vmatpush1.msra.mxu0 0.0
  %782 = vmatprep.subr.mxu0 0.0
  %783 = vmatpush1.msra.mxu0 0.0
  %784 = vmatprep.subr.mxu0 0.0
  %785 = vmatpush1.msra.mxu0 0.0
  %786 = vmatprep.subr.mxu0 0.0
  %787 = vmatpush1.msra.mxu0 0.0
  %788 = vmatprep.subr.mxu0 0.0
  %789 = vmatpush1.msra.mxu0 0.0
  %790 = vmatprep.subr.mxu0 0.0
  %791 = vmatpush1.msra.mxu0 0.0
  %792 = vmatprep.subr.mxu0 0.0
  %793 = vmatpush1.msra.mxu0 0.0
  %794 = vmatprep.subr.mxu0 0.0
  %795 = vmatpush1.msra.mxu0 0.0
  %796 = vmatprep.subr.mxu0 0.0
  %797 = vmatpush1.msra.mxu0 0.0
  %798 = vmatprep.subr.mxu0 0.0
  %799 = vmatpush1.msra.mxu0 0.0
  %800 = vmatprep.subr.mxu0 0.0
  %801 = vmatpush1.msra.mxu0 0.0
  %802 = vmatprep.subr.mxu0 0.0
  %803 = vmatpush1.msra.mxu0 0.0
  %804 = vmatprep.subr.mxu0 0.0
  %805 = vmatpush1.msra.mxu0 0.0
  %806 = vmatprep.subr.mxu0 0.0
  %807 = vmatpush1.msra.mxu0 0.0
  %808 = vmatprep.subr.mxu0 0.0
  %809 = vmatpush1.msra.mxu0 0.0
  %810 = vmatprep.subr.mxu0 0.0
  %811 = vmatpush1.msra.mxu0 0.0
  %812 = vmatprep.subr.mxu0 0.0
  %813 = vmatpush1.msra.mxu0 0.0
  %814 = vmatprep.subr.mxu0 0.0
  %815 = vmatpush1.msra.mxu0 0.0
  %816 = vmatprep.subr.mxu0 0.0
  %817 = vmatpush1.msra.mxu0 0.0
  %818 = vmatprep.subr.mxu0 0.0
  %819 = vmatpush1.msra.mxu0 0.0
  %820 = vmatprep.subr.mxu0 0.0
  %821 = vmatpush1.msra.mxu0 0.0
  %822 = vmatprep.subr.mxu0 0.0
  %823 = vmatpush1.msra.mxu0 0.0
  %824 = vmatprep.subr.mxu0 0.0
  %825 = vmatpush1.msra.mxu0 0.0
  %826 = vmatprep.subr.mxu0 0.0
  %827 = vmatpush1.msra.mxu0 0.0
  %828 = vmatprep.subr.mxu0 0.0
  %829 = vmatpush1.msra.mxu0 0.0
  %830 = vmatprep.mubr.f32.mxu0 0.0
  %831 = vmatmul.mubr.f32.gmra.mrb[0].mxu0 %v681
  %v832 = vpop.f32.mrb[0].mxu0
  %v833 = vadd.f32 0.0, %v832
  %v834 = vpop.f32.mrb[0].mxu0
  %v835 = vadd.f32 0.0, %v834
  %836 = vdwg.mxu0
  %v837 = vadd.f32 %v636, %v762
  %v838 = vadd.f32 %v637, %v764
  %v839 = vadd.f32 %v638, %v833
  %v840 = vadd.f32 %v639, %v835
  %s841 = scalar_lea.vmem %s3, 32
  %v842 = vld [vmem:[%s841] sm:$0xff]
  %v844 = vsel %vm122, %v842, 0
  %v846 = vsel %vm126, %v26, 0
  %v848 = vsel %vm126, %v36, 0
  %v850 = vsel %vm126, %v27, 0
  %v852 = vsel %vm126, %v37, 0
  %854 = vmatprep.subr.mxu0 %v848
  %855 = vmatpush1.msra.mxu0 %v846
  %856 = vmatprep.subr.mxu0 0.0
  %857 = vmatpush1.msra.mxu0 0.0
  %858 = vmatprep.subr.mxu0 0.0
  %859 = vmatpush1.msra.mxu0 0.0
  %860 = vmatprep.subr.mxu0 0.0
  %861 = vmatpush1.msra.mxu0 0.0
  %862 = vmatprep.subr.mxu0 0.0
  %863 = vmatpush1.msra.mxu0 0.0
  %864 = vmatprep.subr.mxu0 0.0
  %865 = vmatpush1.msra.mxu0 0.0
  %866 = vmatprep.subr.mxu0 0.0
  %867 = vmatpush1.msra.mxu0 0.0
  %868 = vmatprep.subr.mxu0 0.0
  %869 = vmatpush1.msra.mxu0 0.0
  %870 = vmatprep.subr.mxu0 0.0
  %871 = vmatpush1.msra.mxu0 0.0
  %872 = vmatprep.subr.mxu0 0.0
  %873 = vmatpush1.msra.mxu0 0.0
  %874 = vmatprep.subr.mxu0 0.0
  %875 = vmatpush1.msra.mxu0 0.0
  %876 = vmatprep.subr.mxu0 0.0
  %877 = vmatpush1.msra.mxu0 0.0
  %878 = vmatprep.subr.mxu0 0.0
  %879 = vmatpush1.msra.mxu0 0.0
  %880 = vmatprep.subr.mxu0 0.0
  %881 = vmatpush1.msra.mxu0 0.0
  %882 = vmatprep.subr.mxu0 0.0
  %883 = vmatpush1.msra.mxu0 0.0
  %884 = vmatprep.subr.mxu0 0.0
  %885 = vmatpush1.msra.mxu0 0.0
  %886 = vmatprep.subr.mxu0 0.0
  %887 = vmatpush1.msra.mxu0 0.0
  %888 = vmatprep.subr.mxu0 0.0
  %889 = vmatpush1.msra.mxu0 0.0
  %890 = vmatprep.subr.mxu0 0.0
  %891 = vmatpush1.msra.mxu0 0.0
  %892 = vmatprep.subr.mxu0 0.0
  %893 = vmatpush1.msra.mxu0 0.0
  %894 = vmatprep.subr.mxu0 0.0
  %895 = vmatpush1.msra.mxu0 0.0
  %896 = vmatprep.subr.mxu0 0.0
  %897 = vmatpush1.msra.mxu0 0.0
  %898 = vmatprep.subr.mxu0 0.0
  %899 = vmatpush1.msra.mxu0 0.0
  %900 = vmatprep.subr.mxu0 0.0
  %901 = vmatpush1.msra.mxu0 0.0
  %902 = vmatprep.subr.mxu0 0.0
  %903 = vmatpush1.msra.mxu0 0.0
  %904 = vmatprep.subr.mxu0 0.0
  %905 = vmatpush1.msra.mxu0 0.0
  %906 = vmatprep.subr.mxu0 0.0
  %907 = vmatpush1.msra.mxu0 0.0
  %908 = vmatprep.subr.mxu0 0.0
  %909 = vmatpush1.msra.mxu0 0.0
  %910 = vmatprep.subr.mxu0 0.0
  %911 = vmatpush1.msra.mxu0 0.0
  %912 = vmatprep.subr.mxu0 0.0
  %913 = vmatpush1.msra.mxu0 0.0
  %914 = vmatprep.subr.mxu0 0.0
  %915 = vmatpush1.msra.mxu0 0.0
  %916 = vmatprep.subr.mxu0 0.0
  %917 = vmatpush1.msra.mxu0 0.0
  %918 = vmatprep.mubr.f32.mxu0 0.0
  %919 = vmatmul.mubr.f32.gmra.mrb[0].mxu0 %v844
  %v920 = vpop.f32.mrb[0].mxu0
  %v921 = vadd.f32 0.0, %v920
  %v922 = vpop.f32.mrb[0].mxu0
  %v923 = vadd.f32 0.0, %v922
  %924 = vdwg.mxu0
  %925 = vmatprep.subr.mxu0 %v852
  %926 = vmatpush1.msra.mxu0 %v850
  %927 = vmatprep.subr.mxu0 0.0
  %928 = vmatpush1.msra.mxu0 0.0
  %929 = vmatprep.subr.mxu0 0.0
  %930 = vmatpush1.msra.mxu0 0.0
  %931 = vmatprep.subr.mxu0 0.0
  %932 = vmatpush1.msra.mxu0 0.0
  %933 = vmatprep.subr.mxu0 0.0
  %934 = vmatpush1.msra.mxu0 0.0
  %935 = vmatprep.subr.mxu0 0.0
  %936 = vmatpush1.msra.mxu0 0.0
  %937 = vmatprep.subr.mxu0 0.0
  %938 = vmatpush1.msra.mxu0 0.0
  %939 = vmatprep.subr.mxu0 0.0
  %940 = vmatpush1.msra.mxu0 0.0
  %941 = vmatprep.subr.mxu0 0.0
  %942 = vmatpush1.msra.mxu0 0.0
  %943 = vmatprep.subr.mxu0 0.0
  %944 = vmatpush1.msra.mxu0 0.0
  %945 = vmatprep.subr.mxu0 0.0
  %946 = vmatpush1.msra.mxu0 0.0
  %947 = vmatprep.subr.mxu0 0.0
  %948 = vmatpush1.msra.mxu0 0.0
  %949 = vmatprep.subr.mxu0 0.0
  %950 = vmatpush1.msra.mxu0 0.0
  %951 = vmatprep.subr.mxu0 0.0
  %952 = vmatpush1.msra.mxu0 0.0
  %953 = vmatprep.subr.mxu0 0.0
  %954 = vmatpush1.msra.mxu0 0.0
  %955 = vmatprep.subr.mxu0 0.0
  %956 = vmatpush1.msra.mxu0 0.0
  %957 = vmatprep.subr.mxu0 0.0
  %958 = vmatpush1.msra.mxu0 0.0
  %959 = vmatprep.subr.mxu0 0.0
  %960 = vmatpush1.msra.mxu0 0.0
  %961 = vmatprep.subr.mxu0 0.0
  %962 = vmatpush1.msra.mxu0 0.0
  %963 = vmatprep.subr.mxu0 0.0
  %964 = vmatpush1.msra.mxu0 0.0
  %965 = vmatprep.subr.mxu0 0.0
  %966 = vmatpush1.msra.mxu0 0.0
  %967 = vmatprep.subr.mxu0 0.0
  %968 = vmatpush1.msra.mxu0 0.0
  %969 = vmatprep.subr.mxu0 0.0
  %970 = vmatpush1.msra.mxu0 0.0
  %971 = vmatprep.subr.mxu0 0.0
  %972 = vmatpush1.msra.mxu0 0.0
  %973 = vmatprep.subr.mxu0 0.0
  %974 = vmatpush1.msra.mxu0 0.0
  %975 = vmatprep.subr.mxu0 0.0
  %976 = vmatpush1.msra.mxu0 0.0
  %977 = vmatprep.subr.mxu0 0.0
  %978 = vmatpush1.msra.mxu0 0.0
  %979 = vmatprep.subr.mxu0 0.0
  %980 = vmatpush1.msra.mxu0 0.0
  %981 = vmatprep.subr.mxu0 0.0
  %982 = vmatpush1.msra.mxu0 0.0
  %983 = vmatprep.subr.mxu0 0.0
  %984 = vmatpush1.msra.mxu0 0.0
  %985 = vmatprep.subr.mxu0 0.0
  %986 = vmatpush1.msra.mxu0 0.0
  %987 = vmatprep.subr.mxu0 0.0
  %988 = vmatpush1.msra.mxu0 0.0
  %989 = vmatprep.mubr.f32.mxu0 0.0
  %990 = vmatmul.mubr.f32.gmra.mrb[0].mxu0 %v844
  %v991 = vpop.f32.mrb[0].mxu0
  %v992 = vadd.f32 0.0, %v991
  %v993 = vpop.f32.mrb[0].mxu0
  %v994 = vadd.f32 0.0, %v993
  %995 = vdwg.mxu0
  %v996 = vadd.f32 %v837, %v921
  %v997 = vadd.f32 %v838, %v923
  %v998 = vadd.f32 %v839, %v992
  %v999 = vadd.f32 %v840, %v994
  %1000 = vrot.lane.b32.xlu0 %v26, 127
  %v1001 = vpop.permute.xlu0 %1000
  %1002 = vrot.lane.b32.xlu0 %v36, 127
  %v1003 = vpop.permute.xlu0 %1002
  %1004 = vrot.lane.b32.xlu0 %v27, 127
  %v1005 = vpop.permute.xlu0 %1004
  %1006 = vrot.lane.b32.xlu0 %v37, 127
  %v1007 = vpop.permute.xlu0 %1006
  %vm1008 = vcmp.lt.s32.totalorder %v49, 127
  %v1009 = vsel %vm1008, %v1005, %v1007
  %v1010 = vsel %vm1008, %v1003, %v1005
  %v1011 = vsel %vm1008, %v1001, %v1003
  %v1012 = vsel %vm1008, %v1007, %v1001
  %v1013 = vsel %vm31, 1, 0
  %v1014 = vlaneseq
  %v1015 = vshrl.u32 %v1014, 7
  %v1016 = vsub.s32 0, %v1015
  %v1017 = vrot.slane %v1013, %v1016
  %v1018 = vlaneseq
  %v1019 = vshrl.u32 %v1018, 7
  %v1020 = vsub.s32 1, %v1019
  %v1021 = vrot.slane %v1013, %v1020
  %v1022 = vlaneseq
  %v1023 = vshrl.u32 %v1022, 7
  %v1024 = vsub.s32 2, %v1023
  %v1025 = vrot.slane %v1013, %v1024
  %v1026 = vlaneseq
  %v1027 = vshrl.u32 %v1026, 7
  %v1028 = vsub.s32 3, %v1027
  %v1029 = vrot.slane %v1013, %v1028
  %vm1030 = vcmp.eq.s32.totalorder %v1017, 1
  %vm1031 = vcmp.eq.s32.totalorder %v1021, 1
  %vm1032 = vcmp.eq.s32.totalorder %v1025, 1
  %vm1033 = vcmp.eq.s32.totalorder %v1029, 1
  %v1034 = vsel %vm1030, %v1011, 0.0
  %v1035 = vsel %vm1031, %v1010, 0.0
  %v1036 = vsel %vm1032, %v1009, 0.0
  %v1037 = vsel %vm1033, %v1012, 0.0
  %s1038 = scalar_lea.vmem %s3, 40
  %v1039 = vld [vmem:[%s1038] sm:$0xff]
  %v1041 = vsel %vm122, %v1039, 0
  %v1044 = vsel %vm126, %v1034, 0
  %v1047 = vsel %vm126, %v1035, 0
  %v1050 = vsel %vm126, %v1036, 0
  %v1053 = vsel %vm126, %v1037, 0
  %1055 = vmatprep.subr.mxu0 %v1047
  %1056 = vmatpush1.msra.mxu0 %v1044
  %1057 = vmatprep.subr.mxu0 0.0
  %1058 = vmatpush1.msra.mxu0 0.0
  %1059 = vmatprep.subr.mxu0 0.0
  %1060 = vmatpush1.msra.mxu0 0.0
  %1061 = vmatprep.subr.mxu0 0.0
  %1062 = vmatpush1.msra.mxu0 0.0
  %1063 = vmatprep.subr.mxu0 0.0
  %1064 = vmatpush1.msra.mxu0 0.0
  %1065 = vmatprep.subr.mxu0 0.0
  %1066 = vmatpush1.msra.mxu0 0.0
  %1067 = vmatprep.subr.mxu0 0.0
  %1068 = vmatpush1.msra.mxu0 0.0
  %1069 = vmatprep.subr.mxu0 0.0
  %1070 = vmatpush1.msra.mxu0 0.0
  %1071 = vmatprep.subr.mxu0 0.0
  %1072 = vmatpush1.msra.mxu0 0.0
  %1073 = vmatprep.subr.mxu0 0.0
  %1074 = vmatpush1.msra.mxu0 0.0
  %1075 = vmatprep.subr.mxu0 0.0
  %1076 = vmatpush1.msra.mxu0 0.0
  %1077 = vmatprep.subr.mxu0 0.0
  %1078 = vmatpush1.msra.mxu0 0.0
  %1079 = vmatprep.subr.mxu0 0.0
  %1080 = vmatpush1.msra.mxu0 0.0
  %1081 = vmatprep.subr.mxu0 0.0
  %1082 = vmatpush1.msra.mxu0 0.0
  %1083 = vmatprep.subr.mxu0 0.0
  %1084 = vmatpush1.msra.mxu0 0.0
  %1085 = vmatprep.subr.mxu0 0.0
  %1086 = vmatpush1.msra.mxu0 0.0
  %1087 = vmatprep.subr.mxu0 0.0
  %1088 = vmatpush1.msra.mxu0 0.0
  %1089 = vmatprep.subr.mxu0 0.0
  %1090 = vmatpush1.msra.mxu0 0.0
  %1091 = vmatprep.subr.mxu0 0.0
  %1092 = vmatpush1.msra.mxu0 0.0
  %1093 = vmatprep.subr.mxu0 0.0
  %1094 = vmatpush1.msra.mxu0 0.0
  %1095 = vmatprep.subr.mxu0 0.0
  %1096 = vmatpush1.msra.mxu0 0.0
  %1097 = vmatprep.subr.mxu0 0.0
  %1098 = vmatpush1.msra.mxu0 0.0
  %1099 = vmatprep.subr.mxu0 0.0
  %1100 = vmatpush1.msra.mxu0 0.0
  %1101 = vmatprep.subr.mxu0 0.0
  %1102 = vmatpush1.msra.mxu0 0.0
  %1103 = vmatprep.subr.mxu0 0.0
  %1104 = vmatpush1.msra.mxu0 0.0
  %1105 = vmatprep.subr.mxu0 0.0
  %1106 = vmatpush1.msra.mxu0 0.0
  %1107 = vmatprep.subr.mxu0 0.0
  %1108 = vmatpush1.msra.mxu0 0.0
  %1109 = vmatprep.subr.mxu0 0.0
  %1110 = vmatpush1.msra.mxu0 0.0
  %1111 = vmatprep.subr.mxu0 0.0
  %1112 = vmatpush1.msra.mxu0 0.0
  %1113 = vmatprep.subr.mxu0 0.0
  %1114 = vmatpush1.msra.mxu0 0.0
  %1115 = vmatprep.subr.mxu0 0.0
  %1116 = vmatpush1.msra.mxu0 0.0
  %1117 = vmatprep.subr.mxu0 0.0
  %1118 = vmatpush1.msra.mxu0 0.0
  %1119 = vmatprep.mubr.f32.mxu0 0.0
  %1120 = vmatmul.mubr.f32.gmra.mrb[0].mxu0 %v1041
  %v1121 = vpop.f32.mrb[0].mxu0
  %v1122 = vadd.f32 0.0, %v1121
  %v1123 = vpop.f32.mrb[0].mxu0
  %v1124 = vadd.f32 0.0, %v1123
  %1125 = vdwg.mxu0
  %1126 = vmatprep.subr.mxu0 %v1053
  %1127 = vmatpush1.msra.mxu0 %v1050
  %1128 = vmatprep.subr.mxu0 0.0
  %1129 = vmatpush1.msra.mxu0 0.0
  %1130 = vmatprep.subr.mxu0 0.0
  %1131 = vmatpush1.msra.mxu0 0.0
  %1132 = vmatprep.subr.mxu0 0.0
  %1133 = vmatpush1.msra.mxu0 0.0
  %1134 = vmatprep.subr.mxu0 0.0
  %1135 = vmatpush1.msra.mxu0 0.0
  %1136 = vmatprep.subr.mxu0 0.0
  %1137 = vmatpush1.msra.mxu0 0.0
  %1138 = vmatprep.subr.mxu0 0.0
  %1139 = vmatpush1.msra.mxu0 0.0
  %1140 = vmatprep.subr.mxu0 0.0
  %1141 = vmatpush1.msra.mxu0 0.0
  %1142 = vmatprep.subr.mxu0 0.0
  %1143 = vmatpush1.msra.mxu0 0.0
  %1144 = vmatprep.subr.mxu0 0.0
  %1145 = vmatpush1.msra.mxu0 0.0
  %1146 = vmatprep.subr.mxu0 0.0
  %1147 = vmatpush1.msra.mxu0 0.0
  %1148 = vmatprep.subr.mxu0 0.0
  %1149 = vmatpush1.msra.mxu0 0.0
  %1150 = vmatprep.subr.mxu0 0.0
  %1151 = vmatpush1.msra.mxu0 0.0
  %1152 = vmatprep.subr.mxu0 0.0
  %1153 = vmatpush1.msra.mxu0 0.0
  %1154 = vmatprep.subr.mxu0 0.0
  %1155 = vmatpush1.msra.mxu0 0.0
  %1156 = vmatprep.subr.mxu0 0.0
  %1157 = vmatpush1.msra.mxu0 0.0
  %1158 = vmatprep.subr.mxu0 0.0
  %1159 = vmatpush1.msra.mxu0 0.0
  %1160 = vmatprep.subr.mxu0 0.0
  %1161 = vmatpush1.msra.mxu0 0.0
  %1162 = vmatprep.subr.mxu0 0.0
  %1163 = vmatpush1.msra.mxu0 0.0
  %1164 = vmatprep.subr.mxu0 0.0
  %1165 = vmatpush1.msra.mxu0 0.0
  %1166 = vmatprep.subr.mxu0 0.0
  %1167 = vmatpush1.msra.mxu0 0.0
  %1168 = vmatprep.subr.mxu0 0.0
  %1169 = vmatpush1.msra.mxu0 0.0
  %1170 = vmatprep.subr.mxu0 0.0
  %1171 = vmatpush1.msra.mxu0 0.0
  %1172 = vmatprep.subr.mxu0 0.0
  %1173 = vmatpush1.msra.mxu0 0.0
  %1174 = vmatprep.subr.mxu0 0.0
  %1175 = vmatpush1.msra.mxu0 0.0
  %1176 = vmatprep.subr.mxu0 0.0
  %1177 = vmatpush1.msra.mxu0 0.0
  %1178 = vmatprep.subr.mxu0 0.0
  %1179 = vmatpush1.msra.mxu0 0.0
  %1180 = vmatprep.subr.mxu0 0.0
  %1181 = vmatpush1.msra.mxu0 0.0
  %1182 = vmatprep.subr.mxu0 0.0
  %1183 = vmatpush1.msra.mxu0 0.0
  %1184 = vmatprep.subr.mxu0 0.0
  %1185 = vmatpush1.msra.mxu0 0.0
  %1186 = vmatprep.subr.mxu0 0.0
  %1187 = vmatpush1.msra.mxu0 0.0
  %1188 = vmatprep.subr.mxu0 0.0
  %1189 = vmatpush1.msra.mxu0 0.0
  %1190 = vmatprep.mubr.f32.mxu0 0.0
  %1191 = vmatmul.mubr.f32.gmra.mrb[0].mxu0 %v1041
  %v1192 = vpop.f32.mrb[0].mxu0
  %v1193 = vadd.f32 0.0, %v1192
  %v1194 = vpop.f32.mrb[0].mxu0
  %v1195 = vadd.f32 0.0, %v1194
  %1196 = vdwg.mxu0
  %v1197 = vadd.f32 %v996, %v1122
  %v1198 = vadd.f32 %v997, %v1124
  %v1199 = vadd.f32 %v998, %v1193
  %v1200 = vadd.f32 %v999, %v1195
  %1201 = vrot.lane.b32.xlu0 %v26, 113
  %v1202 = vpop.permute.xlu0 %1201
  %1203 = vrot.lane.b32.xlu0 %v36, 113
  %v1204 = vpop.permute.xlu0 %1203
  %1205 = vrot.lane.b32.xlu0 %v27, 113
  %v1206 = vpop.permute.xlu0 %1205
  %1207 = vrot.lane.b32.xlu0 %v37, 113
  %v1208 = vpop.permute.xlu0 %1207
  %vm1209 = vcmp.lt.s32.totalorder %v49, 113
  %v1210 = vsel %vm1209, %v1206, %v1208
  %v1211 = vsel %vm1209, %v1204, %v1206
  %v1212 = vsel %vm1209, %v1202, %v1204
  %v1213 = vsel %vm1209, %v1208, %v1202
  %vm1214 = vmand %vm33, %vm30
  %v1215 = vsel %vm1214, 1, 0
  %v1216 = vlaneseq
  %v1217 = vshrl.u32 %v1216, 7
  %v1218 = vsub.s32 0, %v1217
  %v1219 = vrot.slane %v1215, %v1218
  %v1220 = vlaneseq
  %v1221 = vshrl.u32 %v1220, 7
  %v1222 = vsub.s32 1, %v1221
  %v1223 = vrot.slane %v1215, %v1222
  %v1224 = vlaneseq
  %v1225 = vshrl.u32 %v1224, 7
  %v1226 = vsub.s32 2, %v1225
  %v1227 = vrot.slane %v1215, %v1226
  %v1228 = vlaneseq
  %v1229 = vshrl.u32 %v1228, 7
  %v1230 = vsub.s32 3, %v1229
  %v1231 = vrot.slane %v1215, %v1230
  %vm1232 = vcmp.eq.s32.totalorder %v1219, 1
  %vm1233 = vcmp.eq.s32.totalorder %v1223, 1
  %vm1234 = vcmp.eq.s32.totalorder %v1227, 1
  %vm1235 = vcmp.eq.s32.totalorder %v1231, 1
  %v1236 = vsel %vm1232, %v1212, 0.0
  %v1237 = vsel %vm1233, %v1211, 0.0
  %v1238 = vsel %vm1234, %v1210, 0.0
  %v1239 = vsel %vm1235, %v1213, 0.0
  %s1240 = scalar_lea.vmem %s3, 48
  %v1241 = vld [vmem:[%s1240] sm:$0xff]
  %v1243 = vsel %vm122, %v1241, 0
  %v1246 = vsel %vm126, %v1236, 0
  %v1249 = vsel %vm126, %v1237, 0
  %v1252 = vsel %vm126, %v1238, 0
  %v1255 = vsel %vm126, %v1239, 0
  %1257 = vmatprep.subr.mxu0 %v1249
  %1258 = vmatpush1.msra.mxu0 %v1246
  %1259 = vmatprep.subr.mxu0 0.0
  %1260 = vmatpush1.msra.mxu0 0.0
  %1261 = vmatprep.subr.mxu0 0.0
  %1262 = vmatpush1.msra.mxu0 0.0
  %1263 = vmatprep.subr.mxu0 0.0
  %1264 = vmatpush1.msra.mxu0 0.0
  %1265 = vmatprep.subr.mxu0 0.0
  %1266 = vmatpush1.msra.mxu0 0.0
  %1267 = vmatprep.subr.mxu0 0.0
  %1268 = vmatpush1.msra.mxu0 0.0
  %1269 = vmatprep.subr.mxu0 0.0
  %1270 = vmatpush1.msra.mxu0 0.0
  %1271 = vmatprep.subr.mxu0 0.0
  %1272 = vmatpush1.msra.mxu0 0.0
  %1273 = vmatprep.subr.mxu0 0.0
  %1274 = vmatpush1.msra.mxu0 0.0
  %1275 = vmatprep.subr.mxu0 0.0
  %1276 = vmatpush1.msra.mxu0 0.0
  %1277 = vmatprep.subr.mxu0 0.0
  %1278 = vmatpush1.msra.mxu0 0.0
  %1279 = vmatprep.subr.mxu0 0.0
  %1280 = vmatpush1.msra.mxu0 0.0
  %1281 = vmatprep.subr.mxu0 0.0
  %1282 = vmatpush1.msra.mxu0 0.0
  %1283 = vmatprep.subr.mxu0 0.0
  %1284 = vmatpush1.msra.mxu0 0.0
  %1285 = vmatprep.subr.mxu0 0.0
  %1286 = vmatpush1.msra.mxu0 0.0
  %1287 = vmatprep.subr.mxu0 0.0
  %1288 = vmatpush1.msra.mxu0 0.0
  %1289 = vmatprep.subr.mxu0 0.0
  %1290 = vmatpush1.msra.mxu0 0.0
  %1291 = vmatprep.subr.mxu0 0.0
  %1292 = vmatpush1.msra.mxu0 0.0
  %1293 = vmatprep.subr.mxu0 0.0
  %1294 = vmatpush1.msra.mxu0 0.0
  %1295 = vmatprep.subr.mxu0 0.0
  %1296 = vmatpush1.msra.mxu0 0.0
  %1297 = vmatprep.subr.mxu0 0.0
  %1298 = vmatpush1.msra.mxu0 0.0
  %1299 = vmatprep.subr.mxu0 0.0
  %1300 = vmatpush1.msra.mxu0 0.0
  %1301 = vmatprep.subr.mxu0 0.0
  %1302 = vmatpush1.msra.mxu0 0.0
  %1303 = vmatprep.subr.mxu0 0.0
  %1304 = vmatpush1.msra.mxu0 0.0
  %1305 = vmatprep.subr.mxu0 0.0
  %1306 = vmatpush1.msra.mxu0 0.0
  %1307 = vmatprep.subr.mxu0 0.0
  %1308 = vmatpush1.msra.mxu0 0.0
  %1309 = vmatprep.subr.mxu0 0.0
  %1310 = vmatpush1.msra.mxu0 0.0
  %1311 = vmatprep.subr.mxu0 0.0
  %1312 = vmatpush1.msra.mxu0 0.0
  %1313 = vmatprep.subr.mxu0 0.0
  %1314 = vmatpush1.msra.mxu0 0.0
  %1315 = vmatprep.subr.mxu0 0.0
  %1316 = vmatpush1.msra.mxu0 0.0
  %1317 = vmatprep.subr.mxu0 0.0
  %1318 = vmatpush1.msra.mxu0 0.0
  %1319 = vmatprep.subr.mxu0 0.0
  %1320 = vmatpush1.msra.mxu0 0.0
  %1321 = vmatprep.mubr.f32.mxu0 0.0
  %1322 = vmatmul.mubr.f32.gmra.mrb[0].mxu0 %v1243
  %v1323 = vpop.f32.mrb[0].mxu0
  %v1324 = vadd.f32 0.0, %v1323
  %v1325 = vpop.f32.mrb[0].mxu0
  %v1326 = vadd.f32 0.0, %v1325
  %1327 = vdwg.mxu0
  %1328 = vmatprep.subr.mxu0 %v1255
  %1329 = vmatpush1.msra.mxu0 %v1252
  %1330 = vmatprep.subr.mxu0 0.0
  %1331 = vmatpush1.msra.mxu0 0.0
  %1332 = vmatprep.subr.mxu0 0.0
  %1333 = vmatpush1.msra.mxu0 0.0
  %1334 = vmatprep.subr.mxu0 0.0
  %1335 = vmatpush1.msra.mxu0 0.0
  %1336 = vmatprep.subr.mxu0 0.0
  %1337 = vmatpush1.msra.mxu0 0.0
  %1338 = vmatprep.subr.mxu0 0.0
  %1339 = vmatpush1.msra.mxu0 0.0
  %1340 = vmatprep.subr.mxu0 0.0
  %1341 = vmatpush1.msra.mxu0 0.0
  %1342 = vmatprep.subr.mxu0 0.0
  %1343 = vmatpush1.msra.mxu0 0.0
  %1344 = vmatprep.subr.mxu0 0.0
  %1345 = vmatpush1.msra.mxu0 0.0
  %1346 = vmatprep.subr.mxu0 0.0
  %1347 = vmatpush1.msra.mxu0 0.0
  %1348 = vmatprep.subr.mxu0 0.0
  %1349 = vmatpush1.msra.mxu0 0.0
  %1350 = vmatprep.subr.mxu0 0.0
  %1351 = vmatpush1.msra.mxu0 0.0
  %1352 = vmatprep.subr.mxu0 0.0
  %1353 = vmatpush1.msra.mxu0 0.0
  %1354 = vmatprep.subr.mxu0 0.0
  %1355 = vmatpush1.msra.mxu0 0.0
  %1356 = vmatprep.subr.mxu0 0.0
  %1357 = vmatpush1.msra.mxu0 0.0
  %1358 = vmatprep.subr.mxu0 0.0
  %1359 = vmatpush1.msra.mxu0 0.0
  %1360 = vmatprep.subr.mxu0 0.0
  %1361 = vmatpush1.msra.mxu0 0.0
  %1362 = vmatprep.subr.mxu0 0.0
  %1363 = vmatpush1.msra.mxu0 0.0
  %1364 = vmatprep.subr.mxu0 0.0
  %1365 = vmatpush1.msra.mxu0 0.0
  %1366 = vmatprep.subr.mxu0 0.0
  %1367 = vmatpush1.msra.mxu0 0.0
  %1368 = vmatprep.subr.mxu0 0.0
  %1369 = vmatpush1.msra.mxu0 0.0
  %1370 = vmatprep.subr.mxu0 0.0
  %1371 = vmatpush1.msra.mxu0 0.0
  %1372 = vmatprep.subr.mxu0 0.0
  %1373 = vmatpush1.msra.mxu0 0.0
  %1374 = vmatprep.subr.mxu0 0.0
  %1375 = vmatpush1.msra.mxu0 0.0
  %1376 = vmatprep.subr.mxu0 0.0
  %1377 = vmatpush1.msra.mxu0 0.0
  %1378 = vmatprep.subr.mxu0 0.0
  %1379 = vmatpush1.msra.mxu0 0.0
  %1380 = vmatprep.subr.mxu0 0.0
  %1381 = vmatpush1.msra.mxu0 0.0
  %1382 = vmatprep.subr.mxu0 0.0
  %1383 = vmatpush1.msra.mxu0 0.0
  %1384 = vmatprep.subr.mxu0 0.0
  %1385 = vmatpush1.msra.mxu0 0.0
  %1386 = vmatprep.subr.mxu0 0.0
  %1387 = vmatpush1.msra.mxu0 0.0
  %1388 = vmatprep.subr.mxu0 0.0
  %1389 = vmatpush1.msra.mxu0 0.0
  %1390 = vmatprep.subr.mxu0 0.0
  %1391 = vmatpush1.msra.mxu0 0.0
  %1392 = vmatprep.mubr.f32.mxu0 0.0
  %1393 = vmatmul.mubr.f32.gmra.mrb[0].mxu0 %v1243
  %v1394 = vpop.f32.mrb[0].mxu0
  %v1395 = vadd.f32 0.0, %v1394
  %v1396 = vpop.f32.mrb[0].mxu0
  %v1397 = vadd.f32 0.0, %v1396
  %1398 = vdwg.mxu0
  %v1399 = vadd.f32 %v1197, %v1324
  %v1400 = vadd.f32 %v1198, %v1326
  %v1401 = vadd.f32 %v1199, %v1395
  %v1402 = vadd.f32 %v1200, %v1397
  %1403 = vrot.lane.b32.xlu0 %v26, 112
  %v1404 = vpop.permute.xlu0 %1403
  %1405 = vrot.lane.b32.xlu0 %v36, 112
  %v1406 = vpop.permute.xlu0 %1405
  %1407 = vrot.lane.b32.xlu0 %v27, 112
  %v1408 = vpop.permute.xlu0 %1407
  %1409 = vrot.lane.b32.xlu0 %v37, 112
  %v1410 = vpop.permute.xlu0 %1409
  %vm1411 = vcmp.lt.s32.totalorder %v49, 112
  %v1412 = vsel %vm1411, %v1408, %v1410
  %v1413 = vsel %vm1411, %v1406, %v1408
  %v1414 = vsel %vm1411, %v1404, %v1406
  %v1415 = vsel %vm1411, %v1410, %v1404
  %v1416 = vsel %vm33, 1, 0
  %v1417 = vlaneseq
  %v1418 = vshrl.u32 %v1417, 7
  %v1419 = vsub.s32 0, %v1418
  %v1420 = vrot.slane %v1416, %v1419
  %v1421 = vlaneseq
  %v1422 = vshrl.u32 %v1421, 7
  %v1423 = vsub.s32 1, %v1422
  %v1424 = vrot.slane %v1416, %v1423
  %v1425 = vlaneseq
  %v1426 = vshrl.u32 %v1425, 7
  %v1427 = vsub.s32 2, %v1426
  %v1428 = vrot.slane %v1416, %v1427
  %v1429 = vlaneseq
  %v1430 = vshrl.u32 %v1429, 7
  %v1431 = vsub.s32 3, %v1430
  %v1432 = vrot.slane %v1416, %v1431
  %vm1433 = vcmp.eq.s32.totalorder %v1420, 1
  %vm1434 = vcmp.eq.s32.totalorder %v1424, 1
  %vm1435 = vcmp.eq.s32.totalorder %v1428, 1
  %vm1436 = vcmp.eq.s32.totalorder %v1432, 1
  %v1437 = vsel %vm1433, %v1414, 0.0
  %v1438 = vsel %vm1434, %v1413, 0.0
  %v1439 = vsel %vm1435, %v1412, 0.0
  %v1440 = vsel %vm1436, %v1415, 0.0
  %s1441 = scalar_lea.vmem %s3, 56
  %v1442 = vld [vmem:[%s1441] sm:$0xff]
  %v1444 = vsel %vm122, %v1442, 0
  %v1447 = vsel %vm126, %v1437, 0
  %v1450 = vsel %vm126, %v1438, 0
  %v1453 = vsel %vm126, %v1439, 0
  %v1456 = vsel %vm126, %v1440, 0
  %1458 = vmatprep.subr.mxu0 %v1450
  %1459 = vmatpush1.msra.mxu0 %v1447
  %1460 = vmatprep.subr.mxu0 0.0
  %1461 = vmatpush1.msra.mxu0 0.0
  %1462 = vmatprep.subr.mxu0 0.0
  %1463 = vmatpush1.msra.mxu0 0.0
  %1464 = vmatprep.subr.mxu0 0.0
  %1465 = vmatpush1.msra.mxu0 0.0
  %1466 = vmatprep.subr.mxu0 0.0
  %1467 = vmatpush1.msra.mxu0 0.0
  %1468 = vmatprep.subr.mxu0 0.0
  %1469 = vmatpush1.msra.mxu0 0.0
  %1470 = vmatprep.subr.mxu0 0.0
  %1471 = vmatpush1.msra.mxu0 0.0
  %1472 = vmatprep.subr.mxu0 0.0
  %1473 = vmatpush1.msra.mxu0 0.0
  %1474 = vmatprep.subr.mxu0 0.0
  %1475 = vmatpush1.msra.mxu0 0.0
  %1476 = vmatprep.subr.mxu0 0.0
  %1477 = vmatpush1.msra.mxu0 0.0
  %1478 = vmatprep.subr.mxu0 0.0
  %1479 = vmatpush1.msra.mxu0 0.0
  %1480 = vmatprep.subr.mxu0 0.0
  %1481 = vmatpush1.msra.mxu0 0.0
  %1482 = vmatprep.subr.mxu0 0.0
  %1483 = vmatpush1.msra.mxu0 0.0
  %1484 = vmatprep.subr.mxu0 0.0
  %1485 = vmatpush1.msra.mxu0 0.0
  %1486 = vmatprep.subr.mxu0 0.0
  %1487 = vmatpush1.msra.mxu0 0.0
  %1488 = vmatprep.subr.mxu0 0.0
  %1489 = vmatpush1.msra.mxu0 0.0
  %1490 = vmatprep.subr.mxu0 0.0
  %1491 = vmatpush1.msra.mxu0 0.0
  %1492 = vmatprep.subr.mxu0 0.0
  %1493 = vmatpush1.msra.mxu0 0.0
  %1494 = vmatprep.subr.mxu0 0.0
  %1495 = vmatpush1.msra.mxu0 0.0
  %1496 = vmatprep.subr.mxu0 0.0
  %1497 = vmatpush1.msra.mxu0 0.0
  %1498 = vmatprep.subr.mxu0 0.0
  %1499 = vmatpush1.msra.mxu0 0.0
  %1500 = vmatprep.subr.mxu0 0.0
  %1501 = vmatpush1.msra.mxu0 0.0
  %1502 = vmatprep.subr.mxu0 0.0
  %1503 = vmatpush1.msra.mxu0 0.0
  %1504 = vmatprep.subr.mxu0 0.0
  %1505 = vmatpush1.msra.mxu0 0.0
  %1506 = vmatprep.subr.mxu0 0.0
  %1507 = vmatpush1.msra.mxu0 0.0
  %1508 = vmatprep.subr.mxu0 0.0
  %1509 = vmatpush1.msra.mxu0 0.0
  %1510 = vmatprep.subr.mxu0 0.0
  %1511 = vmatpush1.msra.mxu0 0.0
  %1512 = vmatprep.subr.mxu0 0.0
  %1513 = vmatpush1.msra.mxu0 0.0
  %1514 = vmatprep.subr.mxu0 0.0
  %1515 = vmatpush1.msra.mxu0 0.0
  %1516 = vmatprep.subr.mxu0 0.0
  %1517 = vmatpush1.msra.mxu0 0.0
  %1518 = vmatprep.subr.mxu0 0.0
  %1519 = vmatpush1.msra.mxu0 0.0
  %1520 = vmatprep.subr.mxu0 0.0
  %1521 = vmatpush1.msra.mxu0 0.0
  %1522 = vmatprep.mubr.f32.mxu0 0.0
  %1523 = vmatmul.mubr.f32.gmra.mrb[0].mxu0 %v1444
  %v1524 = vpop.f32.mrb[0].mxu0
  %v1525 = vadd.f32 0.0, %v1524
  %v1526 = vpop.f32.mrb[0].mxu0
  %v1527 = vadd.f32 0.0, %v1526
  %1528 = vdwg.mxu0
  %1529 = vmatprep.subr.mxu0 %v1456
  %1530 = vmatpush1.msra.mxu0 %v1453
  %1531 = vmatprep.subr.mxu0 0.0
  %1532 = vmatpush1.msra.mxu0 0.0
  %1533 = vmatprep.subr.mxu0 0.0
  %1534 = vmatpush1.msra.mxu0 0.0
  %1535 = vmatprep.subr.mxu0 0.0
  %1536 = vmatpush1.msra.mxu0 0.0
  %1537 = vmatprep.subr.mxu0 0.0
  %1538 = vmatpush1.msra.mxu0 0.0
  %1539 = vmatprep.subr.mxu0 0.0
  %1540 = vmatpush1.msra.mxu0 0.0
  %1541 = vmatprep.subr.mxu0 0.0
  %1542 = vmatpush1.msra.mxu0 0.0
  %1543 = vmatprep.subr.mxu0 0.0
  %1544 = vmatpush1.msra.mxu0 0.0
  %1545 = vmatprep.subr.mxu0 0.0
  %1546 = vmatpush1.msra.mxu0 0.0
  %1547 = vmatprep.subr.mxu0 0.0
  %1548 = vmatpush1.msra.mxu0 0.0
  %1549 = vmatprep.subr.mxu0 0.0
  %1550 = vmatpush1.msra.mxu0 0.0
  %1551 = vmatprep.subr.mxu0 0.0
  %1552 = vmatpush1.msra.mxu0 0.0
  %1553 = vmatprep.subr.mxu0 0.0
  %1554 = vmatpush1.msra.mxu0 0.0
  %1555 = vmatprep.subr.mxu0 0.0
  %1556 = vmatpush1.msra.mxu0 0.0
  %1557 = vmatprep.subr.mxu0 0.0
  %1558 = vmatpush1.msra.mxu0 0.0
  %1559 = vmatprep.subr.mxu0 0.0
  %1560 = vmatpush1.msra.mxu0 0.0
  %1561 = vmatprep.subr.mxu0 0.0
  %1562 = vmatpush1.msra.mxu0 0.0
  %1563 = vmatprep.subr.mxu0 0.0
  %1564 = vmatpush1.msra.mxu0 0.0
  %1565 = vmatprep.subr.mxu0 0.0
  %1566 = vmatpush1.msra.mxu0 0.0
  %1567 = vmatprep.subr.mxu0 0.0
  %1568 = vmatpush1.msra.mxu0 0.0
  %1569 = vmatprep.subr.mxu0 0.0
  %1570 = vmatpush1.msra.mxu0 0.0
  %1571 = vmatprep.subr.mxu0 0.0
  %1572 = vmatpush1.msra.mxu0 0.0
  %1573 = vmatprep.subr.mxu0 0.0
  %1574 = vmatpush1.msra.mxu0 0.0
  %1575 = vmatprep.subr.mxu0 0.0
  %1576 = vmatpush1.msra.mxu0 0.0
  %1577 = vmatprep.subr.mxu0 0.0
  %1578 = vmatpush1.msra.mxu0 0.0
  %1579 = vmatprep.subr.mxu0 0.0
  %1580 = vmatpush1.msra.mxu0 0.0
  %1581 = vmatprep.subr.mxu0 0.0
  %1582 = vmatpush1.msra.mxu0 0.0
  %1583 = vmatprep.subr.mxu0 0.0
  %1584 = vmatpush1.msra.mxu0 0.0
  %1585 = vmatprep.subr.mxu0 0.0
  %1586 = vmatpush1.msra.mxu0 0.0
  %1587 = vmatprep.subr.mxu0 0.0
  %1588 = vmatpush1.msra.mxu0 0.0
  %1589 = vmatprep.subr.mxu0 0.0
  %1590 = vmatpush1.msra.mxu0 0.0
  %1591 = vmatprep.subr.mxu0 0.0
  %1592 = vmatpush1.msra.mxu0 0.0
  %1593 = vmatprep.mubr.f32.mxu0 0.0
  %1594 = vmatmul.mubr.f32.gmra.mrb[0].mxu0 %v1444
  %v1595 = vpop.f32.mrb[0].mxu0
  %v1596 = vadd.f32 0.0, %v1595
  %v1597 = vpop.f32.mrb[0].mxu0
  %v1598 = vadd.f32 0.0, %v1597
  %1599 = vdwg.mxu0
  %v1600 = vadd.f32 %v1399, %v1525
  %v1601 = vadd.f32 %v1400, %v1527
  %v1602 = vadd.f32 %v1401, %v1596
  %v1603 = vadd.f32 %v1402, %v1598
  %1604 = vrot.lane.b32.xlu0 %v26, 111
  %v1605 = vpop.permute.xlu0 %1604
  %1606 = vrot.lane.b32.xlu0 %v36, 111
  %v1607 = vpop.permute.xlu0 %1606
  %1608 = vrot.lane.b32.xlu0 %v27, 111
  %v1609 = vpop.permute.xlu0 %1608
  %1610 = vrot.lane.b32.xlu0 %v37, 111
  %v1611 = vpop.permute.xlu0 %1610
  %vm1612 = vcmp.lt.s32.totalorder %v49, 111
  %v1613 = vsel %vm1612, %v1609, %v1611
  %v1614 = vsel %vm1612, %v1607, %v1609
  %v1615 = vsel %vm1612, %v1605, %v1607
  %v1616 = vsel %vm1612, %v1611, %v1605
  %vm1617 = vmand %vm33, %vm31
  %v1618 = vsel %vm1617, 1, 0
  %v1619 = vlaneseq
  %v1620 = vshrl.u32 %v1619, 7
  %v1621 = vsub.s32 0, %v1620
  %v1622 = vrot.slane %v1618, %v1621
  %v1623 = vlaneseq
  %v1624 = vshrl.u32 %v1623, 7
  %v1625 = vsub.s32 1, %v1624
  %v1626 = vrot.slane %v1618, %v1625
  %v1627 = vlaneseq
  %v1628 = vshrl.u32 %v1627, 7
  %v1629 = vsub.s32 2, %v1628
  %v1630 = vrot.slane %v1618, %v1629
  %v1631 = vlaneseq
  %v1632 = vshrl.u32 %v1631, 7
  %v1633 = vsub.s32 3, %v1632
  %v1634 = vrot.slane %v1618, %v1633
  %vm1635 = vcmp.eq.s32.totalorder %v1622, 1
  %vm1636 = vcmp.eq.s32.totalorder %v1626, 1
  %vm1637 = vcmp.eq.s32.totalorder %v1630, 1
  %vm1638 = vcmp.eq.s32.totalorder %v1634, 1
  %v1639 = vsel %vm1635, %v1615, 0.0
  %v1640 = vsel %vm1636, %v1614, 0.0
  %v1641 = vsel %vm1637, %v1613, 0.0
  %v1642 = vsel %vm1638, %v1616, 0.0
  %s1643 = scalar_lea.vmem %s3, 64
  %v1644 = vld [vmem:[%s1643] sm:$0xff]
  %v1646 = vsel %vm122, %v1644, 0
  %v1649 = vsel %vm126, %v1639, 0
  %v1652 = vsel %vm126, %v1640, 0
  %v1655 = vsel %vm126, %v1641, 0
  %v1658 = vsel %vm126, %v1642, 0
  %1660 = vmatprep.subr.mxu0 %v1652
  %1661 = vmatpush1.msra.mxu0 %v1649
  %1662 = vmatprep.subr.mxu0 0.0
  %1663 = vmatpush1.msra.mxu0 0.0
  %1664 = vmatprep.subr.mxu0 0.0
  %1665 = vmatpush1.msra.mxu0 0.0
  %1666 = vmatprep.subr.mxu0 0.0
  %1667 = vmatpush1.msra.mxu0 0.0
  %1668 = vmatprep.subr.mxu0 0.0
  %1669 = vmatpush1.msra.mxu0 0.0
  %1670 = vmatprep.subr.mxu0 0.0
  %1671 = vmatpush1.msra.mxu0 0.0
  %1672 = vmatprep.subr.mxu0 0.0
  %1673 = vmatpush1.msra.mxu0 0.0
  %1674 = vmatprep.subr.mxu0 0.0
  %1675 = vmatpush1.msra.mxu0 0.0
  %1676 = vmatprep.subr.mxu0 0.0
  %1677 = vmatpush1.msra.mxu0 0.0
  %1678 = vmatprep.subr.mxu0 0.0
  %1679 = vmatpush1.msra.mxu0 0.0
  %1680 = vmatprep.subr.mxu0 0.0
  %1681 = vmatpush1.msra.mxu0 0.0
  %1682 = vmatprep.subr.mxu0 0.0
  %1683 = vmatpush1.msra.mxu0 0.0
  %1684 = vmatprep.subr.mxu0 0.0
  %1685 = vmatpush1.msra.mxu0 0.0
  %1686 = vmatprep.subr.mxu0 0.0
  %1687 = vmatpush1.msra.mxu0 0.0
  %1688 = vmatprep.subr.mxu0 0.0
  %1689 = vmatpush1.msra.mxu0 0.0
  %1690 = vmatprep.subr.mxu0 0.0
  %1691 = vmatpush1.msra.mxu0 0.0
  %1692 = vmatprep.subr.mxu0 0.0
  %1693 = vmatpush1.msra.mxu0 0.0
  %1694 = vmatprep.subr.mxu0 0.0
  %1695 = vmatpush1.msra.mxu0 0.0
  %1696 = vmatprep.subr.mxu0 0.0
  %1697 = vmatpush1.msra.mxu0 0.0
  %1698 = vmatprep.subr.mxu0 0.0
  %1699 = vmatpush1.msra.mxu0 0.0
  %1700 = vmatprep.subr.mxu0 0.0
  %1701 = vmatpush1.msra.mxu0 0.0
  %1702 = vmatprep.subr.mxu0 0.0
  %1703 = vmatpush1.msra.mxu0 0.0
  %1704 = vmatprep.subr.mxu0 0.0
  %1705 = vmatpush1.msra.mxu0 0.0
  %1706 = vmatprep.subr.mxu0 0.0
  %1707 = vmatpush1.msra.mxu0 0.0
  %1708 = vmatprep.subr.mxu0 0.0
  %1709 = vmatpush1.msra.mxu0 0.0
  %1710 = vmatprep.subr.mxu0 0.0
  %1711 = vmatpush1.msra.mxu0 0.0
  %1712 = vmatprep.subr.mxu0 0.0
  %1713 = vmatpush1.msra.mxu0 0.0
  %1714 = vmatprep.subr.mxu0 0.0
  %1715 = vmatpush1.msra.mxu0 0.0
  %1716 = vmatprep.subr.mxu0 0.0
  %1717 = vmatpush1.msra.mxu0 0.0
  %1718 = vmatprep.subr.mxu0 0.0
  %1719 = vmatpush1.msra.mxu0 0.0
  %1720 = vmatprep.subr.mxu0 0.0
  %1721 = vmatpush1.msra.mxu0 0.0
  %1722 = vmatprep.subr.mxu0 0.0
  %1723 = vmatpush1.msra.mxu0 0.0
  %1724 = vmatprep.mubr.f32.mxu0 0.0
  %1725 = vmatmul.mubr.f32.gmra.mrb[0].mxu0 %v1646
  %v1726 = vpop.f32.mrb[0].mxu0
  %v1727 = vadd.f32 0.0, %v1726
  %v1728 = vpop.f32.mrb[0].mxu0
  %v1729 = vadd.f32 0.0, %v1728
  %1730 = vdwg.mxu0
  %1731 = vmatprep.subr.mxu0 %v1658
  %1732 = vmatpush1.msra.mxu0 %v1655
  %1733 = vmatprep.subr.mxu0 0.0
  %1734 = vmatpush1.msra.mxu0 0.0
  %1735 = vmatprep.subr.mxu0 0.0
  %1736 = vmatpush1.msra.mxu0 0.0
  %1737 = vmatprep.subr.mxu0 0.0
  %1738 = vmatpush1.msra.mxu0 0.0
  %1739 = vmatprep.subr.mxu0 0.0
  %1740 = vmatpush1.msra.mxu0 0.0
  %1741 = vmatprep.subr.mxu0 0.0
  %1742 = vmatpush1.msra.mxu0 0.0
  %1743 = vmatprep.subr.mxu0 0.0
  %1744 = vmatpush1.msra.mxu0 0.0
  %1745 = vmatprep.subr.mxu0 0.0
  %1746 = vmatpush1.msra.mxu0 0.0
  %1747 = vmatprep.subr.mxu0 0.0
  %1748 = vmatpush1.msra.mxu0 0.0
  %1749 = vmatprep.subr.mxu0 0.0
  %1750 = vmatpush1.msra.mxu0 0.0
  %1751 = vmatprep.subr.mxu0 0.0
  %1752 = vmatpush1.msra.mxu0 0.0
  %1753 = vmatprep.subr.mxu0 0.0
  %1754 = vmatpush1.msra.mxu0 0.0
  %1755 = vmatprep.subr.mxu0 0.0
  %1756 = vmatpush1.msra.mxu0 0.0
  %1757 = vmatprep.subr.mxu0 0.0
  %1758 = vmatpush1.msra.mxu0 0.0
  %1759 = vmatprep.subr.mxu0 0.0
  %1760 = vmatpush1.msra.mxu0 0.0
  %1761 = vmatprep.subr.mxu0 0.0
  %1762 = vmatpush1.msra.mxu0 0.0
  %1763 = vmatprep.subr.mxu0 0.0
  %1764 = vmatpush1.msra.mxu0 0.0
  %1765 = vmatprep.subr.mxu0 0.0
  %1766 = vmatpush1.msra.mxu0 0.0
  %1767 = vmatprep.subr.mxu0 0.0
  %1768 = vmatpush1.msra.mxu0 0.0
  %1769 = vmatprep.subr.mxu0 0.0
  %1770 = vmatpush1.msra.mxu0 0.0
  %1771 = vmatprep.subr.mxu0 0.0
  %1772 = vmatpush1.msra.mxu0 0.0
  %1773 = vmatprep.subr.mxu0 0.0
  %1774 = vmatpush1.msra.mxu0 0.0
  %1775 = vmatprep.subr.mxu0 0.0
  %1776 = vmatpush1.msra.mxu0 0.0
  %1777 = vmatprep.subr.mxu0 0.0
  %1778 = vmatpush1.msra.mxu0 0.0
  %1779 = vmatprep.subr.mxu0 0.0
  %1780 = vmatpush1.msra.mxu0 0.0
  %1781 = vmatprep.subr.mxu0 0.0
  %1782 = vmatpush1.msra.mxu0 0.0
  %1783 = vmatprep.subr.mxu0 0.0
  %1784 = vmatpush1.msra.mxu0 0.0
  %1785 = vmatprep.subr.mxu0 0.0
  %1786 = vmatpush1.msra.mxu0 0.0
  %1787 = vmatprep.subr.mxu0 0.0
  %1788 = vmatpush1.msra.mxu0 0.0
  %1789 = vmatprep.subr.mxu0 0.0
  %1790 = vmatpush1.msra.mxu0 0.0
  %1791 = vmatprep.subr.mxu0 0.0
  %1792 = vmatpush1.msra.mxu0 0.0
  %1793 = vmatprep.subr.mxu0 0.0
  %1794 = vmatpush1.msra.mxu0 0.0
  %1795 = vmatprep.mubr.f32.mxu0 0.0
  %1796 = vmatmul.mubr.f32.gmra.mrb[0].mxu0 %v1646
  %v1797 = vpop.f32.mrb[0].mxu0
  %v1798 = vadd.f32 0.0, %v1797
  %v1799 = vpop.f32.mrb[0].mxu0
  %v1800 = vadd.f32 0.0, %v1799
  %1801 = vdwg.mxu0
  %v1802 = vadd.f32 %v1600, %v1727
  %v1803 = vadd.f32 %v1601, %v1729
  %v1804 = vadd.f32 %v1602, %v1798
  %v1805 = vadd.f32 %v1603, %v1800
  %v1806 = vld [vmem:[%s4] sm:$0xff]
  %1808 = vset.pattern.permute.xlu0 0
  %1809 = vperm.xlu0 %1808, %v1806
  %v1810 = vpop.permute.xlu0 %1809
  %v1812 = vadd.f32 %v1802, %v1810
  %v1813 = vadd.f32 %v1803, %v1810
  %v1814 = vadd.f32 %v1804, %v1810
  %v1815 = vadd.f32 %v1805, %v1810
  %v1816 = vmax.f32 %v1812, 0.0
  %v1817 = vmax.f32 %v1813, 0.0
  %v1818 = vmax.f32 %v1814, 0.0
  %v1819 = vmax.f32 %v1815, 0.0
  %1820 = vrot.lane.b32.xlu0 %v1816, 127
  %v1821 = vpop.permute.xlu0 %1820
  %1822 = vrot.lane.b32.xlu0 %v1817, 127
  %v1823 = vpop.permute.xlu0 %1822
  %1824 = vrot.lane.b32.xlu0 %v1818, 127
  %v1825 = vpop.permute.xlu0 %1824
  %1826 = vrot.lane.b32.xlu0 %v1819, 127
  %v1827 = vpop.permute.xlu0 %1826
  %v1828 = vsel %vm1008, %v1825, %v1827
  %v1829 = vsel %vm1008, %v1823, %v1825
  %v1830 = vsel %vm1008, %v1821, %v1823
  %v1831 = vsel %vm1008, %v1827, %v1821
  %v1832 = vsel %vm1030, %v1830, 0.0
  %v1833 = vsel %vm1031, %v1829, 0.0
  %v1834 = vsel %vm1032, %v1828, 0.0
  %v1835 = vsel %vm1033, %v1831, 0.0
  %1836 = vrot.lane.b32.xlu0 %v1816, 112
  %v1837 = vpop.permute.xlu0 %1836
  %1838 = vrot.lane.b32.xlu0 %v1817, 112
  %v1839 = vpop.permute.xlu0 %1838
  %1840 = vrot.lane.b32.xlu0 %v1818, 112
  %v1841 = vpop.permute.xlu0 %1840
  %1842 = vrot.lane.b32.xlu0 %v1819, 112
  %v1843 = vpop.permute.xlu0 %1842
  %v1844 = vsel %vm1411, %v1841, %v1843
  %v1845 = vsel %vm1411, %v1839, %v1841
  %v1846 = vsel %vm1411, %v1837, %v1839
  %v1847 = vsel %vm1411, %v1843, %v1837
  %v1848 = vsel %vm1433, %v1846, 0.0
  %v1849 = vsel %vm1434, %v1845, 0.0
  %v1850 = vsel %vm1435, %v1844, 0.0
  %v1851 = vsel %vm1436, %v1847, 0.0
  %1852 = vrot.lane.b32.xlu0 %v1816, 111
  %v1853 = vpop.permute.xlu0 %1852
  %1854 = vrot.lane.b32.xlu0 %v1817, 111
  %v1855 = vpop.permute.xlu0 %1854
  %1856 = vrot.lane.b32.xlu0 %v1818, 111
  %v1857 = vpop.permute.xlu0 %1856
  %1858 = vrot.lane.b32.xlu0 %v1819, 111
  %v1859 = vpop.permute.xlu0 %1858
  %v1860 = vsel %vm1612, %v1857, %v1859
  %v1861 = vsel %vm1612, %v1855, %v1857
  %v1862 = vsel %vm1612, %v1853, %v1855
  %v1863 = vsel %vm1612, %v1859, %v1853
  %v1864 = vsel %vm1635, %v1862, 0.0
  %v1865 = vsel %vm1636, %v1861, 0.0
  %v1866 = vsel %vm1637, %v1860, 0.0
  %v1867 = vsel %vm1638, %v1863, 0.0
  %s1868 = scalar_lea.vmem %s5, 32
  %v1869 = vld [vmem:[%s1868] sm:$0x3f]
  %s1870 = scalar_lea.vmem %s5, 40
  %v1871 = vld [vmem:[%s1870] sm:$0x3f]
  %s1872 = scalar_lea.vmem %s5, 24
  %v1873 = vld [vmem:[%s1872] sm:$0x3f]
  %vm1874 = vcmask 64512
  %v1876 = vsel %vm1874, %v1873, 0
  %1878 = vmatprep.subr.mxu0 %v1833
  %1879 = vmatpush1.msra.mxu0 %v1832
  %1880 = vmatprep.subr.mxu0 0.0
  %1881 = vmatpush1.msra.mxu0 0.0
  %1882 = vmatprep.subr.mxu0 0.0
  %1883 = vmatpush1.msra.mxu0 0.0
  %1884 = vmatprep.subr.mxu0 0.0
  %1885 = vmatpush1.msra.mxu0 0.0
  %1886 = vmatprep.subr.mxu0 0.0
  %1887 = vmatpush1.msra.mxu0 0.0
  %1888 = vmatprep.subr.mxu0 0.0
  %1889 = vmatpush1.msra.mxu0 0.0
  %1890 = vmatprep.subr.mxu0 0.0
  %1891 = vmatpush1.msra.mxu0 0.0
  %1892 = vmatprep.subr.mxu0 0.0
  %1893 = vmatpush1.msra.mxu0 0.0
  %1894 = vmatprep.subr.mxu0 0.0
  %1895 = vmatpush1.msra.mxu0 0.0
  %1896 = vmatprep.subr.mxu0 0.0
  %1897 = vmatpush1.msra.mxu0 0.0
  %1898 = vmatprep.subr.mxu0 0.0
  %1899 = vmatpush1.msra.mxu0 0.0
  %1900 = vmatprep.subr.mxu0 0.0
  %1901 = vmatpush1.msra.mxu0 0.0
  %1902 = vmatprep.subr.mxu0 0.0
  %1903 = vmatpush1.msra.mxu0 0.0
  %1904 = vmatprep.subr.mxu0 0.0
  %1905 = vmatpush1.msra.mxu0 0.0
  %1906 = vmatprep.subr.mxu0 0.0
  %1907 = vmatpush1.msra.mxu0 0.0
  %1908 = vmatprep.subr.mxu0 0.0
  %1909 = vmatpush1.msra.mxu0 0.0
  %1910 = vmatprep.subr.mxu0 0.0
  %1911 = vmatpush1.msra.mxu0 0.0
  %1912 = vmatprep.subr.mxu0 0.0
  %1913 = vmatpush1.msra.mxu0 0.0
  %1914 = vmatprep.subr.mxu0 0.0
  %1915 = vmatpush1.msra.mxu0 0.0
  %1916 = vmatprep.subr.mxu0 0.0
  %1917 = vmatpush1.msra.mxu0 0.0
  %1918 = vmatprep.subr.mxu0 0.0
  %1919 = vmatpush1.msra.mxu0 0.0
  %1920 = vmatprep.subr.mxu0 0.0
  %1921 = vmatpush1.msra.mxu0 0.0
  %1922 = vmatprep.subr.mxu0 0.0
  %1923 = vmatpush1.msra.mxu0 0.0
  %1924 = vmatprep.subr.mxu0 0.0
  %1925 = vmatpush1.msra.mxu0 0.0
  %1926 = vmatprep.subr.mxu0 0.0
  %1927 = vmatpush1.msra.mxu0 0.0
  %1928 = vmatprep.subr.mxu0 0.0
  %1929 = vmatpush1.msra.mxu0 0.0
  %1930 = vmatprep.subr.mxu0 0.0
  %1931 = vmatpush1.msra.mxu0 0.0
  %1932 = vmatprep.subr.mxu0 0.0
  %1933 = vmatpush1.msra.mxu0 0.0
  %1934 = vmatprep.subr.mxu0 0.0
  %1935 = vmatpush1.msra.mxu0 0.0
  %1936 = vmatprep.subr.mxu0 0.0
  %1937 = vmatpush1.msra.mxu0 0.0
  %1938 = vmatprep.subr.mxu0 0.0
  %1939 = vmatpush1.msra.mxu0 0.0
  %1940 = vmatprep.subr.mxu0 0.0
  %1941 = vmatpush1.msra.mxu0 0.0
  %1942 = vmatprep.mubr.f32.mxu0 0.0
  %1943 = vmatmul.mubr.f32.gmra.mrb[0].mxu0 %v1876
  %v1944 = vpop.f32.mrb[0].mxu0
  %v1945 = vadd.f32 0.0, %v1944
  %v1946 = vpop.f32.mrb[0].mxu0
  %v1947 = vadd.f32 0.0, %v1946
  %1948 = vdwg.mxu0
  %1949 = vmatprep.subr.mxu0 %v1835
  %1950 = vmatpush1.msra.mxu0 %v1834
  %1951 = vmatprep.subr.mxu0 0.0
  %1952 = vmatpush1.msra.mxu0 0.0
  %1953 = vmatprep.subr.mxu0 0.0
  %1954 = vmatpush1.msra.mxu0 0.0
  %1955 = vmatprep.subr.mxu0 0.0
  %1956 = vmatpush1.msra.mxu0 0.0
  %1957 = vmatprep.subr.mxu0 0.0
  %1958 = vmatpush1.msra.mxu0 0.0
  %1959 = vmatprep.subr.mxu0 0.0
  %1960 = vmatpush1.msra.mxu0 0.0
  %1961 = vmatprep.subr.mxu0 0.0
  %1962 = vmatpush1.msra.mxu0 0.0
  %1963 = vmatprep.subr.mxu0 0.0
  %1964 = vmatpush1.msra.mxu0 0.0
  %1965 = vmatprep.subr.mxu0 0.0
  %1966 = vmatpush1.msra.mxu0 0.0
  %1967 = vmatprep.subr.mxu0 0.0
  %1968 = vmatpush1.msra.mxu0 0.0
  %1969 = vmatprep.subr.mxu0 0.0
  %1970 = vmatpush1.msra.mxu0 0.0
  %1971 = vmatprep.subr.mxu0 0.0
  %1972 = vmatpush1.msra.mxu0 0.0
  %1973 = vmatprep.subr.mxu0 0.0
  %1974 = vmatpush1.msra.mxu0 0.0
  %1975 = vmatprep.subr.mxu0 0.0
  %1976 = vmatpush1.msra.mxu0 0.0
  %1977 = vmatprep.subr.mxu0 0.0
  %1978 = vmatpush1.msra.mxu0 0.0
  %1979 = vmatprep.subr.mxu0 0.0
  %1980 = vmatpush1.msra.mxu0 0.0
  %1981 = vmatprep.subr.mxu0 0.0
  %1982 = vmatpush1.msra.mxu0 0.0
  %1983 = vmatprep.subr.mxu0 0.0
  %1984 = vmatpush1.msra.mxu0 0.0
  %1985 = vmatprep.subr.mxu0 0.0
  %1986 = vmatpush1.msra.mxu0 0.0
  %1987 = vmatprep.subr.mxu0 0.0
  %1988 = vmatpush1.msra.mxu0 0.0
  %1989 = vmatprep.subr.mxu0 0.0
  %1990 = vmatpush1.msra.mxu0 0.0
  %1991 = vmatprep.subr.mxu0 0.0
  %1992 = vmatpush1.msra.mxu0 0.0
  %1993 = vmatprep.subr.mxu0 0.0
  %1994 = vmatpush1.msra.mxu0 0.0
  %1995 = vmatprep.subr.mxu0 0.0
  %1996 = vmatpush1.msra.mxu0 0.0
  %1997 = vmatprep.subr.mxu0 0.0
  %1998 = vmatpush1.msra.mxu0 0.0
  %1999 = vmatprep.subr.mxu0 0.0
  %2000 = vmatpush1.msra.mxu0 0.0
  %2001 = vmatprep.subr.mxu0 0.0
  %2002 = vmatpush1.msra.mxu0 0.0
  %2003 = vmatprep.subr.mxu0 0.0
  %2004 = vmatpush1.msra.mxu0 0.0
  %2005 = vmatprep.subr.mxu0 0.0
  %2006 = vmatpush1.msra.mxu0 0.0
  %2007 = vmatprep.subr.mxu0 0.0
  %2008 = vmatpush1.msra.mxu0 0.0
  %2009 = vmatprep.subr.mxu0 0.0
  %2010 = vmatpush1.msra.mxu0 0.0
  %2011 = vmatprep.subr.mxu0 0.0
  %2012 = vmatpush1.msra.mxu0 0.0
  %2013 = vmatprep.mubr.f32.mxu0 0.0
  %2014 = vmatmul.mubr.f32.gmra.mrb[0].mxu0 %v1876
  %v2015 = vpop.f32.mrb[0].mxu0
  %v2016 = vadd.f32 0.0, %v2015
  %v2017 = vpop.f32.mrb[0].mxu0
  %v2018 = vadd.f32 0.0, %v2017
  %2019 = vdwg.mxu0
  %v2021 = vsel %vm1874, %v1871, 0
  %2023 = vmatprep.subr.mxu0 %v1817
  %2024 = vmatpush1.msra.mxu0 %v1816
  %2025 = vmatprep.subr.mxu0 0.0
  %2026 = vmatpush1.msra.mxu0 0.0
  %2027 = vmatprep.subr.mxu0 0.0
  %2028 = vmatpush1.msra.mxu0 0.0
  %2029 = vmatprep.subr.mxu0 0.0
  %2030 = vmatpush1.msra.mxu0 0.0
  %2031 = vmatprep.subr.mxu0 0.0
  %2032 = vmatpush1.msra.mxu0 0.0
  %2033 = vmatprep.subr.mxu0 0.0
  %2034 = vmatpush1.msra.mxu0 0.0
  %2035 = vmatprep.subr.mxu0 0.0
  %2036 = vmatpush1.msra.mxu0 0.0
  %2037 = vmatprep.subr.mxu0 0.0
  %2038 = vmatpush1.msra.mxu0 0.0
  %2039 = vmatprep.subr.mxu0 0.0
  %2040 = vmatpush1.msra.mxu0 0.0
  %2041 = vmatprep.subr.mxu0 0.0
  %2042 = vmatpush1.msra.mxu0 0.0
  %2043 = vmatprep.subr.mxu0 0.0
  %2044 = vmatpush1.msra.mxu0 0.0
  %2045 = vmatprep.subr.mxu0 0.0
  %2046 = vmatpush1.msra.mxu0 0.0
  %2047 = vmatprep.subr.mxu0 0.0
  %2048 = vmatpush1.msra.mxu0 0.0
  %2049 = vmatprep.subr.mxu0 0.0
  %2050 = vmatpush1.msra.mxu0 0.0
  %2051 = vmatprep.subr.mxu0 0.0
  %2052 = vmatpush1.msra.mxu0 0.0
  %2053 = vmatprep.subr.mxu0 0.0
  %2054 = vmatpush1.msra.mxu0 0.0
  %2055 = vmatprep.subr.mxu0 0.0
  %2056 = vmatpush1.msra.mxu0 0.0
  %2057 = vmatprep.subr.mxu0 0.0
  %2058 = vmatpush1.msra.mxu0 0.0
  %2059 = vmatprep.subr.mxu0 0.0
  %2060 = vmatpush1.msra.mxu0 0.0
  %2061 = vmatprep.subr.mxu0 0.0
  %2062 = vmatpush1.msra.mxu0 0.0
  %2063 = vmatprep.subr.mxu0 0.0
  %2064 = vmatpush1.msra.mxu0 0.0
  %2065 = vmatprep.subr.mxu0 0.0
  %2066 = vmatpush1.msra.mxu0 0.0
  %2067 = vmatprep.subr.mxu0 0.0
  %2068 = vmatpush1.msra.mxu0 0.0
  %2069 = vmatprep.subr.mxu0 0.0
  %2070 = vmatpush1.msra.mxu0 0.0
  %2071 = vmatprep.subr.mxu0 0.0
  %2072 = vmatpush1.msra.mxu0 0.0
  %2073 = vmatprep.subr.mxu0 0.0
  %2074 = vmatpush1.msra.mxu0 0.0
  %2075 = vmatprep.subr.mxu0 0.0
  %2076 = vmatpush1.msra.mxu0 0.0
  %2077 = vmatprep.subr.mxu0 0.0
  %2078 = vmatpush1.msra.mxu0 0.0
  %2079 = vmatprep.subr.mxu0 0.0
  %2080 = vmatpush1.msra.mxu0 0.0
  %2081 = vmatprep.subr.mxu0 0.0
  %2082 = vmatpush1.msra.mxu0 0.0
  %2083 = vmatprep.subr.mxu0 0.0
  %2084 = vmatpush1.msra.mxu0 0.0
  %2085 = vmatprep.subr.mxu0 0.0
  %2086 = vmatpush1.msra.mxu0 0.0
  %2087 = vmatprep.mubr.f32.mxu0 0.0
  %2088 = vmatmul.mubr.f32.gmra.mrb[0].mxu0 %v2021
  %v2089 = vpop.f32.mrb[0].mxu0
  %v2090 = vadd.f32 %v1945, %v2089
  %v2091 = vpop.f32.mrb[0].mxu0
  %v2092 = vadd.f32 %v1947, %v2091
  %2093 = vdwg.mxu0
  %2094 = vmatprep.subr.mxu0 %v1819
  %2095 = vmatpush1.msra.mxu0 %v1818
  %2096 = vmatprep.subr.mxu0 0.0
  %2097 = vmatpush1.msra.mxu0 0.0
  %2098 = vmatprep.subr.mxu0 0.0
  %2099 = vmatpush1.msra.mxu0 0.0
  %2100 = vmatprep.subr.mxu0 0.0
  %2101 = vmatpush1.msra.mxu0 0.0
  %2102 = vmatprep.subr.mxu0 0.0
  %2103 = vmatpush1.msra.mxu0 0.0
  %2104 = vmatprep.subr.mxu0 0.0
  %2105 = vmatpush1.msra.mxu0 0.0
  %2106 = vmatprep.subr.mxu0 0.0
  %2107 = vmatpush1.msra.mxu0 0.0
  %2108 = vmatprep.subr.mxu0 0.0
  %2109 = vmatpush1.msra.mxu0 0.0
  %2110 = vmatprep.subr.mxu0 0.0
  %2111 = vmatpush1.msra.mxu0 0.0
  %2112 = vmatprep.subr.mxu0 0.0
  %2113 = vmatpush1.msra.mxu0 0.0
  %2114 = vmatprep.subr.mxu0 0.0
  %2115 = vmatpush1.msra.mxu0 0.0
  %2116 = vmatprep.subr.mxu0 0.0
  %2117 = vmatpush1.msra.mxu0 0.0
  %2118 = vmatprep.subr.mxu0 0.0
  %2119 = vmatpush1.msra.mxu0 0.0
  %2120 = vmatprep.subr.mxu0 0.0
  %2121 = vmatpush1.msra.mxu0 0.0
  %2122 = vmatprep.subr.mxu0 0.0
  %2123 = vmatpush1.msra.mxu0 0.0
  %2124 = vmatprep.subr.mxu0 0.0
  %2125 = vmatpush1.msra.mxu0 0.0
  %2126 = vmatprep.subr.mxu0 0.0
  %2127 = vmatpush1.msra.mxu0 0.0
  %2128 = vmatprep.subr.mxu0 0.0
  %2129 = vmatpush1.msra.mxu0 0.0
  %2130 = vmatprep.subr.mxu0 0.0
  %2131 = vmatpush1.msra.mxu0 0.0
  %2132 = vmatprep.subr.mxu0 0.0
  %2133 = vmatpush1.msra.mxu0 0.0
  %2134 = vmatprep.subr.mxu0 0.0
  %2135 = vmatpush1.msra.mxu0 0.0
  %2136 = vmatprep.subr.mxu0 0.0
  %2137 = vmatpush1.msra.mxu0 0.0
  %2138 = vmatprep.subr.mxu0 0.0
  %2139 = vmatpush1.msra.mxu0 0.0
  %2140 = vmatprep.subr.mxu0 0.0
  %2141 = vmatpush1.msra.mxu0 0.0
  %2142 = vmatprep.subr.mxu0 0.0
  %2143 = vmatpush1.msra.mxu0 0.0
  %2144 = vmatprep.subr.mxu0 0.0
  %2145 = vmatpush1.msra.mxu0 0.0
  %2146 = vmatprep.subr.mxu0 0.0
  %2147 = vmatpush1.msra.mxu0 0.0
  %2148 = vmatprep.subr.mxu0 0.0
  %2149 = vmatpush1.msra.mxu0 0.0
  %2150 = vmatprep.subr.mxu0 0.0
  %2151 = vmatpush1.msra.mxu0 0.0
  %2152 = vmatprep.subr.mxu0 0.0
  %2153 = vmatpush1.msra.mxu0 0.0
  %2154 = vmatprep.subr.mxu0 0.0
  %2155 = vmatpush1.msra.mxu0 0.0
  %2156 = vmatprep.subr.mxu0 0.0
  %2157 = vmatpush1.msra.mxu0 0.0
  %2158 = vmatprep.mubr.f32.mxu0 0.0
  %2159 = vmatmul.mubr.f32.gmra.mrb[0].mxu0 %v2021
  %v2160 = vpop.f32.mrb[0].mxu0
  %v2161 = vadd.f32 %v2016, %v2160
  %v2162 = vpop.f32.mrb[0].mxu0
  %v2163 = vadd.f32 %v2018, %v2162
  %2164 = vdwg.mxu0
  %s2165 = scalar_lea.vmem %s5, 56
  %v2166 = vld [vmem:[%s2165] sm:$0x3f]
  %s2167 = scalar_lea.vmem %s5, 8
  %v2168 = vld [vmem:[%s2167] sm:$0x3f]
  %v2170 = vsel %vm1874, %v2168, 0
  %2172 = vmatprep.subr.mxu0 %v1849
  %2173 = vmatpush1.msra.mxu0 %v1848
  %2174 = vmatprep.subr.mxu0 0.0
  %2175 = vmatpush1.msra.mxu0 0.0
  %2176 = vmatprep.subr.mxu0 0.0
  %2177 = vmatpush1.msra.mxu0 0.0
  %2178 = vmatprep.subr.mxu0 0.0
  %2179 = vmatpush1.msra.mxu0 0.0
  %2180 = vmatprep.subr.mxu0 0.0
  %2181 = vmatpush1.msra.mxu0 0.0
  %2182 = vmatprep.subr.mxu0 0.0
  %2183 = vmatpush1.msra.mxu0 0.0
  %2184 = vmatprep.subr.mxu0 0.0
  %2185 = vmatpush1.msra.mxu0 0.0
  %2186 = vmatprep.subr.mxu0 0.0
  %2187 = vmatpush1.msra.mxu0 0.0
  %2188 = vmatprep.subr.mxu0 0.0
  %2189 = vmatpush1.msra.mxu0 0.0
  %2190 = vmatprep.subr.mxu0 0.0
  %2191 = vmatpush1.msra.mxu0 0.0
  %2192 = vmatprep.subr.mxu0 0.0
  %2193 = vmatpush1.msra.mxu0 0.0
  %2194 = vmatprep.subr.mxu0 0.0
  %2195 = vmatpush1.msra.mxu0 0.0
  %2196 = vmatprep.subr.mxu0 0.0
  %2197 = vmatpush1.msra.mxu0 0.0
  %2198 = vmatprep.subr.mxu0 0.0
  %2199 = vmatpush1.msra.mxu0 0.0
  %2200 = vmatprep.subr.mxu0 0.0
  %2201 = vmatpush1.msra.mxu0 0.0
  %2202 = vmatprep.subr.mxu0 0.0
  %2203 = vmatpush1.msra.mxu0 0.0
  %2204 = vmatprep.subr.mxu0 0.0
  %2205 = vmatpush1.msra.mxu0 0.0
  %2206 = vmatprep.subr.mxu0 0.0
  %2207 = vmatpush1.msra.mxu0 0.0
  %2208 = vmatprep.subr.mxu0 0.0
  %2209 = vmatpush1.msra.mxu0 0.0
  %2210 = vmatprep.subr.mxu0 0.0
  %2211 = vmatpush1.msra.mxu0 0.0
  %2212 = vmatprep.subr.mxu0 0.0
  %2213 = vmatpush1.msra.mxu0 0.0
  %2214 = vmatprep.subr.mxu0 0.0
  %2215 = vmatpush1.msra.mxu0 0.0
  %2216 = vmatprep.subr.mxu0 0.0
  %2217 = vmatpush1.msra.mxu0 0.0
  %2218 = vmatprep.subr.mxu0 0.0
  %2219 = vmatpush1.msra.mxu0 0.0
  %2220 = vmatprep.subr.mxu0 0.0
  %2221 = vmatpush1.msra.mxu0 0.0
  %2222 = vmatprep.subr.mxu0 0.0
  %2223 = vmatpush1.msra.mxu0 0.0
  %2224 = vmatprep.subr.mxu0 0.0
  %2225 = vmatpush1.msra.mxu0 0.0
  %2226 = vmatprep.subr.mxu0 0.0
  %2227 = vmatpush1.msra.mxu0 0.0
  %2228 = vmatprep.subr.mxu0 0.0
  %2229 = vmatpush1.msra.mxu0 0.0
  %2230 = vmatprep.subr.mxu0 0.0
  %2231 = vmatpush1.msra.mxu0 0.0
  %2232 = vmatprep.subr.mxu0 0.0
  %2233 = vmatpush1.msra.mxu0 0.0
  %2234 = vmatprep.subr.mxu0 0.0
  %2235 = vmatpush1.msra.mxu0 0.0
  %2236 = vmatprep.mubr.f32.mxu0 0.0
  %2237 = vmatmul.mubr.f32.gmra.mrb[0].mxu0 %v2170
  %v2238 = vpop.f32.mrb[0].mxu0
  %v2239 = vadd.f32 0.0, %v2238
  %v2240 = vpop.f32.mrb[0].mxu0
  %v2241 = vadd.f32 0.0, %v2240
  %2242 = vdwg.mxu0
  %2243 = vmatprep.subr.mxu0 %v1851
  %2244 = vmatpush1.msra.mxu0 %v1850
  %2245 = vmatprep.subr.mxu0 0.0
  %2246 = vmatpush1.msra.mxu0 0.0
  %2247 = vmatprep.subr.mxu0 0.0
  %2248 = vmatpush1.msra.mxu0 0.0
  %2249 = vmatprep.subr.mxu0 0.0
  %2250 = vmatpush1.msra.mxu0 0.0
  %2251 = vmatprep.subr.mxu0 0.0
  %2252 = vmatpush1.msra.mxu0 0.0
  %2253 = vmatprep.subr.mxu0 0.0
  %2254 = vmatpush1.msra.mxu0 0.0
  %2255 = vmatprep.subr.mxu0 0.0
  %2256 = vmatpush1.msra.mxu0 0.0
  %2257 = vmatprep.subr.mxu0 0.0
  %2258 = vmatpush1.msra.mxu0 0.0
  %2259 = vmatprep.subr.mxu0 0.0
  %2260 = vmatpush1.msra.mxu0 0.0
  %2261 = vmatprep.subr.mxu0 0.0
  %2262 = vmatpush1.msra.mxu0 0.0
  %2263 = vmatprep.subr.mxu0 0.0
  %2264 = vmatpush1.msra.mxu0 0.0
  %2265 = vmatprep.subr.mxu0 0.0
  %2266 = vmatpush1.msra.mxu0 0.0
  %2267 = vmatprep.subr.mxu0 0.0
  %2268 = vmatpush1.msra.mxu0 0.0
  %2269 = vmatprep.subr.mxu0 0.0
  %2270 = vmatpush1.msra.mxu0 0.0
  %2271 = vmatprep.subr.mxu0 0.0
  %2272 = vmatpush1.msra.mxu0 0.0
  %2273 = vmatprep.subr.mxu0 0.0
  %2274 = vmatpush1.msra.mxu0 0.0
  %2275 = vmatprep.subr.mxu0 0.0
  %2276 = vmatpush1.msra.mxu0 0.0
  %2277 = vmatprep.subr.mxu0 0.0
  %2278 = vmatpush1.msra.mxu0 0.0
  %2279 = vmatprep.subr.mxu0 0.0
  %2280 = vmatpush1.msra.mxu0 0.0
  %2281 = vmatprep.subr.mxu0 0.0
  %2282 = vmatpush1.msra.mxu0 0.0
  %2283 = vmatprep.subr.mxu0 0.0
  %2284 = vmatpush1.msra.mxu0 0.0
  %2285 = vmatprep.subr.mxu0 0.0
  %2286 = vmatpush1.msra.mxu0 0.0
  %2287 = vmatprep.subr.mxu0 0.0
  %2288 = vmatpush1.msra.mxu0 0.0
  %2289 = vmatprep.subr.mxu0 0.0
  %2290 = vmatpush1.msra.mxu0 0.0
  %2291 = vmatprep.subr.mxu0 0.0
  %2292 = vmatpush1.msra.mxu0 0.0
  %2293 = vmatprep.subr.mxu0 0.0
  %2294 = vmatpush1.msra.mxu0 0.0
  %2295 = vmatprep.subr.mxu0 0.0
  %2296 = vmatpush1.msra.mxu0 0.0
  %2297 = vmatprep.subr.mxu0 0.0
  %2298 = vmatpush1.msra.mxu0 0.0
  %2299 = vmatprep.subr.mxu0 0.0
  %2300 = vmatpush1.msra.mxu0 0.0
  %2301 = vmatprep.subr.mxu0 0.0
  %2302 = vmatpush1.msra.mxu0 0.0
  %2303 = vmatprep.subr.mxu0 0.0
  %2304 = vmatpush1.msra.mxu0 0.0
  %2305 = vmatprep.subr.mxu0 0.0
  %2306 = vmatpush1.msra.mxu0 0.0
  %2307 = vmatprep.mubr.f32.mxu0 0.0
  %2308 = vmatmul.mubr.f32.gmra.mrb[0].mxu0 %v2170
  %v2309 = vpop.f32.mrb[0].mxu0
  %v2310 = vadd.f32 0.0, %v2309
  %v2311 = vpop.f32.mrb[0].mxu0
  %v2312 = vadd.f32 0.0, %v2311
  %2313 = vdwg.mxu0
  %v2315 = vsel %vm1874, %v2166, 0
  %2317 = vmatprep.subr.mxu0 %v1817
  %2318 = vmatpush1.msra.mxu0 %v1816
  %2319 = vmatprep.subr.mxu0 0.0
  %2320 = vmatpush1.msra.mxu0 0.0
  %2321 = vmatprep.subr.mxu0 0.0
  %2322 = vmatpush1.msra.mxu0 0.0
  %2323 = vmatprep.subr.mxu0 0.0
  %2324 = vmatpush1.msra.mxu0 0.0
  %2325 = vmatprep.subr.mxu0 0.0
  %2326 = vmatpush1.msra.mxu0 0.0
  %2327 = vmatprep.subr.mxu0 0.0
  %2328 = vmatpush1.msra.mxu0 0.0
  %2329 = vmatprep.subr.mxu0 0.0
  %2330 = vmatpush1.msra.mxu0 0.0
  %2331 = vmatprep.subr.mxu0 0.0
  %2332 = vmatpush1.msra.mxu0 0.0
  %2333 = vmatprep.subr.mxu0 0.0
  %2334 = vmatpush1.msra.mxu0 0.0
  %2335 = vmatprep.subr.mxu0 0.0
  %2336 = vmatpush1.msra.mxu0 0.0
  %2337 = vmatprep.subr.mxu0 0.0
  %2338 = vmatpush1.msra.mxu0 0.0
  %2339 = vmatprep.subr.mxu0 0.0
  %2340 = vmatpush1.msra.mxu0 0.0
  %2341 = vmatprep.subr.mxu0 0.0
  %2342 = vmatpush1.msra.mxu0 0.0
  %2343 = vmatprep.subr.mxu0 0.0
  %2344 = vmatpush1.msra.mxu0 0.0
  %2345 = vmatprep.subr.mxu0 0.0
  %2346 = vmatpush1.msra.mxu0 0.0
  %2347 = vmatprep.subr.mxu0 0.0
  %2348 = vmatpush1.msra.mxu0 0.0
  %2349 = vmatprep.subr.mxu0 0.0
  %2350 = vmatpush1.msra.mxu0 0.0
  %2351 = vmatprep.subr.mxu0 0.0
  %2352 = vmatpush1.msra.mxu0 0.0
  %2353 = vmatprep.subr.mxu0 0.0
  %2354 = vmatpush1.msra.mxu0 0.0
  %2355 = vmatprep.subr.mxu0 0.0
  %2356 = vmatpush1.msra.mxu0 0.0
  %2357 = vmatprep.subr.mxu0 0.0
  %2358 = vmatpush1.msra.mxu0 0.0
  %2359 = vmatprep.subr.mxu0 0.0
  %2360 = vmatpush1.msra.mxu0 0.0
  %2361 = vmatprep.subr.mxu0 0.0
  %2362 = vmatpush1.msra.mxu0 0.0
  %2363 = vmatprep.subr.mxu0 0.0
  %2364 = vmatpush1.msra.mxu0 0.0
  %2365 = vmatprep.subr.mxu0 0.0
  %2366 = vmatpush1.msra.mxu0 0.0
  %2367 = vmatprep.subr.mxu0 0.0
  %2368 = vmatpush1.msra.mxu0 0.0
  %2369 = vmatprep.subr.mxu0 0.0
  %2370 = vmatpush1.msra.mxu0 0.0
  %2371 = vmatprep.subr.mxu0 0.0
  %2372 = vmatpush1.msra.mxu0 0.0
  %2373 = vmatprep.subr.mxu0 0.0
  %2374 = vmatpush1.msra.mxu0 0.0
  %2375 = vmatprep.subr.mxu0 0.0
  %2376 = vmatpush1.msra.mxu0 0.0
  %2377 = vmatprep.subr.mxu0 0.0
  %2378 = vmatpush1.msra.mxu0 0.0
  %2379 = vmatprep.subr.mxu0 0.0
  %2380 = vmatpush1.msra.mxu0 0.0
  %2381 = vmatprep.mubr.f32.mxu0 0.0
  %2382 = vmatmul.mubr.f32.gmra.mrb[0].mxu0 %v2315
  %v2383 = vpop.f32.mrb[0].mxu0
  %v2384 = vadd.f32 %v2239, %v2383
  %v2385 = vpop.f32.mrb[0].mxu0
  %v2386 = vadd.f32 %v2241, %v2385
  %2387 = vdwg.mxu0
  %2388 = vmatprep.subr.mxu0 %v1819
  %2389 = vmatpush1.msra.mxu0 %v1818
  %2390 = vmatprep.subr.mxu0 0.0
  %2391 = vmatpush1.msra.mxu0 0.0
  %2392 = vmatprep.subr.mxu0 0.0
  %2393 = vmatpush1.msra.mxu0 0.0
  %2394 = vmatprep.subr.mxu0 0.0
  %2395 = vmatpush1.msra.mxu0 0.0
  %2396 = vmatprep.subr.mxu0 0.0
  %2397 = vmatpush1.msra.mxu0 0.0
  %2398 = vmatprep.subr.mxu0 0.0
  %2399 = vmatpush1.msra.mxu0 0.0
  %2400 = vmatprep.subr.mxu0 0.0
  %2401 = vmatpush1.msra.mxu0 0.0
  %2402 = vmatprep.subr.mxu0 0.0
  %2403 = vmatpush1.msra.mxu0 0.0
  %2404 = vmatprep.subr.mxu0 0.0
  %2405 = vmatpush1.msra.mxu0 0.0
  %2406 = vmatprep.subr.mxu0 0.0
  %2407 = vmatpush1.msra.mxu0 0.0
  %2408 = vmatprep.subr.mxu0 0.0
  %2409 = vmatpush1.msra.mxu0 0.0
  %2410 = vmatprep.subr.mxu0 0.0
  %2411 = vmatpush1.msra.mxu0 0.0
  %2412 = vmatprep.subr.mxu0 0.0
  %2413 = vmatpush1.msra.mxu0 0.0
  %2414 = vmatprep.subr.mxu0 0.0
  %2415 = vmatpush1.msra.mxu0 0.0
  %2416 = vmatprep.subr.mxu0 0.0
  %2417 = vmatpush1.msra.mxu0 0.0
  %2418 = vmatprep.subr.mxu0 0.0
  %2419 = vmatpush1.msra.mxu0 0.0
  %2420 = vmatprep.subr.mxu0 0.0
  %2421 = vmatpush1.msra.mxu0 0.0
  %2422 = vmatprep.subr.mxu0 0.0
  %2423 = vmatpush1.msra.mxu0 0.0
  %2424 = vmatprep.subr.mxu0 0.0
  %2425 = vmatpush1.msra.mxu0 0.0
  %2426 = vmatprep.subr.mxu0 0.0
  %2427 = vmatpush1.msra.mxu0 0.0
  %2428 = vmatprep.subr.mxu0 0.0
  %2429 = vmatpush1.msra.mxu0 0.0
  %2430 = vmatprep.subr.mxu0 0.0
  %2431 = vmatpush1.msra.mxu0 0.0
  %2432 = vmatprep.subr.mxu0 0.0
  %2433 = vmatpush1.msra.mxu0 0.0
  %2434 = vmatprep.subr.mxu0 0.0
  %2435 = vmatpush1.msra.mxu0 0.0
  %2436 = vmatprep.subr.mxu0 0.0
  %2437 = vmatpush1.msra.mxu0 0.0
  %2438 = vmatprep.subr.mxu0 0.0
  %2439 = vmatpush1.msra.mxu0 0.0
  %2440 = vmatprep.subr.mxu0 0.0
  %2441 = vmatpush1.msra.mxu0 0.0
  %2442 = vmatprep.subr.mxu0 0.0
  %2443 = vmatpush1.msra.mxu0 0.0
  %2444 = vmatprep.subr.mxu0 0.0
  %2445 = vmatpush1.msra.mxu0 0.0
  %2446 = vmatprep.subr.mxu0 0.0
  %2447 = vmatpush1.msra.mxu0 0.0
  %2448 = vmatprep.subr.mxu0 0.0
  %2449 = vmatpush1.msra.mxu0 0.0
  %2450 = vmatprep.subr.mxu0 0.0
  %2451 = vmatpush1.msra.mxu0 0.0
  %2452 = vmatprep.mubr.f32.mxu0 0.0
  %2453 = vmatmul.mubr.f32.gmra.mrb[0].mxu0 %v2315
  %v2454 = vpop.f32.mrb[0].mxu0
  %v2455 = vadd.f32 %v2310, %v2454
  %v2456 = vpop.f32.mrb[0].mxu0
  %v2457 = vadd.f32 %v2312, %v2456
  %2458 = vdwg.mxu0
  %s2459 = scalar_lea.vmem %s5, 64
  %v2460 = vld [vmem:[%s2459] sm:$0x3f]
  %s2461 = scalar_lea.vmem %s5, 48
  %v2462 = vld [vmem:[%s2461] sm:$0x3f]
  %v2464 = vsel %vm1874, %v2462, 0
  %2466 = vmatprep.subr.mxu0 %v1833
  %2467 = vmatpush1.msra.mxu0 %v1832
  %2468 = vmatprep.subr.mxu0 0.0
  %2469 = vmatpush1.msra.mxu0 0.0
  %2470 = vmatprep.subr.mxu0 0.0
  %2471 = vmatpush1.msra.mxu0 0.0
  %2472 = vmatprep.subr.mxu0 0.0
  %2473 = vmatpush1.msra.mxu0 0.0
  %2474 = vmatprep.subr.mxu0 0.0
  %2475 = vmatpush1.msra.mxu0 0.0
  %2476 = vmatprep.subr.mxu0 0.0
  %2477 = vmatpush1.msra.mxu0 0.0
  %2478 = vmatprep.subr.mxu0 0.0
  %2479 = vmatpush1.msra.mxu0 0.0
  %2480 = vmatprep.subr.mxu0 0.0
  %2481 = vmatpush1.msra.mxu0 0.0
  %2482 = vmatprep.subr.mxu0 0.0
  %2483 = vmatpush1.msra.mxu0 0.0
  %2484 = vmatprep.subr.mxu0 0.0
  %2485 = vmatpush1.msra.mxu0 0.0
  %2486 = vmatprep.subr.mxu0 0.0
  %2487 = vmatpush1.msra.mxu0 0.0
  %2488 = vmatprep.subr.mxu0 0.0
  %2489 = vmatpush1.msra.mxu0 0.0
  %2490 = vmatprep.subr.mxu0 0.0
  %2491 = vmatpush1.msra.mxu0 0.0
  %2492 = vmatprep.subr.mxu0 0.0
  %2493 = vmatpush1.msra.mxu0 0.0
  %2494 = vmatprep.subr.mxu0 0.0
  %2495 = vmatpush1.msra.mxu0 0.0
  %2496 = vmatprep.subr.mxu0 0.0
  %2497 = vmatpush1.msra.mxu0 0.0
  %2498 = vmatprep.subr.mxu0 0.0
  %2499 = vmatpush1.msra.mxu0 0.0
  %2500 = vmatprep.subr.mxu0 0.0
  %2501 = vmatpush1.msra.mxu0 0.0
  %2502 = vmatprep.subr.mxu0 0.0
  %2503 = vmatpush1.msra.mxu0 0.0
  %2504 = vmatprep.subr.mxu0 0.0
  %2505 = vmatpush1.msra.mxu0 0.0
  %2506 = vmatprep.subr.mxu0 0.0
  %2507 = vmatpush1.msra.mxu0 0.0
  %2508 = vmatprep.subr.mxu0 0.0
  %2509 = vmatpush1.msra.mxu0 0.0
  %2510 = vmatprep.subr.mxu0 0.0
  %2511 = vmatpush1.msra.mxu0 0.0
  %2512 = vmatprep.subr.mxu0 0.0
  %2513 = vmatpush1.msra.mxu0 0.0
  %2514 = vmatprep.subr.mxu0 0.0
  %2515 = vmatpush1.msra.mxu0 0.0
  %2516 = vmatprep.subr.mxu0 0.0
  %2517 = vmatpush1.msra.mxu0 0.0
  %2518 = vmatprep.subr.mxu0 0.0
  %2519 = vmatpush1.msra.mxu0 0.0
  %2520 = vmatprep.subr.mxu0 0.0
  %2521 = vmatpush1.msra.mxu0 0.0
  %2522 = vmatprep.subr.mxu0 0.0
  %2523 = vmatpush1.msra.mxu0 0.0
  %2524 = vmatprep.subr.mxu0 0.0
  %2525 = vmatpush1.msra.mxu0 0.0
  %2526 = vmatprep.subr.mxu0 0.0
  %2527 = vmatpush1.msra.mxu0 0.0
  %2528 = vmatprep.subr.mxu0 0.0
  %2529 = vmatpush1.msra.mxu0 0.0
  %2530 = vmatprep.mubr.f32.mxu0 0.0
  %2531 = vmatmul.mubr.f32.gmra.mrb[0].mxu0 %v2464
  %v2532 = vpop.f32.mrb[0].mxu0
  %v2533 = vadd.f32 0.0, %v2532
  %v2534 = vpop.f32.mrb[0].mxu0
  %v2535 = vadd.f32 0.0, %v2534
  %2536 = vdwg.mxu0
  %2537 = vmatprep.subr.mxu0 %v1835
  %2538 = vmatpush1.msra.mxu0 %v1834
  %2539 = vmatprep.subr.mxu0 0.0
  %2540 = vmatpush1.msra.mxu0 0.0
  %2541 = vmatprep.subr.mxu0 0.0
  %2542 = vmatpush1.msra.mxu0 0.0
  %2543 = vmatprep.subr.mxu0 0.0
  %2544 = vmatpush1.msra.mxu0 0.0
  %2545 = vmatprep.subr.mxu0 0.0
  %2546 = vmatpush1.msra.mxu0 0.0
  %2547 = vmatprep.subr.mxu0 0.0
  %2548 = vmatpush1.msra.mxu0 0.0
  %2549 = vmatprep.subr.mxu0 0.0
  %2550 = vmatpush1.msra.mxu0 0.0
  %2551 = vmatprep.subr.mxu0 0.0
  %2552 = vmatpush1.msra.mxu0 0.0
  %2553 = vmatprep.subr.mxu0 0.0
  %2554 = vmatpush1.msra.mxu0 0.0
  %2555 = vmatprep.subr.mxu0 0.0
  %2556 = vmatpush1.msra.mxu0 0.0
  %2557 = vmatprep.subr.mxu0 0.0
  %2558 = vmatpush1.msra.mxu0 0.0
  %2559 = vmatprep.subr.mxu0 0.0
  %2560 = vmatpush1.msra.mxu0 0.0
  %2561 = vmatprep.subr.mxu0 0.0
  %2562 = vmatpush1.msra.mxu0 0.0
  %2563 = vmatprep.subr.mxu0 0.0
  %2564 = vmatpush1.msra.mxu0 0.0
  %2565 = vmatprep.subr.mxu0 0.0
  %2566 = vmatpush1.msra.mxu0 0.0
  %2567 = vmatprep.subr.mxu0 0.0
  %2568 = vmatpush1.msra.mxu0 0.0
  %2569 = vmatprep.subr.mxu0 0.0
  %2570 = vmatpush1.msra.mxu0 0.0
  %2571 = vmatprep.subr.mxu0 0.0
  %2572 = vmatpush1.msra.mxu0 0.0
  %2573 = vmatprep.subr.mxu0 0.0
  %2574 = vmatpush1.msra.mxu0 0.0
  %2575 = vmatprep.subr.mxu0 0.0
  %2576 = vmatpush1.msra.mxu0 0.0
  %2577 = vmatprep.subr.mxu0 0.0
  %2578 = vmatpush1.msra.mxu0 0.0
  %2579 = vmatprep.subr.mxu0 0.0
  %2580 = vmatpush1.msra.mxu0 0.0
  %2581 = vmatprep.subr.mxu0 0.0
  %2582 = vmatpush1.msra.mxu0 0.0
  %2583 = vmatprep.subr.mxu0 0.0
  %2584 = vmatpush1.msra.mxu0 0.0
  %2585 = vmatprep.subr.mxu0 0.0
  %2586 = vmatpush1.msra.mxu0 0.0
  %2587 = vmatprep.subr.mxu0 0.0
  %2588 = vmatpush1.msra.mxu0 0.0
  %2589 = vmatprep.subr.mxu0 0.0
  %2590 = vmatpush1.msra.mxu0 0.0
  %2591 = vmatprep.subr.mxu0 0.0
  %2592 = vmatpush1.msra.mxu0 0.0
  %2593 = vmatprep.subr.mxu0 0.0
  %2594 = vmatpush1.msra.mxu0 0.0
  %2595 = vmatprep.subr.mxu0 0.0
  %2596 = vmatpush1.msra.mxu0 0.0
  %2597 = vmatprep.subr.mxu0 0.0
  %2598 = vmatpush1.msra.mxu0 0.0
  %2599 = vmatprep.subr.mxu0 0.0
  %2600 = vmatpush1.msra.mxu0 0.0
  %2601 = vmatprep.mubr.f32.mxu0 0.0
  %2602 = vmatmul.mubr.f32.gmra.mrb[0].mxu0 %v2464
  %v2603 = vpop.f32.mrb[0].mxu0
  %v2604 = vadd.f32 0.0, %v2603
  %v2605 = vpop.f32.mrb[0].mxu0
  %v2606 = vadd.f32 0.0, %v2605
  %2607 = vdwg.mxu0
  %v2609 = vsel %vm1874, %v2460, 0
  %2611 = vmatprep.subr.mxu0 %v1817
  %2612 = vmatpush1.msra.mxu0 %v1816
  %2613 = vmatprep.subr.mxu0 0.0
  %2614 = vmatpush1.msra.mxu0 0.0
  %2615 = vmatprep.subr.mxu0 0.0
  %2616 = vmatpush1.msra.mxu0 0.0
  %2617 = vmatprep.subr.mxu0 0.0
  %2618 = vmatpush1.msra.mxu0 0.0
  %2619 = vmatprep.subr.mxu0 0.0
  %2620 = vmatpush1.msra.mxu0 0.0
  %2621 = vmatprep.subr.mxu0 0.0
  %2622 = vmatpush1.msra.mxu0 0.0
  %2623 = vmatprep.subr.mxu0 0.0
  %2624 = vmatpush1.msra.mxu0 0.0
  %2625 = vmatprep.subr.mxu0 0.0
  %2626 = vmatpush1.msra.mxu0 0.0
  %2627 = vmatprep.subr.mxu0 0.0
  %2628 = vmatpush1.msra.mxu0 0.0
  %2629 = vmatprep.subr.mxu0 0.0
  %2630 = vmatpush1.msra.mxu0 0.0
  %2631 = vmatprep.subr.mxu0 0.0
  %2632 = vmatpush1.msra.mxu0 0.0
  %2633 = vmatprep.subr.mxu0 0.0
  %2634 = vmatpush1.msra.mxu0 0.0
  %2635 = vmatprep.subr.mxu0 0.0
  %2636 = vmatpush1.msra.mxu0 0.0
  %2637 = vmatprep.subr.mxu0 0.0
  %2638 = vmatpush1.msra.mxu0 0.0
  %2639 = vmatprep.subr.mxu0 0.0
  %2640 = vmatpush1.msra.mxu0 0.0
  %2641 = vmatprep.subr.mxu0 0.0
  %2642 = vmatpush1.msra.mxu0 0.0
  %2643 = vmatprep.subr.mxu0 0.0
  %2644 = vmatpush1.msra.mxu0 0.0
  %2645 = vmatprep.subr.mxu0 0.0
  %2646 = vmatpush1.msra.mxu0 0.0
  %2647 = vmatprep.subr.mxu0 0.0
  %2648 = vmatpush1.msra.mxu0 0.0
  %2649 = vmatprep.subr.mxu0 0.0
  %2650 = vmatpush1.msra.mxu0 0.0
  %2651 = vmatprep.subr.mxu0 0.0
  %2652 = vmatpush1.msra.mxu0 0.0
  %2653 = vmatprep.subr.mxu0 0.0
  %2654 = vmatpush1.msra.mxu0 0.0
  %2655 = vmatprep.subr.mxu0 0.0
  %2656 = vmatpush1.msra.mxu0 0.0
  %2657 = vmatprep.subr.mxu0 0.0
  %2658 = vmatpush1.msra.mxu0 0.0
  %2659 = vmatprep.subr.mxu0 0.0
  %2660 = vmatpush1.msra.mxu0 0.0
  %2661 = vmatprep.subr.mxu0 0.0
  %2662 = vmatpush1.msra.mxu0 0.0
  %2663 = vmatprep.subr.mxu0 0.0
  %2664 = vmatpush1.msra.mxu0 0.0
  %2665 = vmatprep.subr.mxu0 0.0
  %2666 = vmatpush1.msra.mxu0 0.0
  %2667 = vmatprep.subr.mxu0 0.0
  %2668 = vmatpush1.msra.mxu0 0.0
  %2669 = vmatprep.subr.mxu0 0.0
  %2670 = vmatpush1.msra.mxu0 0.0
  %2671 = vmatprep.subr.mxu0 0.0
  %2672 = vmatpush1.msra.mxu0 0.0
  %2673 = vmatprep.subr.mxu0 0.0
  %2674 = vmatpush1.msra.mxu0 0.0
  %2675 = vmatprep.mubr.f32.mxu0 0.0
  %2676 = vmatmul.mubr.f32.gmra.mrb[0].mxu0 %v2609
  %v2677 = vpop.f32.mrb[0].mxu0
  %v2678 = vadd.f32 %v2533, %v2677
  %v2679 = vpop.f32.mrb[0].mxu0
  %v2680 = vadd.f32 %v2535, %v2679
  %2681 = vdwg.mxu0
  %2682 = vmatprep.subr.mxu0 %v1819
  %2683 = vmatpush1.msra.mxu0 %v1818
  %2684 = vmatprep.subr.mxu0 0.0
  %2685 = vmatpush1.msra.mxu0 0.0
  %2686 = vmatprep.subr.mxu0 0.0
  %2687 = vmatpush1.msra.mxu0 0.0
  %2688 = vmatprep.subr.mxu0 0.0
  %2689 = vmatpush1.msra.mxu0 0.0
  %2690 = vmatprep.subr.mxu0 0.0
  %2691 = vmatpush1.msra.mxu0 0.0
  %2692 = vmatprep.subr.mxu0 0.0
  %2693 = vmatpush1.msra.mxu0 0.0
  %2694 = vmatprep.subr.mxu0 0.0
  %2695 = vmatpush1.msra.mxu0 0.0
  %2696 = vmatprep.subr.mxu0 0.0
  %2697 = vmatpush1.msra.mxu0 0.0
  %2698 = vmatprep.subr.mxu0 0.0
  %2699 = vmatpush1.msra.mxu0 0.0
  %2700 = vmatprep.subr.mxu0 0.0
  %2701 = vmatpush1.msra.mxu0 0.0
  %2702 = vmatprep.subr.mxu0 0.0
  %2703 = vmatpush1.msra.mxu0 0.0
  %2704 = vmatprep.subr.mxu0 0.0
  %2705 = vmatpush1.msra.mxu0 0.0
  %2706 = vmatprep.subr.mxu0 0.0
  %2707 = vmatpush1.msra.mxu0 0.0
  %2708 = vmatprep.subr.mxu0 0.0
  %2709 = vmatpush1.msra.mxu0 0.0
  %2710 = vmatprep.subr.mxu0 0.0
  %2711 = vmatpush1.msra.mxu0 0.0
  %2712 = vmatprep.subr.mxu0 0.0
  %2713 = vmatpush1.msra.mxu0 0.0
  %2714 = vmatprep.subr.mxu0 0.0
  %2715 = vmatpush1.msra.mxu0 0.0
  %2716 = vmatprep.subr.mxu0 0.0
  %2717 = vmatpush1.msra.mxu0 0.0
  %2718 = vmatprep.subr.mxu0 0.0
  %2719 = vmatpush1.msra.mxu0 0.0
  %2720 = vmatprep.subr.mxu0 0.0
  %2721 = vmatpush1.msra.mxu0 0.0
  %2722 = vmatprep.subr.mxu0 0.0
  %2723 = vmatpush1.msra.mxu0 0.0
  %2724 = vmatprep.subr.mxu0 0.0
  %2725 = vmatpush1.msra.mxu0 0.0
  %2726 = vmatprep.subr.mxu0 0.0
  %2727 = vmatpush1.msra.mxu0 0.0
  %2728 = vmatprep.subr.mxu0 0.0
  %2729 = vmatpush1.msra.mxu0 0.0
  %2730 = vmatprep.subr.mxu0 0.0
  %2731 = vmatpush1.msra.mxu0 0.0
  %2732 = vmatprep.subr.mxu0 0.0
  %2733 = vmatpush1.msra.mxu0 0.0
  %2734 = vmatprep.subr.mxu0 0.0
  %2735 = vmatpush1.msra.mxu0 0.0
  %2736 = vmatprep.subr.mxu0 0.0
  %2737 = vmatpush1.msra.mxu0 0.0
  %2738 = vmatprep.subr.mxu0 0.0
  %2739 = vmatpush1.msra.mxu0 0.0
  %2740 = vmatprep.subr.mxu0 0.0
  %2741 = vmatpush1.msra.mxu0 0.0
  %2742 = vmatprep.subr.mxu0 0.0
  %2743 = vmatpush1.msra.mxu0 0.0
  %2744 = vmatprep.subr.mxu0 0.0
  %2745 = vmatpush1.msra.mxu0 0.0
  %2746 = vmatprep.mubr.f32.mxu0 0.0
  %2747 = vmatmul.mubr.f32.gmra.mrb[0].mxu0 %v2609
  %v2748 = vpop.f32.mrb[0].mxu0
  %v2749 = vadd.f32 %v2604, %v2748
  %v2750 = vpop.f32.mrb[0].mxu0
  %v2751 = vadd.f32 %v2606, %v2750
  %2752 = vdwg.mxu0
  %s2753 = scalar_lea.vmem %s5, 16
  %v2754 = vld [vmem:[%s2753] sm:$0x3f]
  %v2756 = vsel %vm1874, %v2754, 0
  %2758 = vmatprep.subr.mxu0 %v1849
  %2759 = vmatpush1.msra.mxu0 %v1848
  %2760 = vmatprep.subr.mxu0 0.0
  %2761 = vmatpush1.msra.mxu0 0.0
  %2762 = vmatprep.subr.mxu0 0.0
  %2763 = vmatpush1.msra.mxu0 0.0
  %2764 = vmatprep.subr.mxu0 0.0
  %2765 = vmatpush1.msra.mxu0 0.0
  %2766 = vmatprep.subr.mxu0 0.0
  %2767 = vmatpush1.msra.mxu0 0.0
  %2768 = vmatprep.subr.mxu0 0.0
  %2769 = vmatpush1.msra.mxu0 0.0
  %2770 = vmatprep.subr.mxu0 0.0
  %2771 = vmatpush1.msra.mxu0 0.0
  %2772 = vmatprep.subr.mxu0 0.0
  %2773 = vmatpush1.msra.mxu0 0.0
  %2774 = vmatprep.subr.mxu0 0.0
  %2775 = vmatpush1.msra.mxu0 0.0
  %2776 = vmatprep.subr.mxu0 0.0
  %2777 = vmatpush1.msra.mxu0 0.0
  %2778 = vmatprep.subr.mxu0 0.0
  %2779 = vmatpush1.msra.mxu0 0.0
  %2780 = vmatprep.subr.mxu0 0.0
  %2781 = vmatpush1.msra.mxu0 0.0
  %2782 = vmatprep.subr.mxu0 0.0
  %2783 = vmatpush1.msra.mxu0 0.0
  %2784 = vmatprep.subr.mxu0 0.0
  %2785 = vmatpush1.msra.mxu0 0.0
  %2786 = vmatprep.subr.mxu0 0.0
  %2787 = vmatpush1.msra.mxu0 0.0
  %2788 = vmatprep.subr.mxu0 0.0
  %2789 = vmatpush1.msra.mxu0 0.0
  %2790 = vmatprep.subr.mxu0 0.0
  %2791 = vmatpush1.msra.mxu0 0.0
  %2792 = vmatprep.subr.mxu0 0.0
  %2793 = vmatpush1.msra.mxu0 0.0
  %2794 = vmatprep.subr.mxu0 0.0
  %2795 = vmatpush1.msra.mxu0 0.0
  %2796 = vmatprep.subr.mxu0 0.0
  %2797 = vmatpush1.msra.mxu0 0.0
  %2798 = vmatprep.subr.mxu0 0.0
  %2799 = vmatpush1.msra.mxu0 0.0
  %2800 = vmatprep.subr.mxu0 0.0
  %2801 = vmatpush1.msra.mxu0 0.0
  %2802 = vmatprep.subr.mxu0 0.0
  %2803 = vmatpush1.msra.mxu0 0.0
  %2804 = vmatprep.subr.mxu0 0.0
  %2805 = vmatpush1.msra.mxu0 0.0
  %2806 = vmatprep.subr.mxu0 0.0
  %2807 = vmatpush1.msra.mxu0 0.0
  %2808 = vmatprep.subr.mxu0 0.0
  %2809 = vmatpush1.msra.mxu0 0.0
  %2810 = vmatprep.subr.mxu0 0.0
  %2811 = vmatpush1.msra.mxu0 0.0
  %2812 = vmatprep.subr.mxu0 0.0
  %2813 = vmatpush1.msra.mxu0 0.0
  %2814 = vmatprep.subr.mxu0 0.0
  %2815 = vmatpush1.msra.mxu0 0.0
  %2816 = vmatprep.subr.mxu0 0.0
  %2817 = vmatpush1.msra.mxu0 0.0
  %2818 = vmatprep.subr.mxu0 0.0
  %2819 = vmatpush1.msra.mxu0 0.0
  %2820 = vmatprep.subr.mxu0 0.0
  %2821 = vmatpush1.msra.mxu0 0.0
  %2822 = vmatprep.mubr.f32.mxu0 0.0
  %2823 = vmatmul.mubr.f32.gmra.mrb[0].mxu0 %v2756
  %v2824 = vpop.f32.mrb[0].mxu0
  %v2825 = vadd.f32 0.0, %v2824
  %v2826 = vpop.f32.mrb[0].mxu0
  %v2827 = vadd.f32 0.0, %v2826
  %2828 = vdwg.mxu0
  %2829 = vmatprep.subr.mxu0 %v1851
  %2830 = vmatpush1.msra.mxu0 %v1850
  %2831 = vmatprep.subr.mxu0 0.0
  %2832 = vmatpush1.msra.mxu0 0.0
  %2833 = vmatprep.subr.mxu0 0.0
  %2834 = vmatpush1.msra.mxu0 0.0
  %2835 = vmatprep.subr.mxu0 0.0
  %2836 = vmatpush1.msra.mxu0 0.0
  %2837 = vmatprep.subr.mxu0 0.0
  %2838 = vmatpush1.msra.mxu0 0.0
  %2839 = vmatprep.subr.mxu0 0.0
  %2840 = vmatpush1.msra.mxu0 0.0
  %2841 = vmatprep.subr.mxu0 0.0
  %2842 = vmatpush1.msra.mxu0 0.0
  %2843 = vmatprep.subr.mxu0 0.0
  %2844 = vmatpush1.msra.mxu0 0.0
  %2845 = vmatprep.subr.mxu0 0.0
  %2846 = vmatpush1.msra.mxu0 0.0
  %2847 = vmatprep.subr.mxu0 0.0
  %2848 = vmatpush1.msra.mxu0 0.0
  %2849 = vmatprep.subr.mxu0 0.0
  %2850 = vmatpush1.msra.mxu0 0.0
  %2851 = vmatprep.subr.mxu0 0.0
  %2852 = vmatpush1.msra.mxu0 0.0
  %2853 = vmatprep.subr.mxu0 0.0
  %2854 = vmatpush1.msra.mxu0 0.0
  %2855 = vmatprep.subr.mxu0 0.0
  %2856 = vmatpush1.msra.mxu0 0.0
  %2857 = vmatprep.subr.mxu0 0.0
  %2858 = vmatpush1.msra.mxu0 0.0
  %2859 = vmatprep.subr.mxu0 0.0
  %2860 = vmatpush1.msra.mxu0 0.0
  %2861 = vmatprep.subr.mxu0 0.0
  %2862 = vmatpush1.msra.mxu0 0.0
  %2863 = vmatprep.subr.mxu0 0.0
  %2864 = vmatpush1.msra.mxu0 0.0
  %2865 = vmatprep.subr.mxu0 0.0
  %2866 = vmatpush1.msra.mxu0 0.0
  %2867 = vmatprep.subr.mxu0 0.0
  %2868 = vmatpush1.msra.mxu0 0.0
  %2869 = vmatprep.subr.mxu0 0.0
  %2870 = vmatpush1.msra.mxu0 0.0
  %2871 = vmatprep.subr.mxu0 0.0
  %2872 = vmatpush1.msra.mxu0 0.0
  %2873 = vmatprep.subr.mxu0 0.0
  %2874 = vmatpush1.msra.mxu0 0.0
  %2875 = vmatprep.subr.mxu0 0.0
  %2876 = vmatpush1.msra.mxu0 0.0
  %2877 = vmatprep.subr.mxu0 0.0
  %2878 = vmatpush1.msra.mxu0 0.0
  %2879 = vmatprep.subr.mxu0 0.0
  %2880 = vmatpush1.msra.mxu0 0.0
  %2881 = vmatprep.subr.mxu0 0.0
  %2882 = vmatpush1.msra.mxu0 0.0
  %2883 = vmatprep.subr.mxu0 0.0
  %2884 = vmatpush1.msra.mxu0 0.0
  %2885 = vmatprep.subr.mxu0 0.0
  %2886 = vmatpush1.msra.mxu0 0.0
  %2887 = vmatprep.subr.mxu0 0.0
  %2888 = vmatpush1.msra.mxu0 0.0
  %2889 = vmatprep.subr.mxu0 0.0
  %2890 = vmatpush1.msra.mxu0 0.0
  %2891 = vmatprep.subr.mxu0 0.0
  %2892 = vmatpush1.msra.mxu0 0.0
  %2893 = vmatprep.mubr.f32.mxu0 0.0
  %2894 = vmatmul.mubr.f32.gmra.mrb[0].mxu0 %v2756
  %v2895 = vpop.f32.mrb[0].mxu0
  %v2896 = vadd.f32 0.0, %v2895
  %v2897 = vpop.f32.mrb[0].mxu0
  %v2898 = vadd.f32 0.0, %v2897
  %2899 = vdwg.mxu0
  %v2900 = vadd.f32 %v2678, %v2825
  %v2901 = vadd.f32 %v2680, %v2827
  %v2902 = vadd.f32 %v2749, %v2896
  %v2903 = vadd.f32 %v2751, %v2898
  %v2904 = vld [vmem:[%s5] sm:$0x3f]
  %v2906 = vsel %vm1874, %v2904, 0
  %2908 = vmatprep.subr.mxu0 %v1865
  %2909 = vmatpush1.msra.mxu0 %v1864
  %2910 = vmatprep.subr.mxu0 0.0
  %2911 = vmatpush1.msra.mxu0 0.0
  %2912 = vmatprep.subr.mxu0 0.0
  %2913 = vmatpush1.msra.mxu0 0.0
  %2914 = vmatprep.subr.mxu0 0.0
  %2915 = vmatpush1.msra.mxu0 0.0
  %2916 = vmatprep.subr.mxu0 0.0
  %2917 = vmatpush1.msra.mxu0 0.0
  %2918 = vmatprep.subr.mxu0 0.0
  %2919 = vmatpush1.msra.mxu0 0.0
  %2920 = vmatprep.subr.mxu0 0.0
  %2921 = vmatpush1.msra.mxu0 0.0
  %2922 = vmatprep.subr.mxu0 0.0
  %2923 = vmatpush1.msra.mxu0 0.0
  %2924 = vmatprep.subr.mxu0 0.0
  %2925 = vmatpush1.msra.mxu0 0.0
  %2926 = vmatprep.subr.mxu0 0.0
  %2927 = vmatpush1.msra.mxu0 0.0
  %2928 = vmatprep.subr.mxu0 0.0
  %2929 = vmatpush1.msra.mxu0 0.0
  %2930 = vmatprep.subr.mxu0 0.0
  %2931 = vmatpush1.msra.mxu0 0.0
  %2932 = vmatprep.subr.mxu0 0.0
  %2933 = vmatpush1.msra.mxu0 0.0
  %2934 = vmatprep.subr.mxu0 0.0
  %2935 = vmatpush1.msra.mxu0 0.0
  %2936 = vmatprep.subr.mxu0 0.0
  %2937 = vmatpush1.msra.mxu0 0.0
  %2938 = vmatprep.subr.mxu0 0.0
  %2939 = vmatpush1.msra.mxu0 0.0
  %2940 = vmatprep.subr.mxu0 0.0
  %2941 = vmatpush1.msra.mxu0 0.0
  %2942 = vmatprep.subr.mxu0 0.0
  %2943 = vmatpush1.msra.mxu0 0.0
  %2944 = vmatprep.subr.mxu0 0.0
  %2945 = vmatpush1.msra.mxu0 0.0
  %2946 = vmatprep.subr.mxu0 0.0
  %2947 = vmatpush1.msra.mxu0 0.0
  %2948 = vmatprep.subr.mxu0 0.0
  %2949 = vmatpush1.msra.mxu0 0.0
  %2950 = vmatprep.subr.mxu0 0.0
  %2951 = vmatpush1.msra.mxu0 0.0
  %2952 = vmatprep.subr.mxu0 0.0
  %2953 = vmatpush1.msra.mxu0 0.0
  %2954 = vmatprep.subr.mxu0 0.0
  %2955 = vmatpush1.msra.mxu0 0.0
  %2956 = vmatprep.subr.mxu0 0.0
  %2957 = vmatpush1.msra.mxu0 0.0
  %2958 = vmatprep.subr.mxu0 0.0
  %2959 = vmatpush1.msra.mxu0 0.0
  %2960 = vmatprep.subr.mxu0 0.0
  %2961 = vmatpush1.msra.mxu0 0.0
  %2962 = vmatprep.subr.mxu0 0.0
  %2963 = vmatpush1.msra.mxu0 0.0
  %2964 = vmatprep.subr.mxu0 0.0
  %2965 = vmatpush1.msra.mxu0 0.0
  %2966 = vmatprep.subr.mxu0 0.0
  %2967 = vmatpush1.msra.mxu0 0.0
  %2968 = vmatprep.subr.mxu0 0.0
  %2969 = vmatpush1.msra.mxu0 0.0
  %2970 = vmatprep.subr.mxu0 0.0
  %2971 = vmatpush1.msra.mxu0 0.0
  %2972 = vmatprep.mubr.f32.mxu0 0.0
  %2973 = vmatmul.mubr.f32.gmra.mrb[0].mxu0 %v2906
  %v2974 = vpop.f32.mrb[0].mxu0
  %v2975 = vadd.f32 0.0, %v2974
  %v2976 = vpop.f32.mrb[0].mxu0
  %v2977 = vadd.f32 0.0, %v2976
  %2978 = vdwg.mxu0
  %2979 = vmatprep.subr.mxu0 %v1867
  %2980 = vmatpush1.msra.mxu0 %v1866
  %2981 = vmatprep.subr.mxu0 0.0
  %2982 = vmatpush1.msra.mxu0 0.0
  %2983 = vmatprep.subr.mxu0 0.0
  %2984 = vmatpush1.msra.mxu0 0.0
  %2985 = vmatprep.subr.mxu0 0.0
  %2986 = vmatpush1.msra.mxu0 0.0
  %2987 = vmatprep.subr.mxu0 0.0
  %2988 = vmatpush1.msra.mxu0 0.0
  %2989 = vmatprep.subr.mxu0 0.0
  %2990 = vmatpush1.msra.mxu0 0.0
  %2991 = vmatprep.subr.mxu0 0.0
  %2992 = vmatpush1.msra.mxu0 0.0
  %2993 = vmatprep.subr.mxu0 0.0
  %2994 = vmatpush1.msra.mxu0 0.0
  %2995 = vmatprep.subr.mxu0 0.0
  %2996 = vmatpush1.msra.mxu0 0.0
  %2997 = vmatprep.subr.mxu0 0.0
  %2998 = vmatpush1.msra.mxu0 0.0
  %2999 = vmatprep.subr.mxu0 0.0
  %3000 = vmatpush1.msra.mxu0 0.0
  %3001 = vmatprep.subr.mxu0 0.0
  %3002 = vmatpush1.msra.mxu0 0.0
  %3003 = vmatprep.subr.mxu0 0.0
  %3004 = vmatpush1.msra.mxu0 0.0
  %3005 = vmatprep.subr.mxu0 0.0
  %3006 = vmatpush1.msra.mxu0 0.0
  %3007 = vmatprep.subr.mxu0 0.0
  %3008 = vmatpush1.msra.mxu0 0.0
  %3009 = vmatprep.subr.mxu0 0.0
  %3010 = vmatpush1.msra.mxu0 0.0
  %3011 = vmatprep.subr.mxu0 0.0
  %3012 = vmatpush1.msra.mxu0 0.0
  %3013 = vmatprep.subr.mxu0 0.0
  %3014 = vmatpush1.msra.mxu0 0.0
  %3015 = vmatprep.subr.mxu0 0.0
  %3016 = vmatpush1.msra.mxu0 0.0
  %3017 = vmatprep.subr.mxu0 0.0
  %3018 = vmatpush1.msra.mxu0 0.0
  %3019 = vmatprep.subr.mxu0 0.0
  %3020 = vmatpush1.msra.mxu0 0.0
  %3021 = vmatprep.subr.mxu0 0.0
  %3022 = vmatpush1.msra.mxu0 0.0
  %3023 = vmatprep.subr.mxu0 0.0
  %3024 = vmatpush1.msra.mxu0 0.0
  %3025 = vmatprep.subr.mxu0 0.0
  %3026 = vmatpush1.msra.mxu0 0.0
  %3027 = vmatprep.subr.mxu0 0.0
  %3028 = vmatpush1.msra.mxu0 0.0
  %3029 = vmatprep.subr.mxu0 0.0
  %3030 = vmatpush1.msra.mxu0 0.0
  %3031 = vmatprep.subr.mxu0 0.0
  %3032 = vmatpush1.msra.mxu0 0.0
  %3033 = vmatprep.subr.mxu0 0.0
  %3034 = vmatpush1.msra.mxu0 0.0
  %3035 = vmatprep.subr.mxu0 0.0
  %3036 = vmatpush1.msra.mxu0 0.0
  %3037 = vmatprep.subr.mxu0 0.0
  %3038 = vmatpush1.msra.mxu0 0.0
  %3039 = vmatprep.subr.mxu0 0.0
  %3040 = vmatpush1.msra.mxu0 0.0
  %3041 = vmatprep.subr.mxu0 0.0
  %3042 = vmatpush1.msra.mxu0 0.0
  %3043 = vmatprep.mubr.f32.mxu0 0.0
  %3044 = vmatmul.mubr.f32.gmra.mrb[0].mxu0 %v2906
  %v3045 = vpop.f32.mrb[0].mxu0
  %v3046 = vadd.f32 0.0, %v3045
  %v3047 = vpop.f32.mrb[0].mxu0
  %v3048 = vadd.f32 0.0, %v3047
  %3049 = vdwg.mxu0
  %v3050 = vadd.f32 %v2900, %v2975
  %v3051 = vadd.f32 %v2901, %v2977
  %v3052 = vadd.f32 %v2902, %v3046
  %v3053 = vadd.f32 %v2903, %v3048
  %v3054 = vld [vmem:[%s6] sm:$0x3f]
  %3056 = vset.pattern.permute.xlu0 0
  %3057 = vperm.xlu0 %3056, %v3054
  %v3058 = vpop.permute.xlu0 %3057
  %v3061 = vsel %vm1874, %v1869, 0
  %3063 = vmatprep.subr.mxu0 %v1817
  %3064 = vmatpush1.msra.mxu0 %v1816
  %3065 = vmatprep.subr.mxu0 0.0
  %3066 = vmatpush1.msra.mxu0 0.0
  %3067 = vmatprep.subr.mxu0 0.0
  %3068 = vmatpush1.msra.mxu0 0.0
  %3069 = vmatprep.subr.mxu0 0.0
  %3070 = vmatpush1.msra.mxu0 0.0
  %3071 = vmatprep.subr.mxu0 0.0
  %3072 = vmatpush1.msra.mxu0 0.0
  %3073 = vmatprep.subr.mxu0 0.0
  %3074 = vmatpush1.msra.mxu0 0.0
  %3075 = vmatprep.subr.mxu0 0.0
  %3076 = vmatpush1.msra.mxu0 0.0
  %3077 = vmatprep.subr.mxu0 0.0
  %3078 = vmatpush1.msra.mxu0 0.0
  %3079 = vmatprep.subr.mxu0 0.0
  %3080 = vmatpush1.msra.mxu0 0.0
  %3081 = vmatprep.subr.mxu0 0.0
  %3082 = vmatpush1.msra.mxu0 0.0
  %3083 = vmatprep.subr.mxu0 0.0
  %3084 = vmatpush1.msra.mxu0 0.0
  %3085 = vmatprep.subr.mxu0 0.0
  %3086 = vmatpush1.msra.mxu0 0.0
  %3087 = vmatprep.subr.mxu0 0.0
  %3088 = vmatpush1.msra.mxu0 0.0
  %3089 = vmatprep.subr.mxu0 0.0
  %3090 = vmatpush1.msra.mxu0 0.0
  %3091 = vmatprep.subr.mxu0 0.0
  %3092 = vmatpush1.msra.mxu0 0.0
  %3093 = vmatprep.subr.mxu0 0.0
  %3094 = vmatpush1.msra.mxu0 0.0
  %3095 = vmatprep.subr.mxu0 0.0
  %3096 = vmatpush1.msra.mxu0 0.0
  %3097 = vmatprep.subr.mxu0 0.0
  %3098 = vmatpush1.msra.mxu0 0.0
  %3099 = vmatprep.subr.mxu0 0.0
  %3100 = vmatpush1.msra.mxu0 0.0
  %3101 = vmatprep.subr.mxu0 0.0
  %3102 = vmatpush1.msra.mxu0 0.0
  %3103 = vmatprep.subr.mxu0 0.0
  %3104 = vmatpush1.msra.mxu0 0.0
  %3105 = vmatprep.subr.mxu0 0.0
  %3106 = vmatpush1.msra.mxu0 0.0
  %3107 = vmatprep.subr.mxu0 0.0
  %3108 = vmatpush1.msra.mxu0 0.0
  %3109 = vmatprep.subr.mxu0 0.0
  %3110 = vmatpush1.msra.mxu0 0.0
  %3111 = vmatprep.subr.mxu0 0.0
  %3112 = vmatpush1.msra.mxu0 0.0
  %3113 = vmatprep.subr.mxu0 0.0
  %3114 = vmatpush1.msra.mxu0 0.0
  %3115 = vmatprep.subr.mxu0 0.0
  %3116 = vmatpush1.msra.mxu0 0.0
  %3117 = vmatprep.subr.mxu0 0.0
  %3118 = vmatpush1.msra.mxu0 0.0
  %3119 = vmatprep.subr.mxu0 0.0
  %3120 = vmatpush1.msra.mxu0 0.0
  %3121 = vmatprep.subr.mxu0 0.0
  %3122 = vmatpush1.msra.mxu0 0.0
  %3123 = vmatprep.subr.mxu0 0.0
  %3124 = vmatpush1.msra.mxu0 0.0
  %3125 = vmatprep.subr.mxu0 0.0
  %3126 = vmatpush1.msra.mxu0 0.0
  %3127 = vmatprep.mubr.f32.mxu0 0.0
  %3128 = vmatmul.mubr.f32.gmra.mrb[0].mxu0 %v3061
  %v3129 = vpop.f32.mrb[0].mxu0
  %v3130 = vadd.f32 %v3058, %v3129
  %v3131 = vpop.f32.mrb[0].mxu0
  %v3132 = vadd.f32 %v3058, %v3131
  %3133 = vdwg.mxu0
  %3134 = vmatprep.subr.mxu0 %v1819
  %3135 = vmatpush1.msra.mxu0 %v1818
  %3136 = vmatprep.subr.mxu0 0.0
  %3137 = vmatpush1.msra.mxu0 0.0
  %3138 = vmatprep.subr.mxu0 0.0
  %3139 = vmatpush1.msra.mxu0 0.0
  %3140 = vmatprep.subr.mxu0 0.0
  %3141 = vmatpush1.msra.mxu0 0.0
  %3142 = vmatprep.subr.mxu0 0.0
  %3143 = vmatpush1.msra.mxu0 0.0
  %3144 = vmatprep.subr.mxu0 0.0
  %3145 = vmatpush1.msra.mxu0 0.0
  %3146 = vmatprep.subr.mxu0 0.0
  %3147 = vmatpush1.msra.mxu0 0.0
  %3148 = vmatprep.subr.mxu0 0.0
  %3149 = vmatpush1.msra.mxu0 0.0
  %3150 = vmatprep.subr.mxu0 0.0
  %3151 = vmatpush1.msra.mxu0 0.0
  %3152 = vmatprep.subr.mxu0 0.0
  %3153 = vmatpush1.msra.mxu0 0.0
  %3154 = vmatprep.subr.mxu0 0.0
  %3155 = vmatpush1.msra.mxu0 0.0
  %3156 = vmatprep.subr.mxu0 0.0
  %3157 = vmatpush1.msra.mxu0 0.0
  %3158 = vmatprep.subr.mxu0 0.0
  %3159 = vmatpush1.msra.mxu0 0.0
  %3160 = vmatprep.subr.mxu0 0.0
  %3161 = vmatpush1.msra.mxu0 0.0
  %3162 = vmatprep.subr.mxu0 0.0
  %3163 = vmatpush1.msra.mxu0 0.0
  %3164 = vmatprep.subr.mxu0 0.0
  %3165 = vmatpush1.msra.mxu0 0.0
  %3166 = vmatprep.subr.mxu0 0.0
  %3167 = vmatpush1.msra.mxu0 0.0
  %3168 = vmatprep.subr.mxu0 0.0
  %3169 = vmatpush1.msra.mxu0 0.0
  %3170 = vmatprep.subr.mxu0 0.0
  %3171 = vmatpush1.msra.mxu0 0.0
  %3172 = vmatprep.subr.mxu0 0.0
  %3173 = vmatpush1.msra.mxu0 0.0
  %3174 = vmatprep.subr.mxu0 0.0
  %3175 = vmatpush1.msra.mxu0 0.0
  %3176 = vmatprep.subr.mxu0 0.0
  %3177 = vmatpush1.msra.mxu0 0.0
  %3178 = vmatprep.subr.mxu0 0.0
  %3179 = vmatpush1.msra.mxu0 0.0
  %3180 = vmatprep.subr.mxu0 0.0
  %3181 = vmatpush1.msra.mxu0 0.0
  %3182 = vmatprep.subr.mxu0 0.0
  %3183 = vmatpush1.msra.mxu0 0.0
  %3184 = vmatprep.subr.mxu0 0.0
  %3185 = vmatpush1.msra.mxu0 0.0
  %3186 = vmatprep.subr.mxu0 0.0
  %3187 = vmatpush1.msra.mxu0 0.0
  %3188 = vmatprep.subr.mxu0 0.0
  %3189 = vmatpush1.msra.mxu0 0.0
  %3190 = vmatprep.subr.mxu0 0.0
  %3191 = vmatpush1.msra.mxu0 0.0
  %3192 = vmatprep.subr.mxu0 0.0
  %3193 = vmatpush1.msra.mxu0 0.0
  %3194 = vmatprep.subr.mxu0 0.0
  %3195 = vmatpush1.msra.mxu0 0.0
  %3196 = vmatprep.subr.mxu0 0.0
  %3197 = vmatpush1.msra.mxu0 0.0
  %3198 = vmatprep.mubr.f32.mxu0 0.0
  %3199 = vmatmul.mubr.f32.gmra.mrb[0].mxu0 %v3061
  %v3200 = vpop.f32.mrb[0].mxu0
  %v3201 = vadd.f32 %v3058, %v3200
  %v3202 = vpop.f32.mrb[0].mxu0
  %v3203 = vadd.f32 %v3058, %v3202
  %3204 = vdwg.mxu0
  %v3205 = vmax.f32 %v3130, 0.0
  %v3206 = vmax.f32 %v3132, 0.0
  %v3207 = vmax.f32 %v3201, 0.0
  %v3208 = vmax.f32 %v3203, 0.0
  %3209 = vst [vmem:[%s7] sm:$0x3f] %v3205
  %3210 = vst [vmem:[%s7 + $0x8] sm:$0x3f] %v3206
  %3211 = vst [vmem:[%s7 + $0x10] sm:$0x3f] %v3207
  %3212 = vst [vmem:[%s7 + $0x18] sm:$0x3f] %v3208
  %v3213 = vadd.f32 %v2090, %v3058
  %v3214 = vadd.f32 %v2092, %v3058
  %v3215 = vadd.f32 %v2161, %v3058
  %v3216 = vadd.f32 %v2163, %v3058
  %v3217 = vmax.f32 %v3213, 0.0
  %v3218 = vmax.f32 %v3214, 0.0
  %v3219 = vmax.f32 %v3215, 0.0
  %v3220 = vmax.f32 %v3216, 0.0
  %s3221 = scalar_lea.vmem %s7, 32
  %3222 = vst [vmem:[%s3221] sm:$0x3f] %v3217
  %3223 = vst [vmem:[%s3221 + $0x8] sm:$0x3f] %v3218
  %3224 = vst [vmem:[%s3221 + $0x10] sm:$0x3f] %v3219
  %3225 = vst [vmem:[%s3221 + $0x18] sm:$0x3f] %v3220
  %v3226 = vadd.f32 %v2384, %v3058
  %v3227 = vadd.f32 %v2386, %v3058
  %v3228 = vadd.f32 %v2455, %v3058
  %v3229 = vadd.f32 %v2457, %v3058
  %v3230 = vmax.f32 %v3226, 0.0
  %v3231 = vmax.f32 %v3227, 0.0
  %v3232 = vmax.f32 %v3228, 0.0
  %v3233 = vmax.f32 %v3229, 0.0
  %s3234 = scalar_lea.vmem %s7, 64
  %3235 = vst [vmem:[%s3234] sm:$0x3f] %v3230
  %3236 = vst [vmem:[%s3234 + $0x8] sm:$0x3f] %v3231
  %3237 = vst [vmem:[%s3234 + $0x10] sm:$0x3f] %v3232
  %3238 = vst [vmem:[%s3234 + $0x18] sm:$0x3f] %v3233
  %v3239 = vadd.f32 %v3050, %v3058
  %v3240 = vadd.f32 %v3051, %v3058
  %v3241 = vadd.f32 %v3052, %v3058
  %v3242 = vadd.f32 %v3053, %v3058
  %v3243 = vmax.f32 %v3239, 0.0
  %v3244 = vmax.f32 %v3240, 0.0
  %v3245 = vmax.f32 %v3241, 0.0
  %v3246 = vmax.f32 %v3242, 0.0
  %s3247 = scalar_lea.vmem %s7, 96
  %3248 = vst [vmem:[%s3247] sm:$0x3f] %v3243
  %3249 = vst [vmem:[%s3247 + $0x8] sm:$0x3f] %v3244
  %3250 = vst [vmem:[%s3247 + $0x10] sm:$0x3f] %v3245
  %3251 = vst [vmem:[%s3247 + $0x18] sm:$0x3f] %v3246
  // Predicated region
  $region30: #{decoder_block.1} parent=0 // pred_check
    _
  $region31: #{decoder_block.1} parent=0 // pred_check_branch
    %3253 = sbr.rel (0) target = $region33
  $region32: #{decoder_block.1} parent=0 // pred_region
    _
  $region33: #{decoder_block.1} parent=0 // pred_fallthru
    _
  // Predicated region
  $region34: #{decoder_block.1} parent=0 // pred_check
    _
  $region35: #{decoder_block.1} parent=0 // pred_check_branch
    %3255 = sbr.rel (0) target = $region37
  $region36: #{decoder_block.1} parent=0 // pred_region
    _
  $region37: #{decoder_block.1} parent=0 // pred_fallthru
    _

</llo_original>
